<compile_context>
chip_gen: v7x
topology: tpu7x:2x2x1
jax: 0.10.0
libtpu: 0.0.40
codegen_flags: <defaults>
</compile_context>

<pallas_src>
import math
from functools import lru_cache, partial

import numpy as np
import jax
import jax.numpy as jnp
from jax import lax
from jax.experimental import pallas as pl
from jax.experimental.pallas import tpu as pltpu

# ----------------------------------------------------------------------------
# Config (anchor/variance settings match cfg_re50 / cfg_mnet from the reference)
# ----------------------------------------------------------------------------
CFG = {
    "min_sizes": [[16, 32], [64, 128], [256, 512]],
    "steps": [8, 16, 32],
    "variance": [0.1, 0.2],
    "clip": False,
}
NUM_ANCHORS = 2
# Lane-dense FPN width: cfg_re50 uses 256; any multiple of 128 keeps every
# store/VPU op full-lane and the MXU contraction deep.
OUT_CHANNEL = 128


def _round_up(v, m):
    return ((v + m - 1) // m) * m


# ----------------------------------------------------------------------------
# Pallas kernel 1: fused matmul + bias (+ReLU) -- 1x1 lateral convs.
#   bf16 MXU inputs, f32 accumulate; large tiles (overhead-bound), >=2 grid
#   steps when possible so both v7x TensorCores get work.
# ----------------------------------------------------------------------------
def _matmul_bias_kernel(relu):
    def kernel(x_ref, w_ref, b_ref, o_ref):
        acc = jnp.dot(x_ref[...], w_ref[...], preferred_element_type=jnp.float32)
        acc = acc + b_ref[...]
        if relu:
            acc = jnp.maximum(acc, 0.0)
        o_ref[...] = acc.astype(o_ref.dtype)
    return kernel


def pallas_matmul_bias(x, w, b, relu=False, out_dtype=jnp.bfloat16):
    """o = act(x @ w + b). x:(M,K), w:(K,N) bf16, b:(1,N) f32."""
    M, K = x.shape
    N = w.shape[1]
    xb = x.astype(jnp.bfloat16)
    Mp = _round_up(M, 8)
    if Mp != M:
        xb = jnp.pad(xb, ((0, Mp - M), (0, 0)))
    tm = min(2048, Mp)
    if Mp >= 16 and pl.cdiv(Mp, tm) < 2:
        tm = _round_up(pl.cdiv(Mp, 2), 8)      # split so both v7x cores are busy
    out = pl.pallas_call(
        _matmul_bias_kernel(relu),
        out_shape=jax.ShapeDtypeStruct((Mp, N), out_dtype),
        grid=(pl.cdiv(Mp, tm),),
        in_specs=[
            pl.BlockSpec((tm, K), lambda i: (i, 0)),
            pl.BlockSpec((K, N), lambda i: (0, 0)),
            pl.BlockSpec((1, N), lambda i: (0, 0)),
        ],
        out_specs=pl.BlockSpec((tm, N), lambda i: (i, 0)),
        compiler_params=pltpu.CompilerParams(dimension_semantics=("parallel",)),
    )(xb, w, b)
    return out if Mp == M else out[:M]


# ----------------------------------------------------------------------------
# Pallas kernel 2: stride-1 3x3 conv, row-tiled, with the 9 taps fused into a
# single K=9*C MXU matmul.
#   The padded map (width padded to a multiple of 8) is flattened to
#   (rows*Wp8, C); the three ki row shifts arrive as three flat views with
#   ordinary non-overlapping row blocks (halo-free), and the kj=1,2 column
#   shifts are sublane rotations of the loaded block (the rotated-in tail only
#   lands on discarded pad columns).  f32 accumulation happens inside the MXU.
# ----------------------------------------------------------------------------
def _conv3x3_kernel(relu):
    def shift(blk, k):          # sublane rotation by k (XLU-class work)
        if k == 0:
            return blk
        return jnp.concatenate([blk[k:], blk[:k]], axis=0)

    def kernel(x0_ref, x1_ref, x2_ref, w_ref, b_ref, o_ref):
        taps = []
        for xr in (x0_ref, x1_ref, x2_ref):
            blk = xr[...]                         # (L, C) bf16
            for kj in range(3):
                taps.append(shift(blk, kj))
        patch = jnp.concatenate(taps, axis=-1)    # (L, 9C): lane-dense concat
        acc = jnp.dot(patch, w_ref[...], preferred_element_type=jnp.float32)
        acc = acc + b_ref[...]
        if relu:
            acc = jnp.maximum(acc, 0.0)
        o_ref[...] = acc.astype(o_ref.dtype)
    return kernel


def _pick_tr(H, Wp8, C, Cout):
    # ~12 MiB per-step working set (x2 slack for double buffering) -> fits the
    # v7x 64 MiB VMEM; v5e/v6e (128 MiB) could take larger tiles.
    per_flat_row = 3 * C * 2 + 9 * C * 2 + Cout * 4 + Cout * 2
    tr = max(1, (12 << 20) // max(per_flat_row * Wp8 * 2, 1))
    tr = min(tr, H)
    if H >= 2:
        tr = min(tr, -(-H // 2))   # >=2 grid steps -> both v7x TensorCores busy
    return max(1, tr)


def conv3x3_s1(p, x, relu=True):
    """Stride-1 3x3 conv, padding=1, NHWC, batch==1, Pallas MXU."""
    n, H, W, C = x.shape
    assert n == 1
    Cout = p["w"].shape[-1]
    Wp8 = _round_up(W + 2, 8)                  # 8-aligned padded width
    assert Wp8 >= W + 2                        # right-pad column always present
    xp = jnp.pad(x[0].astype(jnp.bfloat16), ((1, 1), (1, Wp8 - W - 1), (0, 0)))
    # Three ki-shifted flat views -> ordinary non-overlapping row blocks.
    # TODO(synk): a pl.BoundedSlice halo window would avoid these 3 small copies.
    xs = [xp[k:k + H].reshape(H * Wp8, C) for k in range(3)]
    TR = _pick_tr(H, Wp8, C, Cout)
    L = TR * Wp8
    out = pl.pallas_call(
        _conv3x3_kernel(relu),
        out_shape=jax.ShapeDtypeStruct((H * Wp8, Cout), jnp.bfloat16),
        grid=(pl.cdiv(H, TR),),
        in_specs=[pl.BlockSpec((L, C), lambda i: (i, 0)),
                  pl.BlockSpec((L, C), lambda i: (i, 0)),
                  pl.BlockSpec((L, C), lambda i: (i, 0)),
                  pl.BlockSpec((9 * C, Cout), lambda i: (0, 0)),
                  pl.BlockSpec((1, Cout), lambda i: (0, 0))],
        out_specs=pl.BlockSpec((L, Cout), lambda i: (i, 0)),
        compiler_params=pltpu.CompilerParams(
            dimension_semantics=("parallel",),
            vmem_limit_bytes=48 * 1024 * 1024),
    )(xs[0], xs[1], xs[2], p["w"], p["b"])
    return out.reshape(H, Wp8, Cout)[:, :W, :][None]


def conv1x1(p, x, relu):
    n, h, w, c = x.shape
    out = pallas_matmul_bias(x.reshape(n * h * w, c), p["w"], p["b"],
                             relu=relu, out_dtype=jnp.bfloat16)
    return out.reshape(n, h, w, -1)


def stem_conv(p, x, stride):
    # TODO(synk): stride-2 stem convs use XLA's native conv (sanctioned fallback);
    #             every stride-1 conv / 1x1 / head / decode runs through Pallas.
    y = lax.conv_general_dilated(
        x.astype(jnp.bfloat16), p["w"],
        window_strides=(stride, stride), padding=((1, 1), (1, 1)),
        dimension_numbers=("NHWC", "HWIO", "NHWC"),
        preferred_element_type=jnp.float32)
    y = y + p["b"]
    return jnp.maximum(y, 0.0).astype(jnp.bfloat16)


# ----------------------------------------------------------------------------
# Pallas kernel 3: fused detection head, emitted transposed and lane-dense.
#   (32, C) x (tm, C)^T -> (32, tm) so positions sit on the 128-lane axis and
#   the output is already in the (C, P) layout the decode kernel consumes.
# ----------------------------------------------------------------------------
def _head_kernel(x_ref, wt_ref, b_ref, o_ref):
    acc = lax.dot_general(wt_ref[...], x_ref[...],
                          (((1,), (1,)), ((), ())),
                          preferred_element_type=jnp.float32)   # (32, tm)
    o_ref[...] = acc + b_ref[...]


def pallas_head(x, p):
    """x:(M,C) bf16 features -> (32, M) f32 fused head output [bbox|cls|ldm]."""
    M, C = x.shape
    NH = NUM_ANCHORS * 16
    xb = x.astype(jnp.bfloat16)
    Mp = _round_up(M, 8)
    if Mp != M:
        xb = jnp.pad(xb, ((0, Mp - M), (0, 0)))
    if Mp >= 256:
        tm = min(2048, _round_up(-(-Mp // 2), 128))   # 128-multiple lane tile
    else:
        tm = Mp                                       # single block == full dim
    out = pl.pallas_call(
        _head_kernel,
        out_shape=jax.ShapeDtypeStruct((NH, Mp), jnp.float32),
        grid=(pl.cdiv(Mp, tm),),
        in_specs=[pl.BlockSpec((tm, C), lambda i: (i, 0)),
                  pl.BlockSpec((NH, C), lambda i: (0, 0)),
                  pl.BlockSpec((NH, 1), lambda i: (0, 0))],
        out_specs=pl.BlockSpec((NH, tm), lambda i: (0, i)),
        compiler_params=pltpu.CompilerParams(dimension_semantics=("parallel",)),
    )(xb, p["wt"], p["b"])
    return out[:, :M]


# ----------------------------------------------------------------------------
# Pallas kernel 4: lane-dense box/landmark decode + softmax scoring.
#   Consumes the transposed head output directly.  Everything is (rows, P)
#   with P on the 128-lane axis; rows are stored with direct sublane writes.
# ----------------------------------------------------------------------------
def _decode_kernel(v0, v1, inv_rs, im_w, im_h):
    A = NUM_ANCHORS
    sx = im_w * inv_rs
    sy = im_h * inv_rs

    def kernel(head_ref, pri_ref, box_ref, score_ref, lm_ref):
        for a in range(A):
            pcx = pri_ref[4 * a + 0:4 * a + 1, :]
            pcy = pri_ref[4 * a + 1:4 * a + 2, :]
            pw = pri_ref[4 * a + 2:4 * a + 3, :]
            ph = pri_ref[4 * a + 3:4 * a + 4, :]
            vpw = v0 * pw
            vph = v0 * ph
            lo = 4 * a
            cx = pcx + head_ref[lo + 0:lo + 1, :] * vpw
            cy = pcy + head_ref[lo + 1:lo + 2, :] * vph
            w = pw * jnp.exp(head_ref[lo + 2:lo + 3, :] * v1)
            h = ph * jnp.exp(head_ref[lo + 3:lo + 4, :] * v1)
            x1 = cx - 0.5 * w
            y1 = cy - 0.5 * h
            # direct sublane-row stores (no axis-0 concatenate / relayout)
            box_ref[4 * a + 0:4 * a + 1, :] = x1 * sx
            box_ref[4 * a + 1:4 * a + 2, :] = y1 * sy
            box_ref[4 * a + 2:4 * a + 3, :] = (x1 + w) * sx
            box_ref[4 * a + 3:4 * a + 4, :] = (y1 + h) * sy
            ld = 6 * A + 10 * a
            for k in range(5):
                dx = head_ref[ld + 2 * k:ld + 2 * k + 1, :]
                dy = head_ref[ld + 2 * k + 1:ld + 2 * k + 2, :]
                lm_ref[10 * a + 2 * k:10 * a + 2 * k + 1, :] = (pcx + dx * vpw) * sx
                lm_ref[10 * a + 2 * k + 1:10 * a + 2 * k + 2, :] = (pcy + dy * vph) * sy
            co = 4 * A + 2 * a
            c0 = head_ref[co:co + 1, :]
            c1 = head_ref[co + 1:co + 2, :]
            m = jnp.maximum(c0, c1)
            e0 = jnp.exp(c0 - m)
            e1 = jnp.exp(c1 - m)
            # exact reciprocal: approx softmax could flip threshold-borderline hits
            score_ref[a:a + 1, :] = e1 * pl.reciprocal(e0 + e1, approx=False)
    return kernel


def pallas_decode(headT, priorsT, variances, im_w, im_h, resize):
    """headT:(32,M), priorsT:(A*4,M) -> boxes (A*4,M), scores (A,M), landms (A*10,M)."""
    A = NUM_ANCHORS
    M = headT.shape[1]
    Pp = _round_up(max(M, 1), 128)
    pad = Pp - M
    headp = jnp.pad(headT, ((0, 0), (0, pad)))
    prip = jnp.pad(priorsT.astype(jnp.float32), ((0, 0), (0, pad)))
    TP = min(4096, Pp)                       # lane tile, multiple of 128
    kern = _decode_kernel(float(variances[0]), float(variances[1]),
                          float(1.0 / resize), float(im_w), float(im_h))
    boxes, scores, lms = pl.pallas_call(
        kern,
        out_shape=(jax.ShapeDtypeStruct((A * 4, Pp), jnp.float32),
                   jax.ShapeDtypeStruct((A, Pp), jnp.float32),
                   jax.ShapeDtypeStruct((A * 10, Pp), jnp.float32)),
        grid=(pl.cdiv(Pp, TP),),
        in_specs=[pl.BlockSpec((A * 16, TP), lambda i: (0, i)),
                  pl.BlockSpec((A * 4, TP), lambda i: (0, i))],
        out_specs=(pl.BlockSpec((A * 4, TP), lambda i: (0, i)),
                   pl.BlockSpec((A, TP), lambda i: (0, i)),
                   pl.BlockSpec((A * 10, TP), lambda i: (0, i))),
        compiler_params=pltpu.CompilerParams(dimension_semantics=("parallel",)),
    )(headp, prip)
    # padded lanes (M..Pp) hold scores == 0.5; keep the [:M] slice if the
    # threshold ever moves on-device.
    return boxes[:, :M], scores[:, :M], lms[:, :M]


# ----------------------------------------------------------------------------
# Deterministic synthetic parameters (no checkpoint loading); kernel dtypes and
# shapes are baked in at build time (no per-call casts/reshapes).
# ----------------------------------------------------------------------------
def build_params(seed=0):
    key = jax.random.PRNGKey(seed)
    oc = OUT_CHANNEL
    stem_specs = [("stem1", 3, 8), ("stem2", 8, 16), ("stem3", 16, 32),
                  ("stem4", 32, 48), ("stem5", 48, 64)]
    lat_specs = [("lat1", 32, oc), ("lat2", 48, oc), ("lat3", 64, oc)]
    c3x3_specs = [("merge1", oc, oc), ("merge2", oc, oc),
                  ("ssh0", oc, oc), ("ssh1", oc, oc), ("ssh2", oc, oc)]
    n_keys = len(stem_specs) + len(lat_specs) + len(c3x3_specs) + 9
    keys = list(jax.random.split(key, n_keys))
    params = {}
    ptr = [0]

    def nk():
        k = keys[ptr[0]]
        ptr[0] += 1
        return k

    for name, ci, co in stem_specs:
        w = jax.random.normal(nk(), (3, 3, ci, co), jnp.float32) / np.sqrt(9 * ci)
        params[name] = {"w": w.astype(jnp.bfloat16), "b": jnp.zeros((co,), jnp.float32)}
    for name, ci, co in lat_specs:
        w = jax.random.normal(nk(), (ci, co), jnp.float32) / np.sqrt(ci)
        params[name] = {"w": w.astype(jnp.bfloat16),
                        "b": jnp.zeros((1, co), jnp.float32)}
    for name, ci, co in c3x3_specs:
        w = jax.random.normal(nk(), (3, 3, ci, co), jnp.float32) / np.sqrt(9 * ci)
        params[name] = {"w": w.reshape(9 * ci, co).astype(jnp.bfloat16),  # fused-tap layout
                        "b": jnp.zeros((1, co), jnp.float32)}
    # fused per-level heads: rows = [bbox(A*4) | cls(A*2) | ldm(A*10)], pre-transposed
    for i in range(3):
        wb = jax.random.normal(nk(), (oc, NUM_ANCHORS * 4), jnp.float32) / np.sqrt(oc)
        wc = jax.random.normal(nk(), (oc, NUM_ANCHORS * 2), jnp.float32) / np.sqrt(oc)
        wl = jax.random.normal(nk(), (oc, NUM_ANCHORS * 10), jnp.float32) / np.sqrt(oc)
        w = jnp.concatenate([wb, wc, wl], axis=1)            # (oc, 32)
        params[f"head{i}"] = {"wt": w.T.astype(jnp.bfloat16),  # (32, oc)
                              "b": jnp.zeros((NUM_ANCHORS * 16, 1), jnp.float32)}
    return params


# ----------------------------------------------------------------------------
# RetinaFace-style network (backbone -> FPN -> SSH -> fused heads)
# ----------------------------------------------------------------------------
def retinaface_forward(params, x):
    # TODO(synk): ResNet50 backbone replaced by a compact conv stack (the real
    #             checkpoint cannot be loaded; strides 8/16/32 are preserved).
    h = stem_conv(params["stem1"], x, 2)
    h = stem_conv(params["stem2"], h, 2)
    c3 = stem_conv(params["stem3"], h, 2)     # stride 8
    c4 = stem_conv(params["stem4"], c3, 2)    # stride 16
    c5 = stem_conv(params["stem5"], c4, 2)    # stride 32
    # FPN (BatchNorm omitted: inference BN is affine; synthetic weights)
    p3 = conv1x1(params["lat1"], c3, relu=True)
    p4 = conv1x1(params["lat2"], c4, relu=True)
    p5 = conv1x1(params["lat3"], c5, relu=True)
    # top-down nearest-upsample + add: XLA fuses this into the pad/shift copies
    # that feed the merge conv (no standalone HBM round-trip).
    p4 = p4 + jax.image.resize(p5, p4.shape, method="nearest")
    p4 = conv3x3_s1(params["merge2"], p4, relu=True)
    p3 = p3 + jax.image.resize(p4, p3.shape, method="nearest")
    p3 = conv3x3_s1(params["merge1"], p3, relu=True)
    # TODO(synk): full SSH multi-branch (3x3/5x5/7x7 concat) simplified to one 3x3 conv per level.
    feats = [conv3x3_s1(params[f"ssh{i}"], f, relu=True)
             for i, f in enumerate([p3, p4, p5])]
    # TODO(synk): SSH conv + head could fuse into one kernel (saves an HBM
    #             round-trip per level) once per-block head lane tiles can be
    #             kept 128-aligned at these tiny demo map sizes.
    heads = []
    for i, f in enumerate(feats):
        n, hh, ww, c = f.shape
        heads.append(pallas_head(f.reshape(hh * ww, c), params[f"head{i}"]))
    return jnp.concatenate(heads, axis=1)     # (32, Mtot) f32, lane-dense


@partial(jax.jit, static_argnums=(3,))
def _detect_jit(params, x, priorsT, resize):
    im_h, im_w = x.shape[1], x.shape[2]
    headT = retinaface_forward(params, x)
    assert headT.shape[1] == priorsT.shape[1]
    return pallas_decode(headT, priorsT, CFG["variance"], im_w, im_h, resize)


# ----------------------------------------------------------------------------
# PriorBox (vectorized + cached) and NMS (host-side glue, same as the reference)
# ----------------------------------------------------------------------------
@lru_cache(maxsize=8)
def prior_box_T(im_h, im_w):
    """Priors in the transposed (A*4, Mtot) layout: rows [a0_cx,a0_cy,a0_sx,a0_sy,a1_...]."""
    per_level = []
    for k, step in enumerate(CFG["steps"]):
        fh = math.ceil(im_h / step)
        fw = math.ceil(im_w / step)
        jj, ii = np.meshgrid(np.arange(fw), np.arange(fh))
        cx = ((jj + 0.5) * step / im_w).reshape(-1)
        cy = ((ii + 0.5) * step / im_h).reshape(-1)
        rows = []
        for ms in CFG["min_sizes"][k]:
            rows += [cx, cy, np.full_like(cx, ms / im_w), np.full_like(cy, ms / im_h)]
        per_level.append(np.stack(rows, axis=0))
    out = np.concatenate(per_level, axis=1).astype(np.float32)
    if CFG["clip"]:
        out = np.clip(out, 0.0, 1.0)
    return out


def py_cpu_nms(dets, thresh):
    if dets.shape[0] == 0:
        return []
    x1, y1, x2, y2, scores = dets[:, 0], dets[:, 1], dets[:, 2], dets[:, 3], dets[:, 4]
    areas = (x2 - x1 + 1) * (y2 - y1 + 1)
    order = scores.argsort()[::-1]
    keep = []
    while order.size > 0:
        i = order[0]
        keep.append(int(i))
        xx1 = np.maximum(x1[i], x1[order[1:]])
        yy1 = np.maximum(y1[i], y1[order[1:]])
        xx2 = np.minimum(x2[i], x2[order[1:]])
        yy2 = np.minimum(y2[i], y2[order[1:]])
        w = np.maximum(0.0, xx2 - xx1 + 1)
        h = np.maximum(0.0, yy2 - yy1 + 1)
        inter = w * h
        ovr = inter / (areas[i] + areas[order[1:]] - inter)
        inds = np.where(ovr <= thresh)[0]
        order = order[inds + 1]
    return keep


# ----------------------------------------------------------------------------
# Retina module (forward == detect_faces)
# ----------------------------------------------------------------------------
class RetinaPallas:
    def __init__(self, threshold=0.9, seed=0):
        self.threshold = threshold
        self.cfg = CFG
        self.params = build_params(seed)

    def detect_faces(self, img, origin_size=False, nms_threshold=0.4):
        img = np.float32(img)
        target_size, max_size = 1600, 1000
        im_shape = img.shape
        im_size_min = np.min(im_shape[0:2])
        im_size_max = np.max(im_shape[0:2])
        resize = float(target_size) / float(im_size_min)
        if np.round(resize * im_size_max) > max_size:
            resize = float(max_size) / float(im_size_max)
        if origin_size:
            resize = 1.0
        x = jnp.asarray(img)
        if resize != 1.0:
            # TODO(synk): cv2.resize(INTER_LINEAR) approximated with jax.image.resize
            new_h = int(round(im_shape[0] * resize))
            new_w = int(round(im_shape[1] * resize))
            x = jax.image.resize(x, (new_h, new_w, 3), method="linear")
        im_h, im_w = int(x.shape[0]), int(x.shape[1])
        x = x - jnp.array([104.0, 117.0, 123.0], jnp.float32)
        x = x[None]  # (1, H, W, 3) NHWC

        priorsT = jnp.asarray(prior_box_T(im_h, im_w))   # (A*4, Mtot), cached per size
        boxes_t, scores_t, lms_t = _detect_jit(self.params, x, priorsT, float(resize))
        jax.block_until_ready((boxes_t, scores_t, lms_t))

        A = NUM_ANCHORS
        boxes = np.asarray(boxes_t).reshape(A, 4, -1).transpose(2, 0, 1).reshape(-1, 4)
        scores = np.asarray(scores_t).T.reshape(-1)
        landms = np.asarray(lms_t).reshape(A, 10, -1).transpose(2, 0, 1).reshape(-1, 10)

        inds = np.where(scores > self.threshold)[0]
        boxes, landms, scores = boxes[inds], landms[inds], scores[inds]
        order = scores.argsort()[::-1]
        boxes, landms, scores = boxes[order], landms[order], scores[order]
        dets = np.hstack((boxes, scores[:, np.newaxis])).astype(np.float32, copy=False)
        keep = py_cpu_nms(dets, nms_threshold)
        dets = dets[keep, :]
        landms = landms[keep]
        probs = dets[:, 4]
        points = landms.reshape(-1, 5, 2)
        boxes = dets[:, :4]
        return boxes, probs, points

    def __call__(self, img):
        return self.detect_faces(img)


if __name__ == "__main__":
    key = jax.random.PRNGKey(0)
    img = np.asarray(jax.random.uniform(key, (32, 32, 3), jnp.float32, 0.0, 255.0))
    model = RetinaPallas(threshold=0.9, seed=0)
    # origin_size=True keeps the synthetic demo at small spatial shapes
    boxes, probs, points = model.detect_faces(img, origin_size=True)
    jax.block_until_ready((jnp.asarray(boxes), jnp.asarray(probs), jnp.asarray(points)))
    print("KERNEL_OK")
</pallas_src>

<mosaic_0001>
module attributes {stable_mosaic.version = 11 : i64} {
  func.func @kernel(%arg0: i32, %arg1: memref<8x48xbf16, #tpu.memory_space<vmem>>, %arg2: memref<48x128xbf16, #tpu.memory_space<vmem>>, %arg3: memref<1x128xf32, #tpu.memory_space<vmem>>, %arg4: memref<8x128xbf16, #tpu.memory_space<vmem>>) attributes {dimension_semantics = [#tpu.dimension_semantics<parallel>], iteration_bounds = array<i64: 1>, scalar_prefetch = 0 : i64, scratch_operands = 0 : i64, tpu.core_type = #tpu.core_type<tc>, window_params = [{transform_indices = @transform_0, window_bounds = array<i64: 8, 48>}, {pipeline_mode = #tpu.pipeline_mode<synchronous>, transform_indices = @transform_1, window_bounds = array<i64: 48, 128>}, {pipeline_mode = #tpu.pipeline_mode<synchronous>, transform_indices = @transform_2, window_bounds = array<i64: 1, 128>}, {transform_indices = @transform_3, window_bounds = array<i64: 8, 128>}]} {
    %c0 = arith.constant 0 : index
    %c0_0 = arith.constant 0 : index
    %0 = vector.load %arg1[%c0, %c0_0] : memref<8x48xbf16, #tpu.memory_space<vmem>>, vector<8x48xbf16>
    %c0_1 = arith.constant 0 : index
    %c0_2 = arith.constant 0 : index
    %1 = vector.load %arg2[%c0_1, %c0_2] : memref<48x128xbf16, #tpu.memory_space<vmem>>, vector<48x128xbf16>
    %cst = arith.constant dense<0.000000e+00> : vector<8x128xf32>
    %2 = tpu.matmul %0, %1, %cst {dimension_numbers = #tpu.dot_dimension_numbers<[1], [0], [0], [1], [0, 0, 1, 1], [], []>} : vector<8x48xbf16>, vector<48x128xbf16>, vector<8x128xf32> -> vector<8x128xf32>
    %c0_3 = arith.constant 0 : index
    %c0_4 = arith.constant 0 : index
    %3 = vector.load %arg3[%c0_3, %c0_4] : memref<1x128xf32, #tpu.memory_space<vmem>>, vector<1x128xf32>
    %4 = vector.broadcast %3 : vector<1x128xf32> to vector<8x128xf32>
    %5 = arith.addf %2, %4 : vector<8x128xf32>
    %cst_5 = arith.constant 0.000000e+00 : f32
    %6 = vector.broadcast %cst_5 : f32 to vector<8x128xf32>
    %7 = arith.maximumf %5, %6 : vector<8x128xf32>
    %8 = arith.truncf %7 : vector<8x128xf32> to vector<8x128xbf16>
    %c0_6 = arith.constant 0 : index
    %c0_7 = arith.constant 0 : index
    %9 = vector.load %arg4[%c0_6, %c0_7] : memref<8x128xbf16, #tpu.memory_space<vmem>>, vector<8x128xbf16>
    tpu.vector_store %arg4[%c0_6, %c0_7], %8 {strides = array<i32>} : memref<8x128xbf16, #tpu.memory_space<vmem>>, vector<8x128xbf16>,
    return
  }
  func.func @transform_0(%arg0: i32) -> (i32, i32) {
    %c0_i32 = arith.constant 0 : i32
    %c0_i32_0 = arith.constant 0 : i32
    return %arg0, %c0_i32 : i32, i32
  }
  func.func @transform_1(%arg0: i32) -> (i32, i32) {
    %c0_i32 = arith.constant 0 : i32
    %c0_i32_0 = arith.constant 0 : i32
    %c0_i32_1 = arith.constant 0 : i32
    return %c0_i32, %c0_i32_0 : i32, i32
  }
  func.func @transform_2(%arg0: i32) -> (i32, i32) {
    %c0_i32 = arith.constant 0 : i32
    %c0_i32_0 = arith.constant 0 : i32
    %c0_i32_1 = arith.constant 0 : i32
    return %c0_i32, %c0_i32_0 : i32, i32
  }
  func.func @transform_3(%arg0: i32) -> (i32, i32) {
    %c0_i32 = arith.constant 0 : i32
    %c0_i32_0 = arith.constant 0 : i32
    return %arg0, %c0_i32 : i32, i32
  }
}

module attributes {stable_mosaic.version = 11 : i64} {
  func.func @kernel(%arg0: i32, %arg1: memref<8x64xbf16, #tpu.memory_space<vmem>>, %arg2: memref<64x128xbf16, #tpu.memory_space<vmem>>, %arg3: memref<1x128xf32, #tpu.memory_space<vmem>>, %arg4: memref<8x128xbf16, #tpu.memory_space<vmem>>) attributes {dimension_semantics = [#tpu.dimension_semantics<parallel>], iteration_bounds = array<i64: 1>, scalar_prefetch = 0 : i64, scratch_operands = 0 : i64, tpu.core_type = #tpu.core_type<tc>, window_params = [{transform_indices = @transform_0, window_bounds = array<i64: 8, 64>}, {pipeline_mode = #tpu.pipeline_mode<synchronous>, transform_indices = @transform_1, window_bounds = array<i64: 64, 128>}, {pipeline_mode = #tpu.pipeline_mode<synchronous>, transform_indices = @transform_2, window_bounds = array<i64: 1, 128>}, {transform_indices = @transform_3, window_bounds = array<i64: 8, 128>}]} {
    %c0 = arith.constant 0 : index
    %c0_0 = arith.constant 0 : index
    %0 = vector.load %arg1[%c0, %c0_0] : memref<8x64xbf16, #tpu.memory_space<vmem>>, vector<8x64xbf16>
    %c0_1 = arith.constant 0 : index
    %c0_2 = arith.constant 0 : index
    %1 = vector.load %arg2[%c0_1, %c0_2] : memref<64x128xbf16, #tpu.memory_space<vmem>>, vector<64x128xbf16>
    %cst = arith.constant dense<0.000000e+00> : vector<8x128xf32>
    %2 = tpu.matmul %0, %1, %cst {dimension_numbers = #tpu.dot_dimension_numbers<[1], [0], [0], [1], [0, 0, 1, 1], [], []>} : vector<8x64xbf16>, vector<64x128xbf16>, vector<8x128xf32> -> vector<8x128xf32>
    %c0_3 = arith.constant 0 : index
    %c0_4 = arith.constant 0 : index
    %3 = vector.load %arg3[%c0_3, %c0_4] : memref<1x128xf32, #tpu.memory_space<vmem>>, vector<1x128xf32>
    %4 = vector.broadcast %3 : vector<1x128xf32> to vector<8x128xf32>
    %5 = arith.addf %2, %4 : vector<8x128xf32>
    %cst_5 = arith.constant 0.000000e+00 : f32
    %6 = vector.broadcast %cst_5 : f32 to vector<8x128xf32>
    %7 = arith.maximumf %5, %6 : vector<8x128xf32>
    %8 = arith.truncf %7 : vector<8x128xf32> to vector<8x128xbf16>
    %c0_6 = arith.constant 0 : index
    %c0_7 = arith.constant 0 : index
    %9 = vector.load %arg4[%c0_6, %c0_7] : memref<8x128xbf16, #tpu.memory_space<vmem>>, vector<8x128xbf16>
    tpu.vector_store %arg4[%c0_6, %c0_7], %8 {strides = array<i32>} : memref<8x128xbf16, #tpu.memory_space<vmem>>, vector<8x128xbf16>,
    return
  }
  func.func @transform_0(%arg0: i32) -> (i32, i32) {
    %c0_i32 = arith.constant 0 : i32
    %c0_i32_0 = arith.constant 0 : i32
    return %arg0, %c0_i32 : i32, i32
  }
  func.func @transform_1(%arg0: i32) -> (i32, i32) {
    %c0_i32 = arith.constant 0 : i32
    %c0_i32_0 = arith.constant 0 : i32
    %c0_i32_1 = arith.constant 0 : i32
    return %c0_i32, %c0_i32_0 : i32, i32
  }
  func.func @transform_2(%arg0: i32) -> (i32, i32) {
    %c0_i32 = arith.constant 0 : i32
    %c0_i32_0 = arith.constant 0 : i32
    %c0_i32_1 = arith.constant 0 : i32
    return %c0_i32, %c0_i32_0 : i32, i32
  }
  func.func @transform_3(%arg0: i32) -> (i32, i32) {
    %c0_i32 = arith.constant 0 : i32
    %c0_i32_0 = arith.constant 0 : i32
    return %arg0, %c0_i32 : i32, i32
  }
}

module attributes {stable_mosaic.version = 11 : i64} {
  func.func @kernel(%arg0: i32, %arg1: memref<8x128xbf16, #tpu.memory_space<vmem>>, %arg2: memref<8x128xbf16, #tpu.memory_space<vmem>>, %arg3: memref<8x128xbf16, #tpu.memory_space<vmem>>, %arg4: memref<1152x128xbf16, #tpu.memory_space<vmem>>, %arg5: memref<1x128xf32, #tpu.memory_space<vmem>>, %arg6: memref<8x128xbf16, #tpu.memory_space<vmem>>) attributes {dimension_semantics = [#tpu.dimension_semantics<parallel>], iteration_bounds = array<i64: 2>, scalar_prefetch = 0 : i64, scratch_operands = 0 : i64, tpu.core_type = #tpu.core_type<tc>, window_params = [{transform_indices = @transform_0, window_bounds = array<i64: 8, 128>}, {transform_indices = @transform_1, window_bounds = array<i64: 8, 128>}, {transform_indices = @transform_2, window_bounds = array<i64: 8, 128>}, {pipeline_mode = #tpu.pipeline_mode<synchronous>, transform_indices = @transform_3, window_bounds = array<i64: 1152, 128>}, {pipeline_mode = #tpu.pipeline_mode<synchronous>, transform_indices = @transform_4, window_bounds = array<i64: 1, 128>}, {transform_indices = @transform_5, window_bounds = array<i64: 8, 128>}]} {
    %c0 = arith.constant 0 : index
    %c0_0 = arith.constant 0 : index
    %0 = vector.load %arg1[%c0, %c0_0] : memref<8x128xbf16, #tpu.memory_space<vmem>>, vector<8x128xbf16>
    %1 = vector.extract_strided_slice %0 {offsets = [1, 0], sizes = [7, 128], strides = [1, 1]} : vector<8x128xbf16> to vector<7x128xbf16>
    %2 = vector.extract_strided_slice %0 {offsets = [0, 0], sizes = [1, 128], strides = [1, 1]} : vector<8x128xbf16> to vector<1x128xbf16>
    %3 = tpu.concatenate %1, %2 in 0 : vector<7x128xbf16>, vector<1x128xbf16> -> vector<8x128xbf16>
    %4 = vector.extract_strided_slice %0 {offsets = [2, 0], sizes = [6, 128], strides = [1, 1]} : vector<8x128xbf16> to vector<6x128xbf16>
    %5 = vector.extract_strided_slice %0 {offsets = [0, 0], sizes = [2, 128], strides = [1, 1]} : vector<8x128xbf16> to vector<2x128xbf16>
    %6 = tpu.concatenate %4, %5 in 0 : vector<6x128xbf16>, vector<2x128xbf16> -> vector<8x128xbf16>
    %c0_1 = arith.constant 0 : index
    %c0_2 = arith.constant 0 : index
    %7 = vector.load %arg2[%c0_1, %c0_2] : memref<8x128xbf16, #tpu.memory_space<vmem>>, vector<8x128xbf16>
    %8 = vector.extract_strided_slice %7 {offsets = [1, 0], sizes = [7, 128], strides = [1, 1]} : vector<8x128xbf16> to vector<7x128xbf16>
    %9 = vector.extract_strided_slice %7 {offsets = [0, 0], sizes = [1, 128], strides = [1, 1]} : vector<8x128xbf16> to vector<1x128xbf16>
    %10 = tpu.concatenate %8, %9 in 0 : vector<7x128xbf16>, vector<1x128xbf16> -> vector<8x128xbf16>
    %11 = vector.extract_strided_slice %7 {offsets = [2, 0], sizes = [6, 128], strides = [1, 1]} : vector<8x128xbf16> to vector<6x128xbf16>
    %12 = vector.extract_strided_slice %7 {offsets = [0, 0], sizes = [2, 128], strides = [1, 1]} : vector<8x128xbf16> to vector<2x128xbf16>
    %13 = tpu.concatenate %11, %12 in 0 : vector<6x128xbf16>, vector<2x128xbf16> -> vector<8x128xbf16>
    %c0_3 = arith.constant 0 : index
    %c0_4 = arith.constant 0 : index
    %14 = vector.load %arg3[%c0_3, %c0_4] : memref<8x128xbf16, #tpu.memory_space<vmem>>, vector<8x128xbf16>
    %15 = vector.extract_strided_slice %14 {offsets = [1, 0], sizes = [7, 128], strides = [1, 1]} : vector<8x128xbf16> to vector<7x128xbf16>
    %16 = vector.extract_strided_slice %14 {offsets = [0, 0], sizes = [1, 128], strides = [1, 1]} : vector<8x128xbf16> to vector<1x128xbf16>
    %17 = tpu.concatenate %15, %16 in 0 : vector<7x128xbf16>, vector<1x128xbf16> -> vector<8x128xbf16>
    %18 = vector.extract_strided_slice %14 {offsets = [2, 0], sizes = [6, 128], strides = [1, 1]} : vector<8x128xbf16> to vector<6x128xbf16>
    %19 = vector.extract_strided_slice %14 {offsets = [0, 0], sizes = [2, 128], strides = [1, 1]} : vector<8x128xbf16> to vector<2x128xbf16>
    %20 = tpu.concatenate %18, %19 in 0 : vector<6x128xbf16>, vector<2x128xbf16> -> vector<8x128xbf16>
    %21 = tpu.concatenate %0, %3, %6, %7, %10, %13, %14, %17, %20 in 1 : vector<8x128xbf16>, vector<8x128xbf16>, vector<8x128xbf16>, vector<8x128xbf16>, vector<8x128xbf16>, vector<8x128xbf16>, vector<8x128xbf16>, vector<8x128xbf16>, vector<8x128xbf16> -> vector<8x1152xbf16>
    %c0_5 = arith.constant 0 : index
    %c0_6 = arith.constant 0 : index
    %22 = vector.load %arg4[%c0_5, %c0_6] : memref<1152x128xbf16, #tpu.memory_space<vmem>>, vector<1152x128xbf16>
    %cst = arith.constant dense<0.000000e+00> : vector<8x128xf32>
    %23 = tpu.matmul %21, %22, %cst {dimension_numbers = #tpu.dot_dimension_numbers<[1], [0], [0], [1], [0, 0, 1, 1], [], []>} : vector<8x1152xbf16>, vector<1152x128xbf16>, vector<8x128xf32> -> vector<8x128xf32>
    %c0_7 = arith.constant 0 : index
    %c0_8 = arith.constant 0 : index
    %24 = vector.load %arg5[%c0_7, %c0_8] : memref<1x128xf32, #tpu.memory_space<vmem>>, vector<1x128xf32>
    %25 = vector.broadcast %24 : vector<1x128xf32> to vector<8x128xf32>
    %26 = arith.addf %23, %25 : vector<8x128xf32>
    %cst_9 = arith.constant 0.000000e+00 : f32
    %27 = vector.broadcast %cst_9 : f32 to vector<8x128xf32>
    %28 = arith.maximumf %26, %27 : vector<8x128xf32>
    %29 = arith.truncf %28 : vector<8x128xf32> to vector<8x128xbf16>
    %c0_10 = arith.constant 0 : index
    %c0_11 = arith.constant 0 : index
    %30 = vector.load %arg6[%c0_10, %c0_11] : memref<8x128xbf16, #tpu.memory_space<vmem>>, vector<8x128xbf16>
    tpu.vector_store %arg6[%c0_10, %c0_11], %29 {strides = array<i32>} : memref<8x128xbf16, #tpu.memory_space<vmem>>, vector<8x128xbf16>,
    return
  }
  func.func @transform_0(%arg0: i32) -> (i32, i32) {
    %c0_i32 = arith.constant 0 : i32
    %c0_i32_0 = arith.constant 0 : i32
    return %arg0, %c0_i32 : i32, i32
  }
  func.func @transform_1(%arg0: i32) -> (i32, i32) {
    %c0_i32 = arith.constant 0 : i32
    %c0_i32_0 = arith.constant 0 : i32
    return %arg0, %c0_i32 : i32, i32
  }
  func.func @transform_2(%arg0: i32) -> (i32, i32) {
    %c0_i32 = arith.constant 0 : i32
    %c0_i32_0 = arith.constant 0 : i32
    return %arg0, %c0_i32 : i32, i32
  }
  func.func @transform_3(%arg0: i32) -> (i32, i32) {
    %c0_i32 = arith.constant 0 : i32
    %c0_i32_0 = arith.constant 0 : i32
    %c0_i32_1 = arith.constant 0 : i32
    return %c0_i32, %c0_i32_0 : i32, i32
  }
  func.func @transform_4(%arg0: i32) -> (i32, i32) {
    %c0_i32 = arith.constant 0 : i32
    %c0_i32_0 = arith.constant 0 : i32
    %c0_i32_1 = arith.constant 0 : i32
    return %c0_i32, %c0_i32_0 : i32, i32
  }
  func.func @transform_5(%arg0: i32) -> (i32, i32) {
    %c0_i32 = arith.constant 0 : i32
    %c0_i32_0 = arith.constant 0 : i32
    return %arg0, %c0_i32 : i32, i32
  }
}

module attributes {stable_mosaic.version = 11 : i64} {
  func.func @kernel(%arg0: i32, %arg1: memref<8x32xbf16, #tpu.memory_space<vmem>>, %arg2: memref<32x128xbf16, #tpu.memory_space<vmem>>, %arg3: memref<1x128xf32, #tpu.memory_space<vmem>>, %arg4: memref<8x128xbf16, #tpu.memory_space<vmem>>) attributes {dimension_semantics = [#tpu.dimension_semantics<parallel>], iteration_bounds = array<i64: 2>, scalar_prefetch = 0 : i64, scratch_operands = 0 : i64, tpu.core_type = #tpu.core_type<tc>, window_params = [{transform_indices = @transform_0, window_bounds = array<i64: 8, 32>}, {pipeline_mode = #tpu.pipeline_mode<synchronous>, transform_indices = @transform_1, window_bounds = array<i64: 32, 128>}, {pipeline_mode = #tpu.pipeline_mode<synchronous>, transform_indices = @transform_2, window_bounds = array<i64: 1, 128>}, {transform_indices = @transform_3, window_bounds = array<i64: 8, 128>}]} {
    %c0 = arith.constant 0 : index
    %c0_0 = arith.constant 0 : index
    %0 = vector.load %arg1[%c0, %c0_0] : memref<8x32xbf16, #tpu.memory_space<vmem>>, vector<8x32xbf16>
    %c0_1 = arith.constant 0 : index
    %c0_2 = arith.constant 0 : index
    %1 = vector.load %arg2[%c0_1, %c0_2] : memref<32x128xbf16, #tpu.memory_space<vmem>>, vector<32x128xbf16>
    %cst = arith.constant dense<0.000000e+00> : vector<8x128xf32>
    %2 = tpu.matmul %0, %1, %cst {dimension_numbers = #tpu.dot_dimension_numbers<[1], [0], [0], [1], [0, 0, 1, 1], [], []>} : vector<8x32xbf16>, vector<32x128xbf16>, vector<8x128xf32> -> vector<8x128xf32>
    %c0_3 = arith.constant 0 : index
    %c0_4 = arith.constant 0 : index
    %3 = vector.load %arg3[%c0_3, %c0_4] : memref<1x128xf32, #tpu.memory_space<vmem>>, vector<1x128xf32>
    %4 = vector.broadcast %3 : vector<1x128xf32> to vector<8x128xf32>
    %5 = arith.addf %2, %4 : vector<8x128xf32>
    %cst_5 = arith.constant 0.000000e+00 : f32
    %6 = vector.broadcast %cst_5 : f32 to vector<8x128xf32>
    %7 = arith.maximumf %5, %6 : vector<8x128xf32>
    %8 = arith.truncf %7 : vector<8x128xf32> to vector<8x128xbf16>
    %c0_6 = arith.constant 0 : index
    %c0_7 = arith.constant 0 : index
    %9 = vector.load %arg4[%c0_6, %c0_7] : memref<8x128xbf16, #tpu.memory_space<vmem>>, vector<8x128xbf16>
    tpu.vector_store %arg4[%c0_6, %c0_7], %8 {strides = array<i32>} : memref<8x128xbf16, #tpu.memory_space<vmem>>, vector<8x128xbf16>,
    return
  }
  func.func @transform_0(%arg0: i32) -> (i32, i32) {
    %c0_i32 = arith.constant 0 : i32
    %c0_i32_0 = arith.constant 0 : i32
    return %arg0, %c0_i32 : i32, i32
  }
  func.func @transform_1(%arg0: i32) -> (i32, i32) {
    %c0_i32 = arith.constant 0 : i32
    %c0_i32_0 = arith.constant 0 : i32
    %c0_i32_1 = arith.constant 0 : i32
    return %c0_i32, %c0_i32_0 : i32, i32
  }
  func.func @transform_2(%arg0: i32) -> (i32, i32) {
    %c0_i32 = arith.constant 0 : i32
    %c0_i32_0 = arith.constant 0 : i32
    %c0_i32_1 = arith.constant 0 : i32
    return %c0_i32, %c0_i32_0 : i32, i32
  }
  func.func @transform_3(%arg0: i32) -> (i32, i32) {
    %c0_i32 = arith.constant 0 : i32
    %c0_i32_0 = arith.constant 0 : i32
    return %arg0, %c0_i32 : i32, i32
  }
}

module attributes {stable_mosaic.version = 11 : i64} {
  func.func @kernel(%arg0: i32, %arg1: memref<16x128xbf16, #tpu.memory_space<vmem>>, %arg2: memref<16x128xbf16, #tpu.memory_space<vmem>>, %arg3: memref<16x128xbf16, #tpu.memory_space<vmem>>, %arg4: memref<1152x128xbf16, #tpu.memory_space<vmem>>, %arg5: memref<1x128xf32, #tpu.memory_space<vmem>>, %arg6: memref<16x128xbf16, #tpu.memory_space<vmem>>) attributes {dimension_semantics = [#tpu.dimension_semantics<parallel>], iteration_bounds = array<i64: 2>, scalar_prefetch = 0 : i64, scratch_operands = 0 : i64, tpu.core_type = #tpu.core_type<tc>, window_params = [{transform_indices = @transform_0, window_bounds = array<i64: 16, 128>}, {transform_indices = @transform_1, window_bounds = array<i64: 16, 128>}, {transform_indices = @transform_2, window_bounds = array<i64: 16, 128>}, {pipeline_mode = #tpu.pipeline_mode<synchronous>, transform_indices = @transform_3, window_bounds = array<i64: 1152, 128>}, {pipeline_mode = #tpu.pipeline_mode<synchronous>, transform_indices = @transform_4, window_bounds = array<i64: 1, 128>}, {transform_indices = @transform_5, window_bounds = array<i64: 16, 128>}]} {
    %c0 = arith.constant 0 : index
    %c0_0 = arith.constant 0 : index
    %0 = vector.load %arg1[%c0, %c0_0] : memref<16x128xbf16, #tpu.memory_space<vmem>>, vector<16x128xbf16>
    %1 = vector.extract_strided_slice %0 {offsets = [1, 0], sizes = [15, 128], strides = [1, 1]} : vector<16x128xbf16> to vector<15x128xbf16>
    %2 = vector.extract_strided_slice %0 {offsets = [0, 0], sizes = [1, 128], strides = [1, 1]} : vector<16x128xbf16> to vector<1x128xbf16>
    %3 = tpu.concatenate %1, %2 in 0 : vector<15x128xbf16>, vector<1x128xbf16> -> vector<16x128xbf16>
    %4 = vector.extract_strided_slice %0 {offsets = [2, 0], sizes = [14, 128], strides = [1, 1]} : vector<16x128xbf16> to vector<14x128xbf16>
    %5 = vector.extract_strided_slice %0 {offsets = [0, 0], sizes = [2, 128], strides = [1, 1]} : vector<16x128xbf16> to vector<2x128xbf16>
    %6 = tpu.concatenate %4, %5 in 0 : vector<14x128xbf16>, vector<2x128xbf16> -> vector<16x128xbf16>
    %c0_1 = arith.constant 0 : index
    %c0_2 = arith.constant 0 : index
    %7 = vector.load %arg2[%c0_1, %c0_2] : memref<16x128xbf16, #tpu.memory_space<vmem>>, vector<16x128xbf16>
    %8 = vector.extract_strided_slice %7 {offsets = [1, 0], sizes = [15, 128], strides = [1, 1]} : vector<16x128xbf16> to vector<15x128xbf16>
    %9 = vector.extract_strided_slice %7 {offsets = [0, 0], sizes = [1, 128], strides = [1, 1]} : vector<16x128xbf16> to vector<1x128xbf16>
    %10 = tpu.concatenate %8, %9 in 0 : vector<15x128xbf16>, vector<1x128xbf16> -> vector<16x128xbf16>
    %11 = vector.extract_strided_slice %7 {offsets = [2, 0], sizes = [14, 128], strides = [1, 1]} : vector<16x128xbf16> to vector<14x128xbf16>
    %12 = vector.extract_strided_slice %7 {offsets = [0, 0], sizes = [2, 128], strides = [1, 1]} : vector<16x128xbf16> to vector<2x128xbf16>
    %13 = tpu.concatenate %11, %12 in 0 : vector<14x128xbf16>, vector<2x128xbf16> -> vector<16x128xbf16>
    %c0_3 = arith.constant 0 : index
    %c0_4 = arith.constant 0 : index
    %14 = vector.load %arg3[%c0_3, %c0_4] : memref<16x128xbf16, #tpu.memory_space<vmem>>, vector<16x128xbf16>
    %15 = vector.extract_strided_slice %14 {offsets = [1, 0], sizes = [15, 128], strides = [1, 1]} : vector<16x128xbf16> to vector<15x128xbf16>
    %16 = vector.extract_strided_slice %14 {offsets = [0, 0], sizes = [1, 128], strides = [1, 1]} : vector<16x128xbf16> to vector<1x128xbf16>
    %17 = tpu.concatenate %15, %16 in 0 : vector<15x128xbf16>, vector<1x128xbf16> -> vector<16x128xbf16>
    %18 = vector.extract_strided_slice %14 {offsets = [2, 0], sizes = [14, 128], strides = [1, 1]} : vector<16x128xbf16> to vector<14x128xbf16>
    %19 = vector.extract_strided_slice %14 {offsets = [0, 0], sizes = [2, 128], strides = [1, 1]} : vector<16x128xbf16> to vector<2x128xbf16>
    %20 = tpu.concatenate %18, %19 in 0 : vector<14x128xbf16>, vector<2x128xbf16> -> vector<16x128xbf16>
    %21 = tpu.concatenate %0, %3, %6, %7, %10, %13, %14, %17, %20 in 1 : vector<16x128xbf16>, vector<16x128xbf16>, vector<16x128xbf16>, vector<16x128xbf16>, vector<16x128xbf16>, vector<16x128xbf16>, vector<16x128xbf16>, vector<16x128xbf16>, vector<16x128xbf16> -> vector<16x1152xbf16>
    %c0_5 = arith.constant 0 : index
    %c0_6 = arith.constant 0 : index
    %22 = vector.load %arg4[%c0_5, %c0_6] : memref<1152x128xbf16, #tpu.memory_space<vmem>>, vector<1152x128xbf16>
    %cst = arith.constant dense<0.000000e+00> : vector<16x128xf32>
    %23 = tpu.matmul %21, %22, %cst {dimension_numbers = #tpu.dot_dimension_numbers<[1], [0], [0], [1], [0, 0, 1, 1], [], []>} : vector<16x1152xbf16>, vector<1152x128xbf16>, vector<16x128xf32> -> vector<16x128xf32>
    %c0_7 = arith.constant 0 : index
    %c0_8 = arith.constant 0 : index
    %24 = vector.load %arg5[%c0_7, %c0_8] : memref<1x128xf32, #tpu.memory_space<vmem>>, vector<1x128xf32>
    %25 = vector.broadcast %24 : vector<1x128xf32> to vector<16x128xf32>
    %26 = arith.addf %23, %25 : vector<16x128xf32>
    %cst_9 = arith.constant 0.000000e+00 : f32
    %27 = vector.broadcast %cst_9 : f32 to vector<16x128xf32>
    %28 = arith.maximumf %26, %27 : vector<16x128xf32>
    %29 = arith.truncf %28 : vector<16x128xf32> to vector<16x128xbf16>
    %c0_10 = arith.constant 0 : index
    %c0_11 = arith.constant 0 : index
    %30 = vector.load %arg6[%c0_10, %c0_11] : memref<16x128xbf16, #tpu.memory_space<vmem>>, vector<16x128xbf16>
    tpu.vector_store %arg6[%c0_10, %c0_11], %29 {strides = array<i32>} : memref<16x128xbf16, #tpu.memory_space<vmem>>, vector<16x128xbf16>,
    return
  }
  func.func @transform_0(%arg0: i32) -> (i32, i32) {
    %c0_i32 = arith.constant 0 : i32
    %c0_i32_0 = arith.constant 0 : i32
    return %arg0, %c0_i32 : i32, i32
  }
  func.func @transform_1(%arg0: i32) -> (i32, i32) {
    %c0_i32 = arith.constant 0 : i32
    %c0_i32_0 = arith.constant 0 : i32
    return %arg0, %c0_i32 : i32, i32
  }
  func.func @transform_2(%arg0: i32) -> (i32, i32) {
    %c0_i32 = arith.constant 0 : i32
    %c0_i32_0 = arith.constant 0 : i32
    return %arg0, %c0_i32 : i32, i32
  }
  func.func @transform_3(%arg0: i32) -> (i32, i32) {
    %c0_i32 = arith.constant 0 : i32
    %c0_i32_0 = arith.constant 0 : i32
    %c0_i32_1 = arith.constant 0 : i32
    return %c0_i32, %c0_i32_0 : i32, i32
  }
  func.func @transform_4(%arg0: i32) -> (i32, i32) {
    %c0_i32 = arith.constant 0 : i32
    %c0_i32_0 = arith.constant 0 : i32
    %c0_i32_1 = arith.constant 0 : i32
    return %c0_i32, %c0_i32_0 : i32, i32
  }
  func.func @transform_5(%arg0: i32) -> (i32, i32) {
    %c0_i32 = arith.constant 0 : i32
    %c0_i32_0 = arith.constant 0 : i32
    return %arg0, %c0_i32 : i32, i32
  }
}

module attributes {stable_mosaic.version = 11 : i64} {
  func.func @_head_kernel(%arg0: i32, %arg1: memref<16x128xbf16, #tpu.memory_space<vmem>>, %arg2: memref<32x128xbf16, #tpu.memory_space<vmem>>, %arg3: memref<32x1xf32, #tpu.memory_space<vmem>>, %arg4: memref<32x16xf32, #tpu.memory_space<vmem>>) attributes {dimension_semantics = [#tpu.dimension_semantics<parallel>], iteration_bounds = array<i64: 1>, scalar_prefetch = 0 : i64, scratch_operands = 0 : i64, tpu.core_type = #tpu.core_type<tc>, window_params = [{transform_indices = @transform_0, window_bounds = array<i64: 16, 128>}, {pipeline_mode = #tpu.pipeline_mode<synchronous>, transform_indices = @transform_1, window_bounds = array<i64: 32, 128>}, {pipeline_mode = #tpu.pipeline_mode<synchronous>, transform_indices = @transform_2, window_bounds = array<i64: 32, 1>}, {transform_indices = @transform_3, window_bounds = array<i64: 32, 16>}]} {
    %c0 = arith.constant 0 : index
    %c0_0 = arith.constant 0 : index
    %0 = vector.load %arg2[%c0, %c0_0] : memref<32x128xbf16, #tpu.memory_space<vmem>>, vector<32x128xbf16>
    %c0_1 = arith.constant 0 : index
    %c0_2 = arith.constant 0 : index
    %1 = vector.load %arg1[%c0_1, %c0_2] : memref<16x128xbf16, #tpu.memory_space<vmem>>, vector<16x128xbf16>
    %cst = arith.constant dense<0.000000e+00> : vector<32x16xf32>
    %2 = tpu.matmul %0, %1, %cst {dimension_numbers = #tpu.dot_dimension_numbers<[1], [1], [0], [0], [0, 0, 1, 0], [], []>} : vector<32x128xbf16>, vector<16x128xbf16>, vector<32x16xf32> -> vector<32x16xf32>
    %c0_3 = arith.constant 0 : index
    %c0_4 = arith.constant 0 : index
    %3 = vector.load %arg3[%c0_3, %c0_4] : memref<32x1xf32, #tpu.memory_space<vmem>>, vector<32x1xf32>
    %4 = vector.broadcast %3 : vector<32x1xf32> to vector<32x16xf32>
    %5 = arith.addf %2, %4 : vector<32x16xf32>
    %c0_5 = arith.constant 0 : index
    %c0_6 = arith.constant 0 : index
    %6 = vector.load %arg4[%c0_5, %c0_6] : memref<32x16xf32, #tpu.memory_space<vmem>>, vector<32x16xf32>
    tpu.vector_store %arg4[%c0_5, %c0_6], %5 {strides = array<i32>} : memref<32x16xf32, #tpu.memory_space<vmem>>, vector<32x16xf32>,
    return
  }
  func.func @transform_0(%arg0: i32) -> (i32, i32) {
    %c0_i32 = arith.constant 0 : i32
    %c0_i32_0 = arith.constant 0 : i32
    return %arg0, %c0_i32 : i32, i32
  }
  func.func @transform_1(%arg0: i32) -> (i32, i32) {
    %c0_i32 = arith.constant 0 : i32
    %c0_i32_0 = arith.constant 0 : i32
    %c0_i32_1 = arith.constant 0 : i32
    return %c0_i32, %c0_i32_0 : i32, i32
  }
  func.func @transform_2(%arg0: i32) -> (i32, i32) {
    %c0_i32 = arith.constant 0 : i32
    %c0_i32_0 = arith.constant 0 : i32
    %c0_i32_1 = arith.constant 0 : i32
    return %c0_i32, %c0_i32_0 : i32, i32
  }
  func.func @transform_3(%arg0: i32) -> (i32, i32) {
    %c0_i32 = arith.constant 0 : i32
    %c0_i32_0 = arith.constant 0 : i32
    return %c0_i32, %arg0 : i32, i32
  }
}

module attributes {stable_mosaic.version = 11 : i64} {
  func.func @_head_kernel(%arg0: i32, %arg1: memref<8x128xbf16, #tpu.memory_space<vmem>>, %arg2: memref<32x128xbf16, #tpu.memory_space<vmem>>, %arg3: memref<32x1xf32, #tpu.memory_space<vmem>>, %arg4: memref<32x8xf32, #tpu.memory_space<vmem>>) attributes {dimension_semantics = [#tpu.dimension_semantics<parallel>], iteration_bounds = array<i64: 1>, scalar_prefetch = 0 : i64, scratch_operands = 0 : i64, tpu.core_type = #tpu.core_type<tc>, window_params = [{transform_indices = @transform_0, window_bounds = array<i64: 8, 128>}, {pipeline_mode = #tpu.pipeline_mode<synchronous>, transform_indices = @transform_1, window_bounds = array<i64: 32, 128>}, {pipeline_mode = #tpu.pipeline_mode<synchronous>, transform_indices = @transform_2, window_bounds = array<i64: 32, 1>}, {transform_indices = @transform_3, window_bounds = array<i64: 32, 8>}]} {
    %c0 = arith.constant 0 : index
    %c0_0 = arith.constant 0 : index
    %0 = vector.load %arg2[%c0, %c0_0] : memref<32x128xbf16, #tpu.memory_space<vmem>>, vector<32x128xbf16>
    %c0_1 = arith.constant 0 : index
    %c0_2 = arith.constant 0 : index
    %1 = vector.load %arg1[%c0_1, %c0_2] : memref<8x128xbf16, #tpu.memory_space<vmem>>, vector<8x128xbf16>
    %cst = arith.constant dense<0.000000e+00> : vector<32x8xf32>
    %2 = tpu.matmul %0, %1, %cst {dimension_numbers = #tpu.dot_dimension_numbers<[1], [1], [0], [0], [0, 0, 1, 0], [], []>} : vector<32x128xbf16>, vector<8x128xbf16>, vector<32x8xf32> -> vector<32x8xf32>
    %c0_3 = arith.constant 0 : index
    %c0_4 = arith.constant 0 : index
    %3 = vector.load %arg3[%c0_3, %c0_4] : memref<32x1xf32, #tpu.memory_space<vmem>>, vector<32x1xf32>
    %4 = vector.broadcast %3 : vector<32x1xf32> to vector<32x8xf32>
    %5 = arith.addf %2, %4 : vector<32x8xf32>
    %c0_5 = arith.constant 0 : index
    %c0_6 = arith.constant 0 : index
    %6 = vector.load %arg4[%c0_5, %c0_6] : memref<32x8xf32, #tpu.memory_space<vmem>>, vector<32x8xf32>
    tpu.vector_store %arg4[%c0_5, %c0_6], %5 {strides = array<i32>} : memref<32x8xf32, #tpu.memory_space<vmem>>, vector<32x8xf32>,
    return
  }
  func.func @transform_0(%arg0: i32) -> (i32, i32) {
    %c0_i32 = arith.constant 0 : i32
    %c0_i32_0 = arith.constant 0 : i32
    return %arg0, %c0_i32 : i32, i32
  }
  func.func @transform_1(%arg0: i32) -> (i32, i32) {
    %c0_i32 = arith.constant 0 : i32
    %c0_i32_0 = arith.constant 0 : i32
    %c0_i32_1 = arith.constant 0 : i32
    return %c0_i32, %c0_i32_0 : i32, i32
  }
  func.func @transform_2(%arg0: i32) -> (i32, i32) {
    %c0_i32 = arith.constant 0 : i32
    %c0_i32_0 = arith.constant 0 : i32
    %c0_i32_1 = arith.constant 0 : i32
    return %c0_i32, %c0_i32_0 : i32, i32
  }
  func.func @transform_3(%arg0: i32) -> (i32, i32) {
    %c0_i32 = arith.constant 0 : i32
    %c0_i32_0 = arith.constant 0 : i32
    return %c0_i32, %arg0 : i32, i32
  }
}

module attributes {stable_mosaic.version = 11 : i64} {
  func.func @kernel(%arg0: i32, %arg1: memref<8x128xbf16, #tpu.memory_space<vmem>>, %arg2: memref<8x128xbf16, #tpu.memory_space<vmem>>, %arg3: memref<8x128xbf16, #tpu.memory_space<vmem>>, %arg4: memref<1152x128xbf16, #tpu.memory_space<vmem>>, %arg5: memref<1x128xf32, #tpu.memory_space<vmem>>, %arg6: memref<8x128xbf16, #tpu.memory_space<vmem>>) attributes {dimension_semantics = [#tpu.dimension_semantics<parallel>], iteration_bounds = array<i64: 1>, scalar_prefetch = 0 : i64, scratch_operands = 0 : i64, tpu.core_type = #tpu.core_type<tc>, window_params = [{transform_indices = @transform_0, window_bounds = array<i64: 8, 128>}, {transform_indices = @transform_1, window_bounds = array<i64: 8, 128>}, {transform_indices = @transform_2, window_bounds = array<i64: 8, 128>}, {pipeline_mode = #tpu.pipeline_mode<synchronous>, transform_indices = @transform_3, window_bounds = array<i64: 1152, 128>}, {pipeline_mode = #tpu.pipeline_mode<synchronous>, transform_indices = @transform_4, window_bounds = array<i64: 1, 128>}, {transform_indices = @transform_5, window_bounds = array<i64: 8, 128>}]} {
    %c0 = arith.constant 0 : index
    %c0_0 = arith.constant 0 : index
    %0 = vector.load %arg1[%c0, %c0_0] : memref<8x128xbf16, #tpu.memory_space<vmem>>, vector<8x128xbf16>
    %1 = vector.extract_strided_slice %0 {offsets = [1, 0], sizes = [7, 128], strides = [1, 1]} : vector<8x128xbf16> to vector<7x128xbf16>
    %2 = vector.extract_strided_slice %0 {offsets = [0, 0], sizes = [1, 128], strides = [1, 1]} : vector<8x128xbf16> to vector<1x128xbf16>
    %3 = tpu.concatenate %1, %2 in 0 : vector<7x128xbf16>, vector<1x128xbf16> -> vector<8x128xbf16>
    %4 = vector.extract_strided_slice %0 {offsets = [2, 0], sizes = [6, 128], strides = [1, 1]} : vector<8x128xbf16> to vector<6x128xbf16>
    %5 = vector.extract_strided_slice %0 {offsets = [0, 0], sizes = [2, 128], strides = [1, 1]} : vector<8x128xbf16> to vector<2x128xbf16>
    %6 = tpu.concatenate %4, %5 in 0 : vector<6x128xbf16>, vector<2x128xbf16> -> vector<8x128xbf16>
    %c0_1 = arith.constant 0 : index
    %c0_2 = arith.constant 0 : index
    %7 = vector.load %arg2[%c0_1, %c0_2] : memref<8x128xbf16, #tpu.memory_space<vmem>>, vector<8x128xbf16>
    %8 = vector.extract_strided_slice %7 {offsets = [1, 0], sizes = [7, 128], strides = [1, 1]} : vector<8x128xbf16> to vector<7x128xbf16>
    %9 = vector.extract_strided_slice %7 {offsets = [0, 0], sizes = [1, 128], strides = [1, 1]} : vector<8x128xbf16> to vector<1x128xbf16>
    %10 = tpu.concatenate %8, %9 in 0 : vector<7x128xbf16>, vector<1x128xbf16> -> vector<8x128xbf16>
    %11 = vector.extract_strided_slice %7 {offsets = [2, 0], sizes = [6, 128], strides = [1, 1]} : vector<8x128xbf16> to vector<6x128xbf16>
    %12 = vector.extract_strided_slice %7 {offsets = [0, 0], sizes = [2, 128], strides = [1, 1]} : vector<8x128xbf16> to vector<2x128xbf16>
    %13 = tpu.concatenate %11, %12 in 0 : vector<6x128xbf16>, vector<2x128xbf16> -> vector<8x128xbf16>
    %c0_3 = arith.constant 0 : index
    %c0_4 = arith.constant 0 : index
    %14 = vector.load %arg3[%c0_3, %c0_4] : memref<8x128xbf16, #tpu.memory_space<vmem>>, vector<8x128xbf16>
    %15 = vector.extract_strided_slice %14 {offsets = [1, 0], sizes = [7, 128], strides = [1, 1]} : vector<8x128xbf16> to vector<7x128xbf16>
    %16 = vector.extract_strided_slice %14 {offsets = [0, 0], sizes = [1, 128], strides = [1, 1]} : vector<8x128xbf16> to vector<1x128xbf16>
    %17 = tpu.concatenate %15, %16 in 0 : vector<7x128xbf16>, vector<1x128xbf16> -> vector<8x128xbf16>
    %18 = vector.extract_strided_slice %14 {offsets = [2, 0], sizes = [6, 128], strides = [1, 1]} : vector<8x128xbf16> to vector<6x128xbf16>
    %19 = vector.extract_strided_slice %14 {offsets = [0, 0], sizes = [2, 128], strides = [1, 1]} : vector<8x128xbf16> to vector<2x128xbf16>
    %20 = tpu.concatenate %18, %19 in 0 : vector<6x128xbf16>, vector<2x128xbf16> -> vector<8x128xbf16>
    %21 = tpu.concatenate %0, %3, %6, %7, %10, %13, %14, %17, %20 in 1 : vector<8x128xbf16>, vector<8x128xbf16>, vector<8x128xbf16>, vector<8x128xbf16>, vector<8x128xbf16>, vector<8x128xbf16>, vector<8x128xbf16>, vector<8x128xbf16>, vector<8x128xbf16> -> vector<8x1152xbf16>
    %c0_5 = arith.constant 0 : index
    %c0_6 = arith.constant 0 : index
    %22 = vector.load %arg4[%c0_5, %c0_6] : memref<1152x128xbf16, #tpu.memory_space<vmem>>, vector<1152x128xbf16>
    %cst = arith.constant dense<0.000000e+00> : vector<8x128xf32>
    %23 = tpu.matmul %21, %22, %cst {dimension_numbers = #tpu.dot_dimension_numbers<[1], [0], [0], [1], [0, 0, 1, 1], [], []>} : vector<8x1152xbf16>, vector<1152x128xbf16>, vector<8x128xf32> -> vector<8x128xf32>
    %c0_7 = arith.constant 0 : index
    %c0_8 = arith.constant 0 : index
    %24 = vector.load %arg5[%c0_7, %c0_8] : memref<1x128xf32, #tpu.memory_space<vmem>>, vector<1x128xf32>
    %25 = vector.broadcast %24 : vector<1x128xf32> to vector<8x128xf32>
    %26 = arith.addf %23, %25 : vector<8x128xf32>
    %cst_9 = arith.constant 0.000000e+00 : f32
    %27 = vector.broadcast %cst_9 : f32 to vector<8x128xf32>
    %28 = arith.maximumf %26, %27 : vector<8x128xf32>
    %29 = arith.truncf %28 : vector<8x128xf32> to vector<8x128xbf16>
    %c0_10 = arith.constant 0 : index
    %c0_11 = arith.constant 0 : index
    %30 = vector.load %arg6[%c0_10, %c0_11] : memref<8x128xbf16, #tpu.memory_space<vmem>>, vector<8x128xbf16>
    tpu.vector_store %arg6[%c0_10, %c0_11], %29 {strides = array<i32>} : memref<8x128xbf16, #tpu.memory_space<vmem>>, vector<8x128xbf16>,
    return
  }
  func.func @transform_0(%arg0: i32) -> (i32, i32) {
    %c0_i32 = arith.constant 0 : i32
    %c0_i32_0 = arith.constant 0 : i32
    return %arg0, %c0_i32 : i32, i32
  }
  func.func @transform_1(%arg0: i32) -> (i32, i32) {
    %c0_i32 = arith.constant 0 : i32
    %c0_i32_0 = arith.constant 0 : i32
    return %arg0, %c0_i32 : i32, i32
  }
  func.func @transform_2(%arg0: i32) -> (i32, i32) {
    %c0_i32 = arith.constant 0 : i32
    %c0_i32_0 = arith.constant 0 : i32
    return %arg0, %c0_i32 : i32, i32
  }
  func.func @transform_3(%arg0: i32) -> (i32, i32) {
    %c0_i32 = arith.constant 0 : i32
    %c0_i32_0 = arith.constant 0 : i32
    %c0_i32_1 = arith.constant 0 : i32
    return %c0_i32, %c0_i32_0 : i32, i32
  }
  func.func @transform_4(%arg0: i32) -> (i32, i32) {
    %c0_i32 = arith.constant 0 : i32
    %c0_i32_0 = arith.constant 0 : i32
    %c0_i32_1 = arith.constant 0 : i32
    return %c0_i32, %c0_i32_0 : i32, i32
  }
  func.func @transform_5(%arg0: i32) -> (i32, i32) {
    %c0_i32 = arith.constant 0 : i32
    %c0_i32_0 = arith.constant 0 : i32
    return %arg0, %c0_i32 : i32, i32
  }
}

module attributes {stable_mosaic.version = 11 : i64} {
  func.func @kernel(%arg0: i32, %arg1: memref<32x128xf32, #tpu.memory_space<vmem>>, %arg2: memref<8x128xf32, #tpu.memory_space<vmem>>, %arg3: memref<8x128xf32, #tpu.memory_space<vmem>>, %arg4: memref<2x128xf32, #tpu.memory_space<vmem>>, %arg5: memref<20x128xf32, #tpu.memory_space<vmem>>) attributes {dimension_semantics = [#tpu.dimension_semantics<parallel>], iteration_bounds = array<i64: 1>, scalar_prefetch = 0 : i64, scratch_operands = 0 : i64, tpu.core_type = #tpu.core_type<tc>, window_params = [{transform_indices = @transform_0, window_bounds = array<i64: 32, 128>}, {transform_indices = @transform_1, window_bounds = array<i64: 8, 128>}, {transform_indices = @transform_2, window_bounds = array<i64: 8, 128>}, {transform_indices = @transform_3, window_bounds = array<i64: 2, 128>}, {transform_indices = @transform_4, window_bounds = array<i64: 20, 128>}]} {
    %c0 = arith.constant 0 : index
    %c0_0 = arith.constant 0 : index
    %0 = vector.load %arg2[%c0, %c0_0] : memref<8x128xf32, #tpu.memory_space<vmem>>, vector<1x128xf32>
    %c1 = arith.constant 1 : index
    %c0_1 = arith.constant 0 : index
    %1 = vector.load %arg2[%c1, %c0_1] : memref<8x128xf32, #tpu.memory_space<vmem>>, vector<1x128xf32>
    %c2 = arith.constant 2 : index
    %c0_2 = arith.constant 0 : index
    %2 = vector.load %arg2[%c2, %c0_2] : memref<8x128xf32, #tpu.memory_space<vmem>>, vector<1x128xf32>
    %c3 = arith.constant 3 : index
    %c0_3 = arith.constant 0 : index
    %3 = vector.load %arg2[%c3, %c0_3] : memref<8x128xf32, #tpu.memory_space<vmem>>, vector<1x128xf32>
    %cst = arith.constant 1.000000e-01 : f32
    %4 = vector.broadcast %cst : f32 to vector<1x128xf32>
    %5 = arith.mulf %4, %2 : vector<1x128xf32>
    %cst_4 = arith.constant 1.000000e-01 : f32
    %6 = vector.broadcast %cst_4 : f32 to vector<1x128xf32>
    %7 = arith.mulf %6, %3 : vector<1x128xf32>
    %c0_5 = arith.constant 0 : index
    %c0_6 = arith.constant 0 : index
    %8 = vector.load %arg1[%c0_5, %c0_6] : memref<32x128xf32, #tpu.memory_space<vmem>>, vector<1x128xf32>
    %9 = arith.mulf %8, %5 : vector<1x128xf32>
    %10 = arith.addf %0, %9 : vector<1x128xf32>
    %c1_7 = arith.constant 1 : index
    %c0_8 = arith.constant 0 : index
    %11 = vector.load %arg1[%c1_7, %c0_8] : memref<32x128xf32, #tpu.memory_space<vmem>>, vector<1x128xf32>
    %12 = arith.mulf %11, %7 : vector<1x128xf32>
    %13 = arith.addf %1, %12 : vector<1x128xf32>
    %c2_9 = arith.constant 2 : index
    %c0_10 = arith.constant 0 : index
    %14 = vector.load %arg1[%c2_9, %c0_10] : memref<32x128xf32, #tpu.memory_space<vmem>>, vector<1x128xf32>
    %cst_11 = arith.constant 2.000000e-01 : f32
    %15 = vector.broadcast %cst_11 : f32 to vector<1x128xf32>
    %16 = arith.mulf %14, %15 : vector<1x128xf32>
    %17 = math.exp %16 : vector<1x128xf32>
    %18 = arith.mulf %2, %17 : vector<1x128xf32>
    %c3_12 = arith.constant 3 : index
    %c0_13 = arith.constant 0 : index
    %19 = vector.load %arg1[%c3_12, %c0_13] : memref<32x128xf32, #tpu.memory_space<vmem>>, vector<1x128xf32>
    %cst_14 = arith.constant 2.000000e-01 : f32
    %20 = vector.broadcast %cst_14 : f32 to vector<1x128xf32>
    %21 = arith.mulf %19, %20 : vector<1x128xf32>
    %22 = math.exp %21 : vector<1x128xf32>
    %23 = arith.mulf %3, %22 : vector<1x128xf32>
    %cst_15 = arith.constant 5.000000e-01 : f32
    %24 = vector.broadcast %cst_15 : f32 to vector<1x128xf32>
    %25 = arith.mulf %24, %18 : vector<1x128xf32>
    %26 = arith.subf %10, %25 : vector<1x128xf32>
    %cst_16 = arith.constant 5.000000e-01 : f32
    %27 = vector.broadcast %cst_16 : f32 to vector<1x128xf32>
    %28 = arith.mulf %27, %23 : vector<1x128xf32>
    %29 = arith.subf %13, %28 : vector<1x128xf32>
    %cst_17 = arith.constant 3.200000e+01 : f32
    %30 = vector.broadcast %cst_17 : f32 to vector<1x128xf32>
    %31 = arith.mulf %26, %30 : vector<1x128xf32>
    %c0_18 = arith.constant 0 : index
    %c0_19 = arith.constant 0 : index
    %32 = vector.load %arg3[%c0_18, %c0_19] : memref<8x128xf32, #tpu.memory_space<vmem>>, vector<1x128xf32>
    tpu.vector_store %arg3[%c0_18, %c0_19], %31 {strides = array<i32>} : memref<8x128xf32, #tpu.memory_space<vmem>>, vector<1x128xf32>,
    %cst_20 = arith.constant 3.200000e+01 : f32
    %33 = vector.broadcast %cst_20 : f32 to vector<1x128xf32>
    %34 = arith.mulf %29, %33 : vector<1x128xf32>
    %c1_21 = arith.constant 1 : index
    %c0_22 = arith.constant 0 : index
    %35 = vector.load %arg3[%c1_21, %c0_22] : memref<8x128xf32, #tpu.memory_space<vmem>>, vector<1x128xf32>
    tpu.vector_store %arg3[%c1_21, %c0_22], %34 {strides = array<i32>} : memref<8x128xf32, #tpu.memory_space<vmem>>, vector<1x128xf32>,
    %36 = arith.addf %26, %18 : vector<1x128xf32>
    %cst_23 = arith.constant 3.200000e+01 : f32
    %37 = vector.broadcast %cst_23 : f32 to vector<1x128xf32>
    %38 = arith.mulf %36, %37 : vector<1x128xf32>
    %c2_24 = arith.constant 2 : index
    %c0_25 = arith.constant 0 : index
    %39 = vector.load %arg3[%c2_24, %c0_25] : memref<8x128xf32, #tpu.memory_space<vmem>>, vector<1x128xf32>
    tpu.vector_store %arg3[%c2_24, %c0_25], %38 {strides = array<i32>} : memref<8x128xf32, #tpu.memory_space<vmem>>, vector<1x128xf32>,
    %40 = arith.addf %29, %23 : vector<1x128xf32>
    %cst_26 = arith.constant 3.200000e+01 : f32
    %41 = vector.broadcast %cst_26 : f32 to vector<1x128xf32>
    %42 = arith.mulf %40, %41 : vector<1x128xf32>
    %c3_27 = arith.constant 3 : index
    %c0_28 = arith.constant 0 : index
    %43 = vector.load %arg3[%c3_27, %c0_28] : memref<8x128xf32, #tpu.memory_space<vmem>>, vector<1x128xf32>
    tpu.vector_store %arg3[%c3_27, %c0_28], %42 {strides = array<i32>} : memref<8x128xf32, #tpu.memory_space<vmem>>, vector<1x128xf32>,
    %c12 = arith.constant 12 : index
    %c0_29 = arith.constant 0 : index
    %44 = vector.load %arg1[%c12, %c0_29] : memref<32x128xf32, #tpu.memory_space<vmem>>, vector<1x128xf32>
    %c13 = arith.constant 13 : index
    %c0_30 = arith.constant 0 : index
    %45 = vector.load %arg1[%c13, %c0_30] : memref<32x128xf32, #tpu.memory_space<vmem>>, vector<1x128xf32>
    %46 = arith.mulf %44, %5 : vector<1x128xf32>
    %47 = arith.addf %0, %46 : vector<1x128xf32>
    %cst_31 = arith.constant 3.200000e+01 : f32
    %48 = vector.broadcast %cst_31 : f32 to vector<1x128xf32>
    %49 = arith.mulf %47, %48 : vector<1x128xf32>
    %c0_32 = arith.constant 0 : index
    %c0_33 = arith.constant 0 : index
    %50 = vector.load %arg5[%c0_32, %c0_33] : memref<20x128xf32, #tpu.memory_space<vmem>>, vector<1x128xf32>
    tpu.vector_store %arg5[%c0_32, %c0_33], %49 {strides = array<i32>} : memref<20x128xf32, #tpu.memory_space<vmem>>, vector<1x128xf32>,
    %51 = arith.mulf %45, %7 : vector<1x128xf32>
    %52 = arith.addf %1, %51 : vector<1x128xf32>
    %cst_34 = arith.constant 3.200000e+01 : f32
    %53 = vector.broadcast %cst_34 : f32 to vector<1x128xf32>
    %54 = arith.mulf %52, %53 : vector<1x128xf32>
    %c1_35 = arith.constant 1 : index
    %c0_36 = arith.constant 0 : index
    %55 = vector.load %arg5[%c1_35, %c0_36] : memref<20x128xf32, #tpu.memory_space<vmem>>, vector<1x128xf32>
    tpu.vector_store %arg5[%c1_35, %c0_36], %54 {strides = array<i32>} : memref<20x128xf32, #tpu.memory_space<vmem>>, vector<1x128xf32>,
    %c14 = arith.constant 14 : index
    %c0_37 = arith.constant 0 : index
    %56 = vector.load %arg1[%c14, %c0_37] : memref<32x128xf32, #tpu.memory_space<vmem>>, vector<1x128xf32>
    %c15 = arith.constant 15 : index
    %c0_38 = arith.constant 0 : index
    %57 = vector.load %arg1[%c15, %c0_38] : memref<32x128xf32, #tpu.memory_space<vmem>>, vector<1x128xf32>
    %58 = arith.mulf %56, %5 : vector<1x128xf32>
    %59 = arith.addf %0, %58 : vector<1x128xf32>
    %cst_39 = arith.constant 3.200000e+01 : f32
    %60 = vector.broadcast %cst_39 : f32 to vector<1x128xf32>
    %61 = arith.mulf %59, %60 : vector<1x128xf32>
    %c2_40 = arith.constant 2 : index
    %c0_41 = arith.constant 0 : index
    %62 = vector.load %arg5[%c2_40, %c0_41] : memref<20x128xf32, #tpu.memory_space<vmem>>, vector<1x128xf32>
    tpu.vector_store %arg5[%c2_40, %c0_41], %61 {strides = array<i32>} : memref<20x128xf32, #tpu.memory_space<vmem>>, vector<1x128xf32>,
    %63 = arith.mulf %57, %7 : vector<1x128xf32>
    %64 = arith.addf %1, %63 : vector<1x128xf32>
    %cst_42 = arith.constant 3.200000e+01 : f32
    %65 = vector.broadcast %cst_42 : f32 to vector<1x128xf32>
    %66 = arith.mulf %64, %65 : vector<1x128xf32>
    %c3_43 = arith.constant 3 : index
    %c0_44 = arith.constant 0 : index
    %67 = vector.load %arg5[%c3_43, %c0_44] : memref<20x128xf32, #tpu.memory_space<vmem>>, vector<1x128xf32>
    tpu.vector_store %arg5[%c3_43, %c0_44], %66 {strides = array<i32>} : memref<20x128xf32, #tpu.memory_space<vmem>>, vector<1x128xf32>,
    %c16 = arith.constant 16 : index
    %c0_45 = arith.constant 0 : index
    %68 = vector.load %arg1[%c16, %c0_45] : memref<32x128xf32, #tpu.memory_space<vmem>>, vector<1x128xf32>
    %c17 = arith.constant 17 : index
    %c0_46 = arith.constant 0 : index
    %69 = vector.load %arg1[%c17, %c0_46] : memref<32x128xf32, #tpu.memory_space<vmem>>, vector<1x128xf32>
    %70 = arith.mulf %68, %5 : vector<1x128xf32>
    %71 = arith.addf %0, %70 : vector<1x128xf32>
    %cst_47 = arith.constant 3.200000e+01 : f32
    %72 = vector.broadcast %cst_47 : f32 to vector<1x128xf32>
    %73 = arith.mulf %71, %72 : vector<1x128xf32>
    %c4 = arith.constant 4 : index
    %c0_48 = arith.constant 0 : index
    %74 = vector.load %arg5[%c4, %c0_48] : memref<20x128xf32, #tpu.memory_space<vmem>>, vector<1x128xf32>
    tpu.vector_store %arg5[%c4, %c0_48], %73 {strides = array<i32>} : memref<20x128xf32, #tpu.memory_space<vmem>>, vector<1x128xf32>,
    %75 = arith.mulf %69, %7 : vector<1x128xf32>
    %76 = arith.addf %1, %75 : vector<1x128xf32>
    %cst_49 = arith.constant 3.200000e+01 : f32
    %77 = vector.broadcast %cst_49 : f32 to vector<1x128xf32>
    %78 = arith.mulf %76, %77 : vector<1x128xf32>
    %c5 = arith.constant 5 : index
    %c0_50 = arith.constant 0 : index
    %79 = vector.load %arg5[%c5, %c0_50] : memref<20x128xf32, #tpu.memory_space<vmem>>, vector<1x128xf32>
    tpu.vector_store %arg5[%c5, %c0_50], %78 {strides = array<i32>} : memref<20x128xf32, #tpu.memory_space<vmem>>, vector<1x128xf32>,
    %c18 = arith.constant 18 : index
    %c0_51 = arith.constant 0 : index
    %80 = vector.load %arg1[%c18, %c0_51] : memref<32x128xf32, #tpu.memory_space<vmem>>, vector<1x128xf32>
    %c19 = arith.constant 19 : index
    %c0_52 = arith.constant 0 : index
    %81 = vector.load %arg1[%c19, %c0_52] : memref<32x128xf32, #tpu.memory_space<vmem>>, vector<1x128xf32>
    %82 = arith.mulf %80, %5 : vector<1x128xf32>
    %83 = arith.addf %0, %82 : vector<1x128xf32>
    %cst_53 = arith.constant 3.200000e+01 : f32
    %84 = vector.broadcast %cst_53 : f32 to vector<1x128xf32>
    %85 = arith.mulf %83, %84 : vector<1x128xf32>
    %c6 = arith.constant 6 : index
    %c0_54 = arith.constant 0 : index
    %86 = vector.load %arg5[%c6, %c0_54] : memref<20x128xf32, #tpu.memory_space<vmem>>, vector<1x128xf32>
    tpu.vector_store %arg5[%c6, %c0_54], %85 {strides = array<i32>} : memref<20x128xf32, #tpu.memory_space<vmem>>, vector<1x128xf32>,
    %87 = arith.mulf %81, %7 : vector<1x128xf32>
    %88 = arith.addf %1, %87 : vector<1x128xf32>
    %cst_55 = arith.constant 3.200000e+01 : f32
    %89 = vector.broadcast %cst_55 : f32 to vector<1x128xf32>
    %90 = arith.mulf %88, %89 : vector<1x128xf32>
    %c7 = arith.constant 7 : index
    %c0_56 = arith.constant 0 : index
    %91 = vector.load %arg5[%c7, %c0_56] : memref<20x128xf32, #tpu.memory_space<vmem>>, vector<1x128xf32>
    tpu.vector_store %arg5[%c7, %c0_56], %90 {strides = array<i32>} : memref<20x128xf32, #tpu.memory_space<vmem>>, vector<1x128xf32>,
    %c20 = arith.constant 20 : index
    %c0_57 = arith.constant 0 : index
    %92 = vector.load %arg1[%c20, %c0_57] : memref<32x128xf32, #tpu.memory_space<vmem>>, vector<1x128xf32>
    %c21 = arith.constant 21 : index
    %c0_58 = arith.constant 0 : index
    %93 = vector.load %arg1[%c21, %c0_58] : memref<32x128xf32, #tpu.memory_space<vmem>>, vector<1x128xf32>
    %94 = arith.mulf %92, %5 : vector<1x128xf32>
    %95 = arith.addf %0, %94 : vector<1x128xf32>
    %cst_59 = arith.constant 3.200000e+01 : f32
    %96 = vector.broadcast %cst_59 : f32 to vector<1x128xf32>
    %97 = arith.mulf %95, %96 : vector<1x128xf32>
    %c8 = arith.constant 8 : index
    %c0_60 = arith.constant 0 : index
    %98 = vector.load %arg5[%c8, %c0_60] : memref<20x128xf32, #tpu.memory_space<vmem>>, vector<1x128xf32>
    tpu.vector_store %arg5[%c8, %c0_60], %97 {strides = array<i32>} : memref<20x128xf32, #tpu.memory_space<vmem>>, vector<1x128xf32>,
    %99 = arith.mulf %93, %7 : vector<1x128xf32>
    %100 = arith.addf %1, %99 : vector<1x128xf32>
    %cst_61 = arith.constant 3.200000e+01 : f32
    %101 = vector.broadcast %cst_61 : f32 to vector<1x128xf32>
    %102 = arith.mulf %100, %101 : vector<1x128xf32>
    %c9 = arith.constant 9 : index
    %c0_62 = arith.constant 0 : index
    %103 = vector.load %arg5[%c9, %c0_62] : memref<20x128xf32, #tpu.memory_space<vmem>>, vector<1x128xf32>
    tpu.vector_store %arg5[%c9, %c0_62], %102 {strides = array<i32>} : memref<20x128xf32, #tpu.memory_space<vmem>>, vector<1x128xf32>,
    %c8_63 = arith.constant 8 : index
    %c0_64 = arith.constant 0 : index
    %104 = vector.load %arg1[%c8_63, %c0_64] : memref<32x128xf32, #tpu.memory_space<vmem>>, vector<1x128xf32>
    %c9_65 = arith.constant 9 : index
    %c0_66 = arith.constant 0 : index
    %105 = vector.load %arg1[%c9_65, %c0_66] : memref<32x128xf32, #tpu.memory_space<vmem>>, vector<1x128xf32>
    %106 = arith.maximumf %104, %105 : vector<1x128xf32>
    %107 = arith.subf %104, %106 : vector<1x128xf32>
    %108 = math.exp %107 : vector<1x128xf32>
    %109 = arith.subf %105, %106 : vector<1x128xf32>
    %110 = math.exp %109 : vector<1x128xf32>
    %111 = arith.addf %108, %110 : vector<1x128xf32>
    %112 = tpu.reciprocal %111 : vector<1x128xf32> -> vector<1x128xf32>
    %113 = arith.mulf %110, %112 : vector<1x128xf32>
    %c0_67 = arith.constant 0 : index
    %c0_68 = arith.constant 0 : index
    %114 = vector.load %arg4[%c0_67, %c0_68] : memref<2x128xf32, #tpu.memory_space<vmem>>, vector<1x128xf32>
    tpu.vector_store %arg4[%c0_67, %c0_68], %113 {strides = array<i32>} : memref<2x128xf32, #tpu.memory_space<vmem>>, vector<1x128xf32>,
    %c4_69 = arith.constant 4 : index
    %c0_70 = arith.constant 0 : index
    %115 = vector.load %arg2[%c4_69, %c0_70] : memref<8x128xf32, #tpu.memory_space<vmem>>, vector<1x128xf32>
    %c5_71 = arith.constant 5 : index
    %c0_72 = arith.constant 0 : index
    %116 = vector.load %arg2[%c5_71, %c0_72] : memref<8x128xf32, #tpu.memory_space<vmem>>, vector<1x128xf32>
    %c6_73 = arith.constant 6 : index
    %c0_74 = arith.constant 0 : index
    %117 = vector.load %arg2[%c6_73, %c0_74] : memref<8x128xf32, #tpu.memory_space<vmem>>, vector<1x128xf32>
    %c7_75 = arith.constant 7 : index
    %c0_76 = arith.constant 0 : index
    %118 = vector.load %arg2[%c7_75, %c0_76] : memref<8x128xf32, #tpu.memory_space<vmem>>, vector<1x128xf32>
    %cst_77 = arith.constant 1.000000e-01 : f32
    %119 = vector.broadcast %cst_77 : f32 to vector<1x128xf32>
    %120 = arith.mulf %119, %117 : vector<1x128xf32>
    %cst_78 = arith.constant 1.000000e-01 : f32
    %121 = vector.broadcast %cst_78 : f32 to vector<1x128xf32>
    %122 = arith.mulf %121, %118 : vector<1x128xf32>
    %c4_79 = arith.constant 4 : index
    %c0_80 = arith.constant 0 : index
    %123 = vector.load %arg1[%c4_79, %c0_80] : memref<32x128xf32, #tpu.memory_space<vmem>>, vector<1x128xf32>
    %124 = arith.mulf %123, %120 : vector<1x128xf32>
    %125 = arith.addf %115, %124 : vector<1x128xf32>
    %c5_81 = arith.constant 5 : index
    %c0_82 = arith.constant 0 : index
    %126 = vector.load %arg1[%c5_81, %c0_82] : memref<32x128xf32, #tpu.memory_space<vmem>>, vector<1x128xf32>
    %127 = arith.mulf %126, %122 : vector<1x128xf32>
    %128 = arith.addf %116, %127 : vector<1x128xf32>
    %c6_83 = arith.constant 6 : index
    %c0_84 = arith.constant 0 : index
    %129 = vector.load %arg1[%c6_83, %c0_84] : memref<32x128xf32, #tpu.memory_space<vmem>>, vector<1x128xf32>
    %cst_85 = arith.constant 2.000000e-01 : f32
    %130 = vector.broadcast %cst_85 : f32 to vector<1x128xf32>
    %131 = arith.mulf %129, %130 : vector<1x128xf32>
    %132 = math.exp %131 : vector<1x128xf32>
    %133 = arith.mulf %117, %132 : vector<1x128xf32>
    %c7_86 = arith.constant 7 : index
    %c0_87 = arith.constant 0 : index
    %134 = vector.load %arg1[%c7_86, %c0_87] : memref<32x128xf32, #tpu.memory_space<vmem>>, vector<1x128xf32>
    %cst_88 = arith.constant 2.000000e-01 : f32
    %135 = vector.broadcast %cst_88 : f32 to vector<1x128xf32>
    %136 = arith.mulf %134, %135 : vector<1x128xf32>
    %137 = math.exp %136 : vector<1x128xf32>
    %138 = arith.mulf %118, %137 : vector<1x128xf32>
    %cst_89 = arith.constant 5.000000e-01 : f32
    %139 = vector.broadcast %cst_89 : f32 to vector<1x128xf32>
    %140 = arith.mulf %139, %133 : vector<1x128xf32>
    %141 = arith.subf %125, %140 : vector<1x128xf32>
    %cst_90 = arith.constant 5.000000e-01 : f32
    %142 = vector.broadcast %cst_90 : f32 to vector<1x128xf32>
    %143 = arith.mulf %142, %138 : vector<1x128xf32>
    %144 = arith.subf %128, %143 : vector<1x128xf32>
    %cst_91 = arith.constant 3.200000e+01 : f32
    %145 = vector.broadcast %cst_91 : f32 to vector<1x128xf32>
    %146 = arith.mulf %141, %145 : vector<1x128xf32>
    %c4_92 = arith.constant 4 : index
    %c0_93 = arith.constant 0 : index
    %147 = vector.load %arg3[%c4_92, %c0_93] : memref<8x128xf32, #tpu.memory_space<vmem>>, vector<1x128xf32>
    tpu.vector_store %arg3[%c4_92, %c0_93], %146 {strides = array<i32>} : memref<8x128xf32, #tpu.memory_space<vmem>>, vector<1x128xf32>,
    %cst_94 = arith.constant 3.200000e+01 : f32
    %148 = vector.broadcast %cst_94 : f32 to vector<1x128xf32>
    %149 = arith.mulf %144, %148 : vector<1x128xf32>
    %c5_95 = arith.constant 5 : index
    %c0_96 = arith.constant 0 : index
    %150 = vector.load %arg3[%c5_95, %c0_96] : memref<8x128xf32, #tpu.memory_space<vmem>>, vector<1x128xf32>
    tpu.vector_store %arg3[%c5_95, %c0_96], %149 {strides = array<i32>} : memref<8x128xf32, #tpu.memory_space<vmem>>, vector<1x128xf32>,
    %151 = arith.addf %141, %133 : vector<1x128xf32>
    %cst_97 = arith.constant 3.200000e+01 : f32
    %152 = vector.broadcast %cst_97 : f32 to vector<1x128xf32>
    %153 = arith.mulf %151, %152 : vector<1x128xf32>
    %c6_98 = arith.constant 6 : index
    %c0_99 = arith.constant 0 : index
    %154 = vector.load %arg3[%c6_98, %c0_99] : memref<8x128xf32, #tpu.memory_space<vmem>>, vector<1x128xf32>
    tpu.vector_store %arg3[%c6_98, %c0_99], %153 {strides = array<i32>} : memref<8x128xf32, #tpu.memory_space<vmem>>, vector<1x128xf32>,
    %155 = arith.addf %144, %138 : vector<1x128xf32>
    %cst_100 = arith.constant 3.200000e+01 : f32
    %156 = vector.broadcast %cst_100 : f32 to vector<1x128xf32>
    %157 = arith.mulf %155, %156 : vector<1x128xf32>
    %c7_101 = arith.constant 7 : index
    %c0_102 = arith.constant 0 : index
    %158 = vector.load %arg3[%c7_101, %c0_102] : memref<8x128xf32, #tpu.memory_space<vmem>>, vector<1x128xf32>
    tpu.vector_store %arg3[%c7_101, %c0_102], %157 {strides = array<i32>} : memref<8x128xf32, #tpu.memory_space<vmem>>, vector<1x128xf32>,
    %c22 = arith.constant 22 : index
    %c0_103 = arith.constant 0 : index
    %159 = vector.load %arg1[%c22, %c0_103] : memref<32x128xf32, #tpu.memory_space<vmem>>, vector<1x128xf32>
    %c23 = arith.constant 23 : index
    %c0_104 = arith.constant 0 : index
    %160 = vector.load %arg1[%c23, %c0_104] : memref<32x128xf32, #tpu.memory_space<vmem>>, vector<1x128xf32>
    %161 = arith.mulf %159, %120 : vector<1x128xf32>
    %162 = arith.addf %115, %161 : vector<1x128xf32>
    %cst_105 = arith.constant 3.200000e+01 : f32
    %163 = vector.broadcast %cst_105 : f32 to vector<1x128xf32>
    %164 = arith.mulf %162, %163 : vector<1x128xf32>
    %c10 = arith.constant 10 : index
    %c0_106 = arith.constant 0 : index
    %165 = vector.load %arg5[%c10, %c0_106] : memref<20x128xf32, #tpu.memory_space<vmem>>, vector<1x128xf32>
    tpu.vector_store %arg5[%c10, %c0_106], %164 {strides = array<i32>} : memref<20x128xf32, #tpu.memory_space<vmem>>, vector<1x128xf32>,
    %166 = arith.mulf %160, %122 : vector<1x128xf32>
    %167 = arith.addf %116, %166 : vector<1x128xf32>
    %cst_107 = arith.constant 3.200000e+01 : f32
    %168 = vector.broadcast %cst_107 : f32 to vector<1x128xf32>
    %169 = arith.mulf %167, %168 : vector<1x128xf32>
    %c11 = arith.constant 11 : index
    %c0_108 = arith.constant 0 : index
    %170 = vector.load %arg5[%c11, %c0_108] : memref<20x128xf32, #tpu.memory_space<vmem>>, vector<1x128xf32>
    tpu.vector_store %arg5[%c11, %c0_108], %169 {strides = array<i32>} : memref<20x128xf32, #tpu.memory_space<vmem>>, vector<1x128xf32>,
    %c24 = arith.constant 24 : index
    %c0_109 = arith.constant 0 : index
    %171 = vector.load %arg1[%c24, %c0_109] : memref<32x128xf32, #tpu.memory_space<vmem>>, vector<1x128xf32>
    %c25 = arith.constant 25 : index
    %c0_110 = arith.constant 0 : index
    %172 = vector.load %arg1[%c25, %c0_110] : memref<32x128xf32, #tpu.memory_space<vmem>>, vector<1x128xf32>
    %173 = arith.mulf %171, %120 : vector<1x128xf32>
    %174 = arith.addf %115, %173 : vector<1x128xf32>
    %cst_111 = arith.constant 3.200000e+01 : f32
    %175 = vector.broadcast %cst_111 : f32 to vector<1x128xf32>
    %176 = arith.mulf %174, %175 : vector<1x128xf32>
    %c12_112 = arith.constant 12 : index
    %c0_113 = arith.constant 0 : index
    %177 = vector.load %arg5[%c12_112, %c0_113] : memref<20x128xf32, #tpu.memory_space<vmem>>, vector<1x128xf32>
    tpu.vector_store %arg5[%c12_112, %c0_113], %176 {strides = array<i32>} : memref<20x128xf32, #tpu.memory_space<vmem>>, vector<1x128xf32>,
    %178 = arith.mulf %172, %122 : vector<1x128xf32>
    %179 = arith.addf %116, %178 : vector<1x128xf32>
    %cst_114 = arith.constant 3.200000e+01 : f32
    %180 = vector.broadcast %cst_114 : f32 to vector<1x128xf32>
    %181 = arith.mulf %179, %180 : vector<1x128xf32>
    %c13_115 = arith.constant 13 : index
    %c0_116 = arith.constant 0 : index
    %182 = vector.load %arg5[%c13_115, %c0_116] : memref<20x128xf32, #tpu.memory_space<vmem>>, vector<1x128xf32>
    tpu.vector_store %arg5[%c13_115, %c0_116], %181 {strides = array<i32>} : memref<20x128xf32, #tpu.memory_space<vmem>>, vector<1x128xf32>,
    %c26 = arith.constant 26 : index
    %c0_117 = arith.constant 0 : index
    %183 = vector.load %arg1[%c26, %c0_117] : memref<32x128xf32, #tpu.memory_space<vmem>>, vector<1x128xf32>
    %c27 = arith.constant 27 : index
    %c0_118 = arith.constant 0 : index
    %184 = vector.load %arg1[%c27, %c0_118] : memref<32x128xf32, #tpu.memory_space<vmem>>, vector<1x128xf32>
    %185 = arith.mulf %183, %120 : vector<1x128xf32>
    %186 = arith.addf %115, %185 : vector<1x128xf32>
    %cst_119 = arith.constant 3.200000e+01 : f32
    %187 = vector.broadcast %cst_119 : f32 to vector<1x128xf32>
    %188 = arith.mulf %186, %187 : vector<1x128xf32>
    %c14_120 = arith.constant 14 : index
    %c0_121 = arith.constant 0 : index
    %189 = vector.load %arg5[%c14_120, %c0_121] : memref<20x128xf32, #tpu.memory_space<vmem>>, vector<1x128xf32>
    tpu.vector_store %arg5[%c14_120, %c0_121], %188 {strides = array<i32>} : memref<20x128xf32, #tpu.memory_space<vmem>>, vector<1x128xf32>,
    %190 = arith.mulf %184, %122 : vector<1x128xf32>
    %191 = arith.addf %116, %190 : vector<1x128xf32>
    %cst_122 = arith.constant 3.200000e+01 : f32
    %192 = vector.broadcast %cst_122 : f32 to vector<1x128xf32>
    %193 = arith.mulf %191, %192 : vector<1x128xf32>
    %c15_123 = arith.constant 15 : index
    %c0_124 = arith.constant 0 : index
    %194 = vector.load %arg5[%c15_123, %c0_124] : memref<20x128xf32, #tpu.memory_space<vmem>>, vector<1x128xf32>
    tpu.vector_store %arg5[%c15_123, %c0_124], %193 {strides = array<i32>} : memref<20x128xf32, #tpu.memory_space<vmem>>, vector<1x128xf32>,
    %c28 = arith.constant 28 : index
    %c0_125 = arith.constant 0 : index
    %195 = vector.load %arg1[%c28, %c0_125] : memref<32x128xf32, #tpu.memory_space<vmem>>, vector<1x128xf32>
    %c29 = arith.constant 29 : index
    %c0_126 = arith.constant 0 : index
    %196 = vector.load %arg1[%c29, %c0_126] : memref<32x128xf32, #tpu.memory_space<vmem>>, vector<1x128xf32>
    %197 = arith.mulf %195, %120 : vector<1x128xf32>
    %198 = arith.addf %115, %197 : vector<1x128xf32>
    %cst_127 = arith.constant 3.200000e+01 : f32
    %199 = vector.broadcast %cst_127 : f32 to vector<1x128xf32>
    %200 = arith.mulf %198, %199 : vector<1x128xf32>
    %c16_128 = arith.constant 16 : index
    %c0_129 = arith.constant 0 : index
    %201 = vector.load %arg5[%c16_128, %c0_129] : memref<20x128xf32, #tpu.memory_space<vmem>>, vector<1x128xf32>
    tpu.vector_store %arg5[%c16_128, %c0_129], %200 {strides = array<i32>} : memref<20x128xf32, #tpu.memory_space<vmem>>, vector<1x128xf32>,
    %202 = arith.mulf %196, %122 : vector<1x128xf32>
    %203 = arith.addf %116, %202 : vector<1x128xf32>
    %cst_130 = arith.constant 3.200000e+01 : f32
    %204 = vector.broadcast %cst_130 : f32 to vector<1x128xf32>
    %205 = arith.mulf %203, %204 : vector<1x128xf32>
    %c17_131 = arith.constant 17 : index
    %c0_132 = arith.constant 0 : index
    %206 = vector.load %arg5[%c17_131, %c0_132] : memref<20x128xf32, #tpu.memory_space<vmem>>, vector<1x128xf32>
    tpu.vector_store %arg5[%c17_131, %c0_132], %205 {strides = array<i32>} : memref<20x128xf32, #tpu.memory_space<vmem>>, vector<1x128xf32>,
    %c30 = arith.constant 30 : index
    %c0_133 = arith.constant 0 : index
    %207 = vector.load %arg1[%c30, %c0_133] : memref<32x128xf32, #tpu.memory_space<vmem>>, vector<1x128xf32>
    %c31 = arith.constant 31 : index
    %c0_134 = arith.constant 0 : index
    %208 = vector.load %arg1[%c31, %c0_134] : memref<32x128xf32, #tpu.memory_space<vmem>>, vector<1x128xf32>
    %209 = arith.mulf %207, %120 : vector<1x128xf32>
    %210 = arith.addf %115, %209 : vector<1x128xf32>
    %cst_135 = arith.constant 3.200000e+01 : f32
    %211 = vector.broadcast %cst_135 : f32 to vector<1x128xf32>
    %212 = arith.mulf %210, %211 : vector<1x128xf32>
    %c18_136 = arith.constant 18 : index
    %c0_137 = arith.constant 0 : index
    %213 = vector.load %arg5[%c18_136, %c0_137] : memref<20x128xf32, #tpu.memory_space<vmem>>, vector<1x128xf32>
    tpu.vector_store %arg5[%c18_136, %c0_137], %212 {strides = array<i32>} : memref<20x128xf32, #tpu.memory_space<vmem>>, vector<1x128xf32>,
    %214 = arith.mulf %208, %122 : vector<1x128xf32>
    %215 = arith.addf %116, %214 : vector<1x128xf32>
    %cst_138 = arith.constant 3.200000e+01 : f32
    %216 = vector.broadcast %cst_138 : f32 to vector<1x128xf32>
    %217 = arith.mulf %215, %216 : vector<1x128xf32>
    %c19_139 = arith.constant 19 : index
    %c0_140 = arith.constant 0 : index
    %218 = vector.load %arg5[%c19_139, %c0_140] : memref<20x128xf32, #tpu.memory_space<vmem>>, vector<1x128xf32>
    tpu.vector_store %arg5[%c19_139, %c0_140], %217 {strides = array<i32>} : memref<20x128xf32, #tpu.memory_space<vmem>>, vector<1x128xf32>,
    %c10_141 = arith.constant 10 : index
    %c0_142 = arith.constant 0 : index
    %219 = vector.load %arg1[%c10_141, %c0_142] : memref<32x128xf32, #tpu.memory_space<vmem>>, vector<1x128xf32>
    %c11_143 = arith.constant 11 : index
    %c0_144 = arith.constant 0 : index
    %220 = vector.load %arg1[%c11_143, %c0_144] : memref<32x128xf32, #tpu.memory_space<vmem>>, vector<1x128xf32>
    %221 = arith.maximumf %219, %220 : vector<1x128xf32>
    %222 = arith.subf %219, %221 : vector<1x128xf32>
    %223 = math.exp %222 : vector<1x128xf32>
    %224 = arith.subf %220, %221 : vector<1x128xf32>
    %225 = math.exp %224 : vector<1x128xf32>
    %226 = arith.addf %223, %225 : vector<1x128xf32>
    %227 = tpu.reciprocal %226 : vector<1x128xf32> -> vector<1x128xf32>
    %228 = arith.mulf %225, %227 : vector<1x128xf32>
    %c1_145 = arith.constant 1 : index
    %c0_146 = arith.constant 0 : index
    %229 = vector.load %arg4[%c1_145, %c0_146] : memref<2x128xf32, #tpu.memory_space<vmem>>, vector<1x128xf32>
    tpu.vector_store %arg4[%c1_145, %c0_146], %228 {strides = array<i32>} : memref<2x128xf32, #tpu.memory_space<vmem>>, vector<1x128xf32>,
    return
  }
  func.func @transform_0(%arg0: i32) -> (i32, i32) {
    %c0_i32 = arith.constant 0 : i32
    %c0_i32_0 = arith.constant 0 : i32
    return %c0_i32, %arg0 : i32, i32
  }
  func.func @transform_1(%arg0: i32) -> (i32, i32) {
    %c0_i32 = arith.constant 0 : i32
    %c0_i32_0 = arith.constant 0 : i32
    return %c0_i32, %arg0 : i32, i32
  }
  func.func @transform_2(%arg0: i32) -> (i32, i32) {
    %c0_i32 = arith.constant 0 : i32
    %c0_i32_0 = arith.constant 0 : i32
    return %c0_i32, %arg0 : i32, i32
  }
  func.func @transform_3(%arg0: i32) -> (i32, i32) {
    %c0_i32 = arith.constant 0 : i32
    %c0_i32_0 = arith.constant 0 : i32
    return %c0_i32, %arg0 : i32, i32
  }
  func.func @transform_4(%arg0: i32) -> (i32, i32) {
    %c0_i32 = arith.constant 0 : i32
    %c0_i32_0 = arith.constant 0 : i32
    return %c0_i32, %arg0 : i32, i32
  }
}

</mosaic_0001>

<llo_original>
// kernel: reverse
$region0: #{reverse}
  #allocation0 [shape = 's32[1]{0}', space=sflag, size = 0x4, scoped, tag = 'scoped memory for reverse']
  %s0 = inlined_call_operand.vmem [shape: bf16[3,3,48,64], index: 0, kind: input, shape index: {}]
  %s1 = inlined_call_operand.vmem [shape: bf16[3,3,48,64], index: 1, kind: output, shape index: {}]
  %s2 = scalar_lea.vmem %s0, 192
  %v3 = vld [vmem:[%s2] sm:$0xf]
  %v4 = vunpack.c.l.bf16 %v3
  %v5 = vunpack.c.h.bf16 %v3
  %v6 = vpack.c.bf16 0.0, %v4
  %7 = vst [vmem:[%s1] sm:$0xf] %v6
  %s8 = scalar_lea.vmem %s0, 120
  %v9 = vld [vmem:[%s8] sm:$0xf]
  %v10 = vunpack.c.l.bf16 %v9
  %v11 = vunpack.c.h.bf16 %v9
  %s12 = scalar_lea.vmem %s1, 72
  %v13 = vpack.c.bf16 0.0, %v10
  %14 = vst [vmem:[%s12] sm:$0xf] %v13
  %s15 = scalar_lea.vmem %s0, 48
  %v16 = vld [vmem:[%s15] sm:$0xf]
  %v17 = vunpack.c.l.bf16 %v16
  %v18 = vunpack.c.h.bf16 %v16
  %s19 = scalar_lea.vmem %s1, 144
  %v20 = vpack.c.bf16 0.0, %v17
  %21 = vst [vmem:[%s19] sm:$0xf] %v20
  %s22 = scalar_lea.vmem %s0, 168
  %v23 = vld [vmem:[%s22] sm:$0xf]
  %v24 = vunpack.c.l.bf16 %v23
  %v25 = vunpack.c.h.bf16 %v23
  %s26 = scalar_lea.vmem %s1, 24
  %v27 = vpack.c.bf16 0.0, %v24
  %28 = vst [vmem:[%s26] sm:$0xf] %v27
  %s29 = scalar_lea.vmem %s0, 96
  %v30 = vld [vmem:[%s29] sm:$0xf]
  %v31 = vunpack.c.l.bf16 %v30
  %v32 = vunpack.c.h.bf16 %v30
  %s33 = scalar_lea.vmem %s1, 96
  %v34 = vpack.c.bf16 0.0, %v31
  %35 = vst [vmem:[%s33] sm:$0xf] %v34
  %s36 = scalar_lea.vmem %s0, 24
  %v37 = vld [vmem:[%s36] sm:$0xf]
  %v38 = vunpack.c.l.bf16 %v37
  %v39 = vunpack.c.h.bf16 %v37
  %s40 = scalar_lea.vmem %s1, 168
  %v41 = vpack.c.bf16 0.0, %v38
  %42 = vst [vmem:[%s40] sm:$0xf] %v41
  %s43 = scalar_lea.vmem %s0, 144
  %v44 = vld [vmem:[%s43] sm:$0xf]
  %v45 = vunpack.c.l.bf16 %v44
  %v46 = vunpack.c.h.bf16 %v44
  %s47 = scalar_lea.vmem %s1, 48
  %v48 = vpack.c.bf16 0.0, %v45
  %49 = vst [vmem:[%s47] sm:$0xf] %v48
  %s50 = scalar_lea.vmem %s0, 72
  %v51 = vld [vmem:[%s50] sm:$0xf]
  %v52 = vunpack.c.l.bf16 %v51
  %v53 = vunpack.c.h.bf16 %v51
  %s54 = scalar_lea.vmem %s1, 120
  %v55 = vpack.c.bf16 0.0, %v52
  %56 = vst [vmem:[%s54] sm:$0xf] %v55
  %v57 = vld [vmem:[%s0] sm:$0xf]
  %v58 = vunpack.c.l.bf16 %v57
  %v59 = vunpack.c.h.bf16 %v57
  %s60 = scalar_lea.vmem %s1, 192
  %v61 = vpack.c.bf16 0.0, %v58
  %62 = vst [vmem:[%s60] sm:$0xf] %v61
  %s63 = scalar_lea.vmem %s0, 196
  %v64 = vld [vmem:[%s63] sm:$0xf]
  %v65 = vunpack.c.l.bf16 %v64
  %v66 = vunpack.c.h.bf16 %v64
  %s67 = scalar_lea.vmem %s1, 4
  %v68 = vpack.c.bf16 0.0, %v65
  %69 = vst [vmem:[%s67] sm:$0xf] %v68
  %s70 = scalar_lea.vmem %s0, 124
  %v71 = vld [vmem:[%s70] sm:$0xf]
  %v72 = vunpack.c.l.bf16 %v71
  %v73 = vunpack.c.h.bf16 %v71
  %s74 = scalar_lea.vmem %s1, 76
  %v75 = vpack.c.bf16 0.0, %v72
  %76 = vst [vmem:[%s74] sm:$0xf] %v75
  %s77 = scalar_lea.vmem %s0, 52
  %v78 = vld [vmem:[%s77] sm:$0xf]
  %v79 = vunpack.c.l.bf16 %v78
  %v80 = vunpack.c.h.bf16 %v78
  %s81 = scalar_lea.vmem %s1, 148
  %v82 = vpack.c.bf16 0.0, %v79
  %83 = vst [vmem:[%s81] sm:$0xf] %v82
  %s84 = scalar_lea.vmem %s0, 172
  %v85 = vld [vmem:[%s84] sm:$0xf]
  %v86 = vunpack.c.l.bf16 %v85
  %v87 = vunpack.c.h.bf16 %v85
  %s88 = scalar_lea.vmem %s1, 28
  %v89 = vpack.c.bf16 0.0, %v86
  %90 = vst [vmem:[%s88] sm:$0xf] %v89
  %s91 = scalar_lea.vmem %s0, 100
  %v92 = vld [vmem:[%s91] sm:$0xf]
  %v93 = vunpack.c.l.bf16 %v92
  %v94 = vunpack.c.h.bf16 %v92
  %s95 = scalar_lea.vmem %s1, 100
  %v96 = vpack.c.bf16 0.0, %v93
  %97 = vst [vmem:[%s95] sm:$0xf] %v96
  %s98 = scalar_lea.vmem %s0, 28
  %v99 = vld [vmem:[%s98] sm:$0xf]
  %v100 = vunpack.c.l.bf16 %v99
  %v101 = vunpack.c.h.bf16 %v99
  %s102 = scalar_lea.vmem %s1, 172
  %v103 = vpack.c.bf16 0.0, %v100
  %104 = vst [vmem:[%s102] sm:$0xf] %v103
  %s105 = scalar_lea.vmem %s0, 148
  %v106 = vld [vmem:[%s105] sm:$0xf]
  %v107 = vunpack.c.l.bf16 %v106
  %v108 = vunpack.c.h.bf16 %v106
  %s109 = scalar_lea.vmem %s1, 52
  %v110 = vpack.c.bf16 0.0, %v107
  %111 = vst [vmem:[%s109] sm:$0xf] %v110
  %s112 = scalar_lea.vmem %s0, 76
  %v113 = vld [vmem:[%s112] sm:$0xf]
  %v114 = vunpack.c.l.bf16 %v113
  %v115 = vunpack.c.h.bf16 %v113
  %s116 = scalar_lea.vmem %s1, 124
  %v117 = vpack.c.bf16 0.0, %v114
  %118 = vst [vmem:[%s116] sm:$0xf] %v117
  %s119 = scalar_lea.vmem %s0, 4
  %v120 = vld [vmem:[%s119] sm:$0xf]
  %v121 = vunpack.c.l.bf16 %v120
  %v122 = vunpack.c.h.bf16 %v120
  %s123 = scalar_lea.vmem %s1, 196
  %v124 = vpack.c.bf16 0.0, %v121
  %125 = vst [vmem:[%s123] sm:$0xf] %v124
  %s126 = scalar_lea.vmem %s0, 200
  %v127 = vld [vmem:[%s126] sm:$0xf]
  %v128 = vunpack.c.l.bf16 %v127
  %v129 = vunpack.c.h.bf16 %v127
  %s130 = scalar_lea.vmem %s1, 8
  %v131 = vpack.c.bf16 0.0, %v128
  %132 = vst [vmem:[%s130] sm:$0xf] %v131
  %s133 = scalar_lea.vmem %s0, 128
  %v134 = vld [vmem:[%s133] sm:$0xf]
  %v135 = vunpack.c.l.bf16 %v134
  %v136 = vunpack.c.h.bf16 %v134
  %s137 = scalar_lea.vmem %s1, 80
  %v138 = vpack.c.bf16 0.0, %v135
  %139 = vst [vmem:[%s137] sm:$0xf] %v138
  %s140 = scalar_lea.vmem %s0, 56
  %v141 = vld [vmem:[%s140] sm:$0xf]
  %v142 = vunpack.c.l.bf16 %v141
  %v143 = vunpack.c.h.bf16 %v141
  %s144 = scalar_lea.vmem %s1, 152
  %v145 = vpack.c.bf16 0.0, %v142
  %146 = vst [vmem:[%s144] sm:$0xf] %v145
  %s147 = scalar_lea.vmem %s0, 176
  %v148 = vld [vmem:[%s147] sm:$0xf]
  %v149 = vunpack.c.l.bf16 %v148
  %v150 = vunpack.c.h.bf16 %v148
  %s151 = scalar_lea.vmem %s1, 32
  %v152 = vpack.c.bf16 0.0, %v149
  %153 = vst [vmem:[%s151] sm:$0xf] %v152
  %s154 = scalar_lea.vmem %s0, 104
  %v155 = vld [vmem:[%s154] sm:$0xf]
  %v156 = vunpack.c.l.bf16 %v155
  %v157 = vunpack.c.h.bf16 %v155
  %s158 = scalar_lea.vmem %s1, 104
  %v159 = vpack.c.bf16 0.0, %v156
  %160 = vst [vmem:[%s158] sm:$0xf] %v159
  %s161 = scalar_lea.vmem %s0, 32
  %v162 = vld [vmem:[%s161] sm:$0xf]
  %v163 = vunpack.c.l.bf16 %v162
  %v164 = vunpack.c.h.bf16 %v162
  %s165 = scalar_lea.vmem %s1, 176
  %v166 = vpack.c.bf16 0.0, %v163
  %167 = vst [vmem:[%s165] sm:$0xf] %v166
  %s168 = scalar_lea.vmem %s0, 152
  %v169 = vld [vmem:[%s168] sm:$0xf]
  %v170 = vunpack.c.l.bf16 %v169
  %v171 = vunpack.c.h.bf16 %v169
  %s172 = scalar_lea.vmem %s1, 56
  %v173 = vpack.c.bf16 0.0, %v170
  %174 = vst [vmem:[%s172] sm:$0xf] %v173
  %s175 = scalar_lea.vmem %s0, 80
  %v176 = vld [vmem:[%s175] sm:$0xf]
  %v177 = vunpack.c.l.bf16 %v176
  %v178 = vunpack.c.h.bf16 %v176
  %s179 = scalar_lea.vmem %s1, 128
  %v180 = vpack.c.bf16 0.0, %v177
  %181 = vst [vmem:[%s179] sm:$0xf] %v180
  %s182 = scalar_lea.vmem %s0, 8
  %v183 = vld [vmem:[%s182] sm:$0xf]
  %v184 = vunpack.c.l.bf16 %v183
  %v185 = vunpack.c.h.bf16 %v183
  %s186 = scalar_lea.vmem %s1, 200
  %v187 = vpack.c.bf16 0.0, %v184
  %188 = vst [vmem:[%s186] sm:$0xf] %v187
  %s189 = scalar_lea.vmem %s0, 204
  %v190 = vld [vmem:[%s189] sm:$0xf]
  %v191 = vunpack.c.l.bf16 %v190
  %v192 = vunpack.c.h.bf16 %v190
  %s193 = scalar_lea.vmem %s1, 12
  %v194 = vpack.c.bf16 0.0, %v191
  %195 = vst [vmem:[%s193] sm:$0xf] %v194
  %s196 = scalar_lea.vmem %s0, 132
  %v197 = vld [vmem:[%s196] sm:$0xf]
  %v198 = vunpack.c.l.bf16 %v197
  %v199 = vunpack.c.h.bf16 %v197
  %s200 = scalar_lea.vmem %s1, 84
  %v201 = vpack.c.bf16 0.0, %v198
  %202 = vst [vmem:[%s200] sm:$0xf] %v201
  %s203 = scalar_lea.vmem %s0, 60
  %v204 = vld [vmem:[%s203] sm:$0xf]
  %v205 = vunpack.c.l.bf16 %v204
  %v206 = vunpack.c.h.bf16 %v204
  %s207 = scalar_lea.vmem %s1, 156
  %v208 = vpack.c.bf16 0.0, %v205
  %209 = vst [vmem:[%s207] sm:$0xf] %v208
  %s210 = scalar_lea.vmem %s0, 180
  %v211 = vld [vmem:[%s210] sm:$0xf]
  %v212 = vunpack.c.l.bf16 %v211
  %v213 = vunpack.c.h.bf16 %v211
  %s214 = scalar_lea.vmem %s1, 36
  %v215 = vpack.c.bf16 0.0, %v212
  %216 = vst [vmem:[%s214] sm:$0xf] %v215
  %s217 = scalar_lea.vmem %s0, 108
  %v218 = vld [vmem:[%s217] sm:$0xf]
  %v219 = vunpack.c.l.bf16 %v218
  %v220 = vunpack.c.h.bf16 %v218
  %s221 = scalar_lea.vmem %s1, 108
  %v222 = vpack.c.bf16 0.0, %v219
  %223 = vst [vmem:[%s221] sm:$0xf] %v222
  %s224 = scalar_lea.vmem %s0, 36
  %v225 = vld [vmem:[%s224] sm:$0xf]
  %v226 = vunpack.c.l.bf16 %v225
  %v227 = vunpack.c.h.bf16 %v225
  %s228 = scalar_lea.vmem %s1, 180
  %v229 = vpack.c.bf16 0.0, %v226
  %230 = vst [vmem:[%s228] sm:$0xf] %v229
  %s231 = scalar_lea.vmem %s0, 156
  %v232 = vld [vmem:[%s231] sm:$0xf]
  %v233 = vunpack.c.l.bf16 %v232
  %v234 = vunpack.c.h.bf16 %v232
  %s235 = scalar_lea.vmem %s1, 60
  %v236 = vpack.c.bf16 0.0, %v233
  %237 = vst [vmem:[%s235] sm:$0xf] %v236
  %s238 = scalar_lea.vmem %s0, 84
  %v239 = vld [vmem:[%s238] sm:$0xf]
  %v240 = vunpack.c.l.bf16 %v239
  %v241 = vunpack.c.h.bf16 %v239
  %s242 = scalar_lea.vmem %s1, 132
  %v243 = vpack.c.bf16 0.0, %v240
  %244 = vst [vmem:[%s242] sm:$0xf] %v243
  %s245 = scalar_lea.vmem %s0, 12
  %v246 = vld [vmem:[%s245] sm:$0xf]
  %v247 = vunpack.c.l.bf16 %v246
  %v248 = vunpack.c.h.bf16 %v246
  %s249 = scalar_lea.vmem %s1, 204
  %v250 = vpack.c.bf16 0.0, %v247
  %251 = vst [vmem:[%s249] sm:$0xf] %v250
  %s252 = scalar_lea.vmem %s0, 208
  %v253 = vld [vmem:[%s252] sm:$0xf]
  %v254 = vunpack.c.l.bf16 %v253
  %v255 = vunpack.c.h.bf16 %v253
  %s256 = scalar_lea.vmem %s1, 16
  %v257 = vpack.c.bf16 0.0, %v254
  %258 = vst [vmem:[%s256] sm:$0xf] %v257
  %s259 = scalar_lea.vmem %s0, 136
  %v260 = vld [vmem:[%s259] sm:$0xf]
  %v261 = vunpack.c.l.bf16 %v260
  %v262 = vunpack.c.h.bf16 %v260
  %s263 = scalar_lea.vmem %s1, 88
  %v264 = vpack.c.bf16 0.0, %v261
  %265 = vst [vmem:[%s263] sm:$0xf] %v264
  %s266 = scalar_lea.vmem %s0, 64
  %v267 = vld [vmem:[%s266] sm:$0xf]
  %v268 = vunpack.c.l.bf16 %v267
  %v269 = vunpack.c.h.bf16 %v267
  %s270 = scalar_lea.vmem %s1, 160
  %v271 = vpack.c.bf16 0.0, %v268
  %272 = vst [vmem:[%s270] sm:$0xf] %v271
  %s273 = scalar_lea.vmem %s0, 184
  %v274 = vld [vmem:[%s273] sm:$0xf]
  %v275 = vunpack.c.l.bf16 %v274
  %v276 = vunpack.c.h.bf16 %v274
  %s277 = scalar_lea.vmem %s1, 40
  %v278 = vpack.c.bf16 0.0, %v275
  %279 = vst [vmem:[%s277] sm:$0xf] %v278
  %s280 = scalar_lea.vmem %s0, 112
  %v281 = vld [vmem:[%s280] sm:$0xf]
  %v282 = vunpack.c.l.bf16 %v281
  %v283 = vunpack.c.h.bf16 %v281
  %s284 = scalar_lea.vmem %s1, 112
  %v285 = vpack.c.bf16 0.0, %v282
  %286 = vst [vmem:[%s284] sm:$0xf] %v285
  %s287 = scalar_lea.vmem %s0, 40
  %v288 = vld [vmem:[%s287] sm:$0xf]
  %v289 = vunpack.c.l.bf16 %v288
  %v290 = vunpack.c.h.bf16 %v288
  %s291 = scalar_lea.vmem %s1, 184
  %v292 = vpack.c.bf16 0.0, %v289
  %293 = vst [vmem:[%s291] sm:$0xf] %v292
  %s294 = scalar_lea.vmem %s0, 160
  %v295 = vld [vmem:[%s294] sm:$0xf]
  %v296 = vunpack.c.l.bf16 %v295
  %v297 = vunpack.c.h.bf16 %v295
  %s298 = scalar_lea.vmem %s1, 64
  %v299 = vpack.c.bf16 0.0, %v296
  %300 = vst [vmem:[%s298] sm:$0xf] %v299
  %s301 = scalar_lea.vmem %s0, 88
  %v302 = vld [vmem:[%s301] sm:$0xf]
  %v303 = vunpack.c.l.bf16 %v302
  %v304 = vunpack.c.h.bf16 %v302
  %s305 = scalar_lea.vmem %s1, 136
  %v306 = vpack.c.bf16 0.0, %v303
  %307 = vst [vmem:[%s305] sm:$0xf] %v306
  %s308 = scalar_lea.vmem %s0, 16
  %v309 = vld [vmem:[%s308] sm:$0xf]
  %v310 = vunpack.c.l.bf16 %v309
  %v311 = vunpack.c.h.bf16 %v309
  %s312 = scalar_lea.vmem %s1, 208
  %v313 = vpack.c.bf16 0.0, %v310
  %314 = vst [vmem:[%s312] sm:$0xf] %v313
  %s315 = scalar_lea.vmem %s0, 212
  %v316 = vld [vmem:[%s315] sm:$0xf]
  %v317 = vunpack.c.l.bf16 %v316
  %v318 = vunpack.c.h.bf16 %v316
  %s319 = scalar_lea.vmem %s1, 20
  %v320 = vpack.c.bf16 0.0, %v317
  %321 = vst [vmem:[%s319] sm:$0xf] %v320
  %s322 = scalar_lea.vmem %s0, 140
  %v323 = vld [vmem:[%s322] sm:$0xf]
  %v324 = vunpack.c.l.bf16 %v323
  %v325 = vunpack.c.h.bf16 %v323
  %s326 = scalar_lea.vmem %s1, 92
  %v327 = vpack.c.bf16 0.0, %v324
  %328 = vst [vmem:[%s326] sm:$0xf] %v327
  %s329 = scalar_lea.vmem %s0, 68
  %v330 = vld [vmem:[%s329] sm:$0xf]
  %v331 = vunpack.c.l.bf16 %v330
  %v332 = vunpack.c.h.bf16 %v330
  %s333 = scalar_lea.vmem %s1, 164
  %v334 = vpack.c.bf16 0.0, %v331
  %335 = vst [vmem:[%s333] sm:$0xf] %v334
  %s336 = scalar_lea.vmem %s0, 188
  %v337 = vld [vmem:[%s336] sm:$0xf]
  %v338 = vunpack.c.l.bf16 %v337
  %v339 = vunpack.c.h.bf16 %v337
  %s340 = scalar_lea.vmem %s1, 44
  %v341 = vpack.c.bf16 0.0, %v338
  %342 = vst [vmem:[%s340] sm:$0xf] %v341
  %s343 = scalar_lea.vmem %s0, 116
  %v344 = vld [vmem:[%s343] sm:$0xf]
  %v345 = vunpack.c.l.bf16 %v344
  %v346 = vunpack.c.h.bf16 %v344
  %s347 = scalar_lea.vmem %s1, 116
  %v348 = vpack.c.bf16 0.0, %v345
  %349 = vst [vmem:[%s347] sm:$0xf] %v348
  %s350 = scalar_lea.vmem %s0, 44
  %v351 = vld [vmem:[%s350] sm:$0xf]
  %v352 = vunpack.c.l.bf16 %v351
  %v353 = vunpack.c.h.bf16 %v351
  %s354 = scalar_lea.vmem %s1, 188
  %v355 = vpack.c.bf16 0.0, %v352
  %356 = vst [vmem:[%s354] sm:$0xf] %v355
  %s357 = scalar_lea.vmem %s0, 164
  %v358 = vld [vmem:[%s357] sm:$0xf]
  %v359 = vunpack.c.l.bf16 %v358
  %v360 = vunpack.c.h.bf16 %v358
  %s361 = scalar_lea.vmem %s1, 68
  %v362 = vpack.c.bf16 0.0, %v359
  %363 = vst [vmem:[%s361] sm:$0xf] %v362
  %s364 = scalar_lea.vmem %s0, 92
  %v365 = vld [vmem:[%s364] sm:$0xf]
  %v366 = vunpack.c.l.bf16 %v365
  %v367 = vunpack.c.h.bf16 %v365
  %s368 = scalar_lea.vmem %s1, 140
  %v369 = vpack.c.bf16 0.0, %v366
  %370 = vst [vmem:[%s368] sm:$0xf] %v369
  %s371 = scalar_lea.vmem %s0, 20
  %v372 = vld [vmem:[%s371] sm:$0xf]
  %v373 = vunpack.c.l.bf16 %v372
  %v374 = vunpack.c.h.bf16 %v372
  %s375 = scalar_lea.vmem %s1, 212
  %v376 = vpack.c.bf16 0.0, %v373
  %377 = vst [vmem:[%s375] sm:$0xf] %v376

// kernel: _detect_jit.13
$region0: #{_detect_jit.13}
  #allocation0 [shape = 'u32[]', space=smem, size = 0x4, offset = 0x4, fixed_abs, tag = 'smem constant byte address 0x4 - core index']
  #allocation1 [shape = 'u32[144,128]{1,0:T(1,128)}', space=vmem, size = 0x12000, scoped, tag = 'internal scratch']
  %s0 = inlined_call_operand.vmem [shape: bf16[8,48], index: 0, kind: input, shape index: {}]
  %s1 = inlined_call_operand.vmem [shape: bf16[48,128], index: 1, kind: input, shape index: {}]
  %s2 = inlined_call_operand.vmem [shape: f32[1,128], index: 2, kind: input, shape index: {}]
  %s3 = inlined_call_operand.vmem [shape: bf16[8,128], index: 3, kind: output, shape index: {}]
  %s4 = sld [smem:[#allocation0]]
  $region22: #{_detect_jit.13} parent=0
    _
  %s6 = ssub.s32 1, %s4
  %s7 = scalar_select 0, %s6, %s4
  // Predicated region
  $region2: #{_detect_jit.13} parent=0 // pred_check
    _
  $region3: #{_detect_jit.13} parent=0 // pred_check_branch
    %9 = sbr.rel (0) target = $region5
  $region4: #{_detect_jit.13} parent=0 // pred_region
    _
  $region5: #{_detect_jit.13} parent=0 // pred_fallthru
    _
  // Predicated region
  $region6: #{_detect_jit.13} parent=0 // pred_check
    _
  $region7: #{_detect_jit.13} parent=0 // pred_check_branch
    %11 = sbr.rel (0) target = $region9
  $region8: #{_detect_jit.13} parent=0 // pred_region
    _
  $region9: #{_detect_jit.13} parent=0 // pred_fallthru
    _
  // Predicated region
  $region10: #{_detect_jit.13} parent=0 // pred_check
    _
  $region11: #{_detect_jit.13} parent=0 // pred_check_branch
    %13 = sbr.rel (0) target = $region13
  $region12: #{_detect_jit.13} parent=0 // pred_region
    _
  $region13: #{_detect_jit.13} parent=0 // pred_fallthru
    _
  %v15 = vld [vmem:[%s0] sm:$0xf]
  %v16 = vld [vmem:[%s1] sm:$0xf]
  %v17 = vld [vmem:[%s1 + $0x4] sm:$0xf]
  %v18 = vld [vmem:[%s1 + $0x8] sm:$0xf]
  %v19 = vld [vmem:[%s1 + $0xc] sm:$0xf]
  %v20 = vld [vmem:[%s1 + $0x10] sm:$0xf]
  %v21 = vld [vmem:[%s1 + $0x14] sm:$0xf]
  %v22 = vld [vmem:[%s2] sm:$0x1]
  %v24 = vlaneseq
  %v25 = vshrl.u32 %v24, 7
  %v26 = vsub.s32 0, %v25
  %v27 = vrot.slane %v22, %v26
  %v35 = vunpack.c.l.b16 %v16
  %v36 = vunpack.c.l.b16 %v17
  %v37 = vunpack.c.l.b16 %v18
  %v38 = vunpack.c.l.b16 %v19
  %v39 = vunpack.c.l.b16 %v20
  %v40 = vunpack.c.l.b16 %v21
  %v41 = vpack.c.b16 %v36, %v35
  %v42 = vpack.c.b16 %v38, %v37
  %v43 = vpack.c.b16 %v40, %v39
  %vm47 = vcmask 392192
  %v49 = vsel %vm47, %v15, 0
  %51 = vmatprep.subr.bf16.mxu0 0
  %52 = vmatpush1.bf16.msra.mxu0 %v41
  %53 = vmatprep.subr.bf16.mxu0 0
  %54 = vmatpush1.bf16.msra.mxu0 %v42
  %55 = vmatprep.subr.bf16.mxu0 0
  %56 = vmatpush1.bf16.msra.mxu0 %v43
  %57 = vmatprep.subr.bf16.mxu0 0
  %58 = vmatpush1.bf16.msra.mxu0 0
  %59 = vmatprep.subr.bf16.mxu0 0
  %60 = vmatpush1.bf16.msra.mxu0 0
  %61 = vmatprep.subr.bf16.mxu0 0
  %62 = vmatpush1.bf16.msra.mxu0 0
  %63 = vmatprep.subr.bf16.mxu0 0
  %64 = vmatpush1.bf16.msra.mxu0 0
  %65 = vmatprep.subr.bf16.mxu0 0
  %66 = vmatpush1.bf16.msra.mxu0 0
  %67 = vmatprep.subr.bf16.mxu0 0
  %68 = vmatpush1.bf16.msra.mxu0 0
  %69 = vmatprep.subr.bf16.mxu0 0
  %70 = vmatpush1.bf16.msra.mxu0 0
  %71 = vmatprep.subr.bf16.mxu0 0
  %72 = vmatpush1.bf16.msra.mxu0 0
  %73 = vmatprep.subr.bf16.mxu0 0
  %74 = vmatpush1.bf16.msra.mxu0 0
  %75 = vmatprep.subr.bf16.mxu0 0
  %76 = vmatpush1.bf16.msra.mxu0 0
  %77 = vmatprep.subr.bf16.mxu0 0
  %78 = vmatpush1.bf16.msra.mxu0 0
  %79 = vmatprep.subr.bf16.mxu0 0
  %80 = vmatpush1.bf16.msra.mxu0 0
  %81 = vmatprep.subr.bf16.mxu0 0
  %82 = vmatpush1.bf16.msra.mxu0 0
  %83 = vmatprep.mubr.bf16.mxu0 0
  %84 = vmatmul.mubr.bf16.gmra.mrb[0].mxu0 %v49
  %v85 = vpop.f32.mrb[0].mxu0
  %v86 = vadd.f32 %v27, %v85
  %v87 = vpop.f32.mrb[0].mxu0
  %v88 = vpop.f32.mrb[0].mxu0
  %v89 = vpop.f32.mrb[0].mxu0
  %90 = vdwg.mxu0
  %v91 = vmax.f32 %v86, 0.0
  %v92 = vpack.c.bf16 %v91, %v91
  %93 = vst [vmem:[%s3] sm:$0xf] %v92
  // Predicated region
  $region14: #{_detect_jit.13} parent=0 // pred_check
    _
  $region15: #{_detect_jit.13} parent=0 // pred_check_branch
    %95 = sbr.rel (0) target = $region17
  $region16: #{_detect_jit.13} parent=0 // pred_region
    _
  $region17: #{_detect_jit.13} parent=0 // pred_fallthru
    _
  // Predicated region
  $region18: #{_detect_jit.13} parent=0 // pred_check
    _
  $region19: #{_detect_jit.13} parent=0 // pred_check_branch
    %97 = sbr.rel (0) target = $region21
  $region20: #{_detect_jit.13} parent=0 // pred_region
    _
  $region21: #{_detect_jit.13} parent=0 // pred_fallthru
    _

// kernel: _detect_jit.14
$region0: #{_detect_jit.14}
  #allocation0 [shape = 'u32[]', space=smem, size = 0x4, offset = 0x4, fixed_abs, tag = 'smem constant byte address 0x4 - core index']
  #allocation1 [shape = 'u32[144,128]{1,0:T(1,128)}', space=vmem, size = 0x12000, scoped, tag = 'internal scratch']
  %s0 = inlined_call_operand.vmem [shape: bf16[8,64], index: 0, kind: input, shape index: {}]
  %s1 = inlined_call_operand.vmem [shape: bf16[64,128], index: 1, kind: input, shape index: {}]
  %s2 = inlined_call_operand.vmem [shape: f32[1,128], index: 2, kind: input, shape index: {}]
  %s3 = inlined_call_operand.vmem [shape: bf16[8,128], index: 3, kind: output, shape index: {}]
  %s4 = sld [smem:[#allocation0]]
  $region22: #{_detect_jit.14} parent=0
    _
  %s6 = ssub.s32 1, %s4
  %s7 = scalar_select 0, %s6, %s4
  // Predicated region
  $region2: #{_detect_jit.14} parent=0 // pred_check
    _
  $region3: #{_detect_jit.14} parent=0 // pred_check_branch
    %9 = sbr.rel (0) target = $region5
  $region4: #{_detect_jit.14} parent=0 // pred_region
    _
  $region5: #{_detect_jit.14} parent=0 // pred_fallthru
    _
  // Predicated region
  $region6: #{_detect_jit.14} parent=0 // pred_check
    _
  $region7: #{_detect_jit.14} parent=0 // pred_check_branch
    %11 = sbr.rel (0) target = $region9
  $region8: #{_detect_jit.14} parent=0 // pred_region
    _
  $region9: #{_detect_jit.14} parent=0 // pred_fallthru
    _
  // Predicated region
  $region10: #{_detect_jit.14} parent=0 // pred_check
    _
  $region11: #{_detect_jit.14} parent=0 // pred_check_branch
    %13 = sbr.rel (0) target = $region13
  $region12: #{_detect_jit.14} parent=0 // pred_region
    _
  $region13: #{_detect_jit.14} parent=0 // pred_fallthru
    _
  %v15 = vld [vmem:[%s0] sm:$0xf]
  %v16 = vld [vmem:[%s1] sm:$0xf]
  %v17 = vld [vmem:[%s1 + $0x4] sm:$0xf]
  %v18 = vld [vmem:[%s1 + $0x8] sm:$0xf]
  %v19 = vld [vmem:[%s1 + $0xc] sm:$0xf]
  %v20 = vld [vmem:[%s1 + $0x10] sm:$0xf]
  %v21 = vld [vmem:[%s1 + $0x14] sm:$0xf]
  %v22 = vld [vmem:[%s1 + $0x18] sm:$0xf]
  %v23 = vld [vmem:[%s1 + $0x1c] sm:$0xf]
  %v24 = vld [vmem:[%s2] sm:$0x1]
  %v26 = vlaneseq
  %v27 = vshrl.u32 %v26, 7
  %v28 = vsub.s32 0, %v27
  %v29 = vrot.slane %v24, %v28
  %v39 = vunpack.c.l.b16 %v16
  %v40 = vunpack.c.l.b16 %v17
  %v41 = vunpack.c.l.b16 %v18
  %v42 = vunpack.c.l.b16 %v19
  %v43 = vunpack.c.l.b16 %v20
  %v44 = vunpack.c.l.b16 %v21
  %v45 = vunpack.c.l.b16 %v22
  %v46 = vunpack.c.l.b16 %v23
  %v47 = vpack.c.b16 %v40, %v39
  %v48 = vpack.c.b16 %v42, %v41
  %v49 = vpack.c.b16 %v44, %v43
  %v50 = vpack.c.b16 %v46, %v45
  %vm55 = vcmask 523264
  %v57 = vsel %vm55, %v15, 0
  %59 = vmatprep.subr.bf16.mxu0 0
  %60 = vmatpush1.bf16.msra.mxu0 %v47
  %61 = vmatprep.subr.bf16.mxu0 0
  %62 = vmatpush1.bf16.msra.mxu0 %v48
  %63 = vmatprep.subr.bf16.mxu0 0
  %64 = vmatpush1.bf16.msra.mxu0 %v49
  %65 = vmatprep.subr.bf16.mxu0 0
  %66 = vmatpush1.bf16.msra.mxu0 %v50
  %67 = vmatprep.subr.bf16.mxu0 0
  %68 = vmatpush1.bf16.msra.mxu0 0
  %69 = vmatprep.subr.bf16.mxu0 0
  %70 = vmatpush1.bf16.msra.mxu0 0
  %71 = vmatprep.subr.bf16.mxu0 0
  %72 = vmatpush1.bf16.msra.mxu0 0
  %73 = vmatprep.subr.bf16.mxu0 0
  %74 = vmatpush1.bf16.msra.mxu0 0
  %75 = vmatprep.subr.bf16.mxu0 0
  %76 = vmatpush1.bf16.msra.mxu0 0
  %77 = vmatprep.subr.bf16.mxu0 0
  %78 = vmatpush1.bf16.msra.mxu0 0
  %79 = vmatprep.subr.bf16.mxu0 0
  %80 = vmatpush1.bf16.msra.mxu0 0
  %81 = vmatprep.subr.bf16.mxu0 0
  %82 = vmatpush1.bf16.msra.mxu0 0
  %83 = vmatprep.subr.bf16.mxu0 0
  %84 = vmatpush1.bf16.msra.mxu0 0
  %85 = vmatprep.subr.bf16.mxu0 0
  %86 = vmatpush1.bf16.msra.mxu0 0
  %87 = vmatprep.subr.bf16.mxu0 0
  %88 = vmatpush1.bf16.msra.mxu0 0
  %89 = vmatprep.subr.bf16.mxu0 0
  %90 = vmatpush1.bf16.msra.mxu0 0
  %91 = vmatprep.mubr.bf16.mxu0 0
  %92 = vmatmul.mubr.bf16.gmra.mrb[0].mxu0 %v57
  %v93 = vpop.f32.mrb[0].mxu0
  %v94 = vadd.f32 %v29, %v93
  %v95 = vpop.f32.mrb[0].mxu0
  %v96 = vpop.f32.mrb[0].mxu0
  %v97 = vpop.f32.mrb[0].mxu0
  %98 = vdwg.mxu0
  %v99 = vmax.f32 %v94, 0.0
  %v100 = vpack.c.bf16 %v99, %v99
  %101 = vst [vmem:[%s3] sm:$0xf] %v100
  // Predicated region
  $region14: #{_detect_jit.14} parent=0 // pred_check
    _
  $region15: #{_detect_jit.14} parent=0 // pred_check_branch
    %103 = sbr.rel (0) target = $region17
  $region16: #{_detect_jit.14} parent=0 // pred_region
    _
  $region17: #{_detect_jit.14} parent=0 // pred_fallthru
    _
  // Predicated region
  $region18: #{_detect_jit.14} parent=0 // pred_check
    _
  $region19: #{_detect_jit.14} parent=0 // pred_check_branch
    %105 = sbr.rel (0) target = $region21
  $region20: #{_detect_jit.14} parent=0 // pred_region
    _
  $region21: #{_detect_jit.14} parent=0 // pred_fallthru
    _

// kernel: _detect_jit.15
$region0: #{_detect_jit.15}
  #allocation0 [shape = 'u32[]', space=smem, size = 0x4, offset = 0x4, fixed_abs, tag = 'smem constant byte address 0x4 - core index']
  #allocation1 [shape = 'u32[144,128]{1,0:T(1,128)}', space=vmem, size = 0x12000, scoped, tag = 'internal scratch']
  %s0 = inlined_call_operand.vmem [shape: bf16[16,128], index: 0, kind: input, shape index: {}]
  %s1 = inlined_call_operand.vmem [shape: bf16[16,128], index: 1, kind: input, shape index: {}]
  %s2 = inlined_call_operand.vmem [shape: bf16[16,128], index: 2, kind: input, shape index: {}]
  %s3 = inlined_call_operand.vmem [shape: bf16[1152,128], index: 3, kind: input, shape index: {}]
  %s4 = inlined_call_operand.vmem [shape: f32[1,128], index: 4, kind: input, shape index: {}]
  %s5 = inlined_call_operand.vmem [shape: bf16[16,128], index: 5, kind: output, shape index: {}]
  %s6 = sld [smem:[#allocation0]]
  $region53: #{_detect_jit.15} parent=0
    _
  %s8 = ssub.s32 1, %s6
  %s9 = scalar_select 0, %s8, %s6
  loop: start=0, step=1, limit=4
  $region2: #{_detect_jit.15} parent=0 // loop_pre_header
    _
  $region3: #{_detect_jit.15} parent=0 // loop_header
    %s11 = sphi 0, %s15
    %p12 = scmp.ge.s32.totalorder %s11, 4
    %s21 = sphi 0, %s23
    %s24 = sphi 0, %s21
    %s25 = sphi 0, %s24
    %s41 = sphi 0, %s25
    %s47 = sphi 0, %s49
    %s50 = sphi 0, %s47
    %s51 = sphi 0, %s50
    %s67 = sphi 0, %s51
    %s73 = sphi 0, %s75
    %s76 = sphi 0, %s73
    %s77 = sphi 0, %s76
    %s93 = sphi 0, %s77
    %s97 = sphi 0, %s97
    %s99 = sphi 0, %s97
    %s100 = sphi 0, %s99
    %s114 = sphi 0, %s100
    %s118 = sphi 0, %s118
    %s120 = sphi 0, %s118
    %s121 = sphi 0, %s120
    %s135 = sphi 0, %s121
    %s141 = sphi 0, %s143
    %s144 = sphi 0, %s141
    %s145 = sphi 0, %s144
    %s161 = sphi 0, %s145
  $region4: #{_detect_jit.15} parent=0 // loop_header_branch
    %14 = sbr.rel (%p12) target = $region8
  $region5: #{_detect_jit.15} parent=0 // loop_body
    %s16 = ssub.s32 %s11, 1
    %s17 = ssub.s32 %s11, 2
    %s18 = sadd.s32 %s11, 1
    %s19 = ssub.s32 %s11, %s18
    %p20 = scmp.eq.s32.totalorder %s19, 0
    %s22 = sadd.s32 %s21, 1
    %s23 = scalar_select %p20, %s21, %s22
    %p26 = pneg %p20
    %p27 = scmp.eq.s32.totalorder %s11, 1
    %p28 = por %p26, %p27
    %p29 = scmp.ne.s32.totalorder %s21, %s24
    %p30 = scmp.eq.s32.totalorder %s11, 0
    %p31 = por %p29, %p30
    %p32 = scmp.ne.s32.totalorder %s21, %s24
    %p33 = scmp.eq.s32.totalorder %s16, 1
    %p34 = por %p32, %p33
    %p35 = scmp.ne.s32.totalorder %s24, %s25
    %p36 = scmp.eq.s32.totalorder %s16, 0
    %p37 = por %p35, %p36
    %p38 = scmp.ne.s32.totalorder %s24, %s25
    %p39 = scmp.eq.s32.totalorder %s17, 1
    %p40 = por %p38, %p39
    %p42 = scmp.ne.s32.totalorder %s25, %s41
    %p43 = scmp.eq.s32.totalorder %s17, 0
    %p44 = por %p42, %p43
    %s45 = ssub.s32 %s11, %s18
    %p46 = scmp.eq.s32.totalorder %s45, 0
    %s48 = sadd.s32 %s47, 1
    %s49 = scalar_select %p46, %s47, %s48
    %p52 = pneg %p46
    %p53 = scmp.eq.s32.totalorder %s11, 1
    %p54 = por %p52, %p53
    %p55 = scmp.ne.s32.totalorder %s47, %s50
    %p56 = scmp.eq.s32.totalorder %s11, 0
    %p57 = por %p55, %p56
    %p58 = scmp.ne.s32.totalorder %s47, %s50
    %p59 = scmp.eq.s32.totalorder %s16, 1
    %p60 = por %p58, %p59
    %p61 = scmp.ne.s32.totalorder %s50, %s51
    %p62 = scmp.eq.s32.totalorder %s16, 0
    %p63 = por %p61, %p62
    %p64 = scmp.ne.s32.totalorder %s50, %s51
    %p65 = scmp.eq.s32.totalorder %s17, 1
    %p66 = por %p64, %p65
    %p68 = scmp.ne.s32.totalorder %s51, %s67
    %p69 = scmp.eq.s32.totalorder %s17, 0
    %p70 = por %p68, %p69
    %s71 = ssub.s32 %s11, %s18
    %p72 = scmp.eq.s32.totalorder %s71, 0
    %s74 = sadd.s32 %s73, 1
    %s75 = scalar_select %p72, %s73, %s74
    %p78 = pneg %p72
    %p79 = scmp.eq.s32.totalorder %s11, 1
    %p80 = por %p78, %p79
    %p81 = scmp.ne.s32.totalorder %s73, %s76
    %p82 = scmp.eq.s32.totalorder %s11, 0
    %p83 = por %p81, %p82
    %p84 = scmp.ne.s32.totalorder %s73, %s76
    %p85 = scmp.eq.s32.totalorder %s16, 1
    %p86 = por %p84, %p85
    %p87 = scmp.ne.s32.totalorder %s76, %s77
    %p88 = scmp.eq.s32.totalorder %s16, 0
    %p89 = por %p87, %p88
    %p90 = scmp.ne.s32.totalorder %s76, %s77
    %p91 = scmp.eq.s32.totalorder %s17, 1
    %p92 = por %p90, %p91
    %p94 = scmp.ne.s32.totalorder %s77, %s93
    %p95 = scmp.eq.s32.totalorder %s17, 0
    %p96 = por %p94, %p95
    %s98 = sadd.s32 %s97, 1
    %p101 = scmp.eq.s32.totalorder %s11, 1
    %p102 = scmp.ne.s32.totalorder %s97, %s99
    %p103 = scmp.eq.s32.totalorder %s11, 0
    %p104 = por %p102, %p103
    %p105 = scmp.ne.s32.totalorder %s97, %s99
    %p106 = scmp.eq.s32.totalorder %s16, 1
    %p107 = por %p105, %p106
    %p108 = scmp.ne.s32.totalorder %s99, %s100
    %p109 = scmp.eq.s32.totalorder %s16, 0
    %p110 = por %p108, %p109
    %p111 = scmp.ne.s32.totalorder %s99, %s100
    %p112 = scmp.eq.s32.totalorder %s17, 1
    %p113 = por %p111, %p112
    %p115 = scmp.ne.s32.totalorder %s100, %s114
    %p116 = scmp.eq.s32.totalorder %s17, 0
    %p117 = por %p115, %p116
    %s119 = sadd.s32 %s118, 1
    %p122 = scmp.eq.s32.totalorder %s11, 1
    %p123 = scmp.ne.s32.totalorder %s118, %s120
    %p124 = scmp.eq.s32.totalorder %s11, 0
    %p125 = por %p123, %p124
    %p126 = scmp.ne.s32.totalorder %s118, %s120
    %p127 = scmp.eq.s32.totalorder %s16, 1
    %p128 = por %p126, %p127
    %p129 = scmp.ne.s32.totalorder %s120, %s121
    %p130 = scmp.eq.s32.totalorder %s16, 0
    %p131 = por %p129, %p130
    %p132 = scmp.ne.s32.totalorder %s120, %s121
    %p133 = scmp.eq.s32.totalorder %s17, 1
    %p134 = por %p132, %p133
    %p136 = scmp.ne.s32.totalorder %s121, %s135
    %p137 = scmp.eq.s32.totalorder %s17, 0
    %p138 = por %p136, %p137
    %s139 = ssub.s32 %s11, %s18
    %p140 = scmp.eq.s32.totalorder %s139, 0
    %s142 = sadd.s32 %s141, 1
    %s143 = scalar_select %p140, %s141, %s142
    %p146 = pneg %p140
    %p147 = scmp.eq.s32.totalorder %s11, 1
    %p148 = por %p146, %p147
    %p149 = scmp.ne.s32.totalorder %s141, %s144
    %p150 = scmp.eq.s32.totalorder %s11, 0
    %p151 = por %p149, %p150
    %p152 = scmp.ne.s32.totalorder %s141, %s144
    %p153 = scmp.eq.s32.totalorder %s16, 1
    %p154 = por %p152, %p153
    %p155 = scmp.ne.s32.totalorder %s144, %s145
    %p156 = scmp.eq.s32.totalorder %s16, 0
    %p157 = por %p155, %p156
    %p158 = scmp.ne.s32.totalorder %s144, %s145
    %p159 = scmp.eq.s32.totalorder %s17, 1
    %p160 = por %p158, %p159
    %p162 = scmp.ne.s32.totalorder %s145, %s161
    %p163 = scmp.eq.s32.totalorder %s17, 0
    %p164 = por %p162, %p163
    %p165 = scmp.le.s32.totalorder 1, %s11
    %p166 = scmp.lt.s32.totalorder %s11, 3
    %p167 = pnand %p165, %p166
    %p168 = pneg %p167
    // Predicated region
    $region9: #{_detect_jit.15} parent=5 // pred_check
      _
    $region10: #{_detect_jit.15} parent=5 // pred_check_branch
      %170 = sbr.rel (%p167) target = $region12
    $region11: #{_detect_jit.15} parent=5 // pred_region
      %s171 = ssub.s32 %s11, 1
      // Predicated region
      $region13: #{_detect_jit.15} parent=11 // pred_check
        %p172 = pneg %p110
      $region14: #{_detect_jit.15} parent=11 // pred_check_branch
        %174 = sbr.rel (%p172) target = $region16
      $region15: #{_detect_jit.15} parent=11 // pred_region
        _
      $region16: #{_detect_jit.15} parent=11 // pred_fallthru
        _
      // Predicated region
      $region17: #{_detect_jit.15} parent=11 // pred_check
        %p175 = pneg %p131
      $region18: #{_detect_jit.15} parent=11 // pred_check_branch
        %177 = sbr.rel (%p175) target = $region20
      $region19: #{_detect_jit.15} parent=11 // pred_region
        _
      $region20: #{_detect_jit.15} parent=11 // pred_fallthru
        _
    $region12: #{_detect_jit.15} parent=5 // pred_fallthru
      _
    %p178 = scmp.lt.s32.totalorder %s11, 2
    // Predicated region
    $region21: #{_detect_jit.15} parent=5 // pred_check
      %p179 = pneg %p178
    $region22: #{_detect_jit.15} parent=5 // pred_check_branch
      %181 = sbr.rel (%p179) target = $region24
    $region23: #{_detect_jit.15} parent=5 // pred_region
      // Predicated region
      $region25: #{_detect_jit.15} parent=23 // pred_check
        %p182 = pneg %p31
      $region26: #{_detect_jit.15} parent=23 // pred_check_branch
        %184 = sbr.rel (%p182) target = $region28
      $region27: #{_detect_jit.15} parent=23 // pred_region
        %p185 = scmp.lt.s32.totalorder %s11, 1
        %s186 = scalar_select %p185, %s11, 1
        %s187 = smul.addr %s186, 4
        %s188 = scalar_lea.vmem %s0, %s187
      $region28: #{_detect_jit.15} parent=23 // pred_fallthru
        _
      // Predicated region
      $region29: #{_detect_jit.15} parent=23 // pred_check
        %p189 = pneg %p57
      $region30: #{_detect_jit.15} parent=23 // pred_check_branch
        %191 = sbr.rel (%p189) target = $region32
      $region31: #{_detect_jit.15} parent=23 // pred_region
        %p192 = scmp.lt.s32.totalorder %s11, 1
        %s193 = scalar_select %p192, %s11, 1
        %s194 = smul.addr %s193, 4
        %s195 = scalar_lea.vmem %s1, %s194
      $region32: #{_detect_jit.15} parent=23 // pred_fallthru
        _
      // Predicated region
      $region33: #{_detect_jit.15} parent=23 // pred_check
        %p196 = pneg %p83
      $region34: #{_detect_jit.15} parent=23 // pred_check_branch
        %198 = sbr.rel (%p196) target = $region36
      $region35: #{_detect_jit.15} parent=23 // pred_region
        %p199 = scmp.lt.s32.totalorder %s11, 1
        %s200 = scalar_select %p199, %s11, 1
        %s201 = smul.addr %s200, 4
        %s202 = scalar_lea.vmem %s2, %s201
      $region36: #{_detect_jit.15} parent=23 // pred_fallthru
        _
    $region24: #{_detect_jit.15} parent=5 // pred_fallthru
      _
    %p203 = scmp.le.s32.totalorder 1, %s11
    %p204 = scmp.lt.s32.totalorder %s11, 3
    %p205 = pnand %p203, %p204
    %p206 = pneg %p205
    // Predicated region
    $region37: #{_detect_jit.15} parent=5 // pred_check
      _
    $region38: #{_detect_jit.15} parent=5 // pred_check_branch
      %208 = sbr.rel (%p205) target = $region40
    $region39: #{_detect_jit.15} parent=5 // pred_region
      %s209 = ssub.s32 %s11, 1
      %p210 = scmp.lt.s32.totalorder %s16, 1
      %s211 = scalar_select %p210, %s16, 1
      %s212 = smul.addr %s211, 4
      %s213 = scalar_lea.vmem %s0, %s212
      %p214 = pneg %p37
      %p215 = pneg %p34
      %p216 = scmp.lt.s32.totalorder %s16, 1
      %s217 = scalar_select %p216, %s16, 1
      %s218 = smul.addr %s217, 4
      %s219 = scalar_lea.vmem %s1, %s218
      %p220 = pneg %p63
      %p221 = pneg %p60
      %p222 = scmp.lt.s32.totalorder %s16, 1
      %s223 = scalar_select %p222, %s16, 1
      %s224 = smul.addr %s223, 4
      %s225 = scalar_lea.vmem %s2, %s224
      %p226 = pneg %p89
      %p227 = pneg %p86
      %p228 = pneg %p110
      %p229 = pneg %p107
      %p230 = pneg %p131
      %p231 = pneg %p128
      %p232 = pneg %p157
      %p233 = pneg %p154
      %p234 = scmp.lt.s32.totalorder %s16, 1
      %s235 = scalar_select %p234, %s16, 1
      %s236 = smul.addr %s235, 4
      %s237 = scalar_lea.vmem %s5, %s236
      %p238 = scmp.lt.s32.totalorder %s16, 1
      %s239 = scalar_select %p238, %s16, 1
      %s240 = smul.addr %s239, 4
      %s241 = scalar_lea.vmem %s0, %s240
      %p242 = scmp.lt.s32.totalorder %s16, 1
      %s243 = scalar_select %p242, %s16, 1
      %s244 = smul.addr %s243, 4
      %s245 = scalar_lea.vmem %s1, %s244
      %p246 = scmp.lt.s32.totalorder %s16, 1
      %s247 = scalar_select %p246, %s16, 1
      %s248 = smul.addr %s247, 4
      %s249 = scalar_lea.vmem %s2, %s248
      %p250 = scmp.lt.s32.totalorder %s16, 1
      %s251 = scalar_select %p250, %s16, 1
      %s252 = smul.addr %s251, 4
      %s253 = scalar_lea.vmem %s5, %s252
      %v255 = vld [vmem:[%s241] sm:$0xf]
      %v257 = vunpack.c.l.b16 %v255
      %v258 = vpack.c.b16 %v257, %v257
      %v260 = vshrl.u32 %v258, 16
      %v262 = vshll.u32 %v258, 16
      %v264 = vrot.slane %v262, 1
      %v265 = vor.u32 %v260, %v264
      %v267 = vrot.slane %v262, 5
      %vm269 = vcmask 1043456
      %vm270 = vsmask.f32 3328
      %vm271 = vmand %vm269, %vm270
      %v272 = vsel %vm271, %v265, %v267
      %v273 = vrot.slane %v258, 1
      %v274 = vrot.slane %v258, 5
      %vm275 = vcmask 1042432
      %v278 = vsel %vm275, %v273, %v274
      %v280 = vld [vmem:[%s245] sm:$0xf]
      %v282 = vunpack.c.l.b16 %v280
      %v283 = vpack.c.b16 %v282, %v282
      %v285 = vshrl.u32 %v283, 16
      %v287 = vshll.u32 %v283, 16
      %v289 = vrot.slane %v287, 1
      %v290 = vor.u32 %v285, %v289
      %v292 = vrot.slane %v287, 5
      %v294 = vsel %vm271, %v290, %v292
      %v295 = vrot.slane %v283, 1
      %v296 = vrot.slane %v283, 5
      %v299 = vsel %vm275, %v295, %v296
      %v301 = vld [vmem:[%s249] sm:$0xf]
      %v303 = vunpack.c.l.b16 %v301
      %v304 = vpack.c.b16 %v303, %v303
      %v306 = vshrl.u32 %v304, 16
      %v308 = vshll.u32 %v304, 16
      %v310 = vrot.slane %v308, 1
      %v311 = vor.u32 %v306, %v310
      %v313 = vrot.slane %v308, 5
      %v315 = vsel %vm271, %v311, %v313
      %v316 = vrot.slane %v304, 1
      %v317 = vrot.slane %v304, 5
      %v320 = vsel %vm275, %v316, %v317
      %v322 = vld [vmem:[%s3] sm:$0xf]
      %v323 = vld [vmem:[%s3 + $0x4] sm:$0xf]
      %v324 = vld [vmem:[%s3 + $0x8] sm:$0xf]
      %v325 = vld [vmem:[%s3 + $0xc] sm:$0xf]
      %v326 = vld [vmem:[%s3 + $0x10] sm:$0xf]
      %v327 = vld [vmem:[%s3 + $0x14] sm:$0xf]
      %v328 = vld [vmem:[%s3 + $0x18] sm:$0xf]
      %v329 = vld [vmem:[%s3 + $0x1c] sm:$0xf]
      %v330 = vld [vmem:[%s3 + $0x20] sm:$0xf]
      %v331 = vld [vmem:[%s3 + $0x24] sm:$0xf]
      %v332 = vld [vmem:[%s3 + $0x28] sm:$0xf]
      %v333 = vld [vmem:[%s3 + $0x2c] sm:$0xf]
      %v334 = vld [vmem:[%s3 + $0x30] sm:$0xf]
      %v335 = vld [vmem:[%s3 + $0x34] sm:$0xf]
      %v336 = vld [vmem:[%s3 + $0x38] sm:$0xf]
      %v337 = vld [vmem:[%s3 + $0x3c] sm:$0xf]
      %v338 = vld [vmem:[%s3 + $0x40] sm:$0xf]
      %v339 = vld [vmem:[%s3 + $0x44] sm:$0xf]
      %v340 = vld [vmem:[%s3 + $0x48] sm:$0xf]
      %v341 = vld [vmem:[%s3 + $0x4c] sm:$0xf]
      %v342 = vld [vmem:[%s3 + $0x50] sm:$0xf]
      %v343 = vld [vmem:[%s3 + $0x54] sm:$0xf]
      %v344 = vld [vmem:[%s3 + $0x58] sm:$0xf]
      %v345 = vld [vmem:[%s3 + $0x5c] sm:$0xf]
      %v346 = vld [vmem:[%s3 + $0x60] sm:$0xf]
      %v347 = vld [vmem:[%s3 + $0x64] sm:$0xf]
      %v348 = vld [vmem:[%s3 + $0x68] sm:$0xf]
      %v349 = vld [vmem:[%s3 + $0x6c] sm:$0xf]
      %v350 = vld [vmem:[%s3 + $0x70] sm:$0xf]
      %v351 = vld [vmem:[%s3 + $0x74] sm:$0xf]
      %v352 = vld [vmem:[%s3 + $0x78] sm:$0xf]
      %v353 = vld [vmem:[%s3 + $0x7c] sm:$0xf]
      %v354 = vld [vmem:[%s3 + $0x80] sm:$0xf]
      %v355 = vld [vmem:[%s3 + $0x84] sm:$0xf]
      %v356 = vld [vmem:[%s3 + $0x88] sm:$0xf]
      %v357 = vld [vmem:[%s3 + $0x8c] sm:$0xf]
      %v358 = vld [vmem:[%s3 + $0x90] sm:$0xf]
      %v359 = vld [vmem:[%s3 + $0x94] sm:$0xf]
      %v360 = vld [vmem:[%s3 + $0x98] sm:$0xf]
      %v361 = vld [vmem:[%s3 + $0x9c] sm:$0xf]
      %v362 = vld [vmem:[%s3 + $0xa0] sm:$0xf]
      %v363 = vld [vmem:[%s3 + $0xa4] sm:$0xf]
      %v364 = vld [vmem:[%s3 + $0xa8] sm:$0xf]
      %v365 = vld [vmem:[%s3 + $0xac] sm:$0xf]
      %v366 = vld [vmem:[%s3 + $0xb0] sm:$0xf]
      %v367 = vld [vmem:[%s3 + $0xb4] sm:$0xf]
      %v368 = vld [vmem:[%s3 + $0xb8] sm:$0xf]
      %v369 = vld [vmem:[%s3 + $0xbc] sm:$0xf]
      %v370 = vld [vmem:[%s3 + $0xc0] sm:$0xf]
      %v371 = vld [vmem:[%s3 + $0xc4] sm:$0xf]
      %v372 = vld [vmem:[%s3 + $0xc8] sm:$0xf]
      %v373 = vld [vmem:[%s3 + $0xcc] sm:$0xf]
      %v374 = vld [vmem:[%s3 + $0xd0] sm:$0xf]
      %v375 = vld [vmem:[%s3 + $0xd4] sm:$0xf]
      %v376 = vld [vmem:[%s3 + $0xd8] sm:$0xf]
      %v377 = vld [vmem:[%s3 + $0xdc] sm:$0xf]
      %v378 = vld [vmem:[%s3 + $0xe0] sm:$0xf]
      %v379 = vld [vmem:[%s3 + $0xe4] sm:$0xf]
      %v380 = vld [vmem:[%s3 + $0xe8] sm:$0xf]
      %v381 = vld [vmem:[%s3 + $0xec] sm:$0xf]
      %v382 = vld [vmem:[%s3 + $0xf0] sm:$0xf]
      %v383 = vld [vmem:[%s3 + $0xf4] sm:$0xf]
      %v384 = vld [vmem:[%s3 + $0xf8] sm:$0xf]
      %v385 = vld [vmem:[%s3 + $0xfc] sm:$0xf]
      %v386 = vld [vmem:[%s3 + $0x100] sm:$0xf]
      %v387 = vld [vmem:[%s3 + $0x104] sm:$0xf]
      %v388 = vld [vmem:[%s3 + $0x108] sm:$0xf]
      %v389 = vld [vmem:[%s3 + $0x10c] sm:$0xf]
      %v390 = vld [vmem:[%s3 + $0x110] sm:$0xf]
      %v391 = vld [vmem:[%s3 + $0x114] sm:$0xf]
      %v392 = vld [vmem:[%s3 + $0x118] sm:$0xf]
      %v393 = vld [vmem:[%s3 + $0x11c] sm:$0xf]
      %v394 = vld [vmem:[%s3 + $0x120] sm:$0xf]
      %v395 = vld [vmem:[%s3 + $0x124] sm:$0xf]
      %v396 = vld [vmem:[%s3 + $0x128] sm:$0xf]
      %v397 = vld [vmem:[%s3 + $0x12c] sm:$0xf]
      %v398 = vld [vmem:[%s3 + $0x130] sm:$0xf]
      %v399 = vld [vmem:[%s3 + $0x134] sm:$0xf]
      %v400 = vld [vmem:[%s3 + $0x138] sm:$0xf]
      %v401 = vld [vmem:[%s3 + $0x13c] sm:$0xf]
      %v402 = vld [vmem:[%s3 + $0x140] sm:$0xf]
      %v403 = vld [vmem:[%s3 + $0x144] sm:$0xf]
      %v404 = vld [vmem:[%s3 + $0x148] sm:$0xf]
      %v405 = vld [vmem:[%s3 + $0x14c] sm:$0xf]
      %v406 = vld [vmem:[%s3 + $0x150] sm:$0xf]
      %v407 = vld [vmem:[%s3 + $0x154] sm:$0xf]
      %v408 = vld [vmem:[%s3 + $0x158] sm:$0xf]
      %v409 = vld [vmem:[%s3 + $0x15c] sm:$0xf]
      %v410 = vld [vmem:[%s3 + $0x160] sm:$0xf]
      %v411 = vld [vmem:[%s3 + $0x164] sm:$0xf]
      %v412 = vld [vmem:[%s3 + $0x168] sm:$0xf]
      %v413 = vld [vmem:[%s3 + $0x16c] sm:$0xf]
      %v414 = vld [vmem:[%s3 + $0x170] sm:$0xf]
      %v415 = vld [vmem:[%s3 + $0x174] sm:$0xf]
      %v416 = vld [vmem:[%s3 + $0x178] sm:$0xf]
      %v417 = vld [vmem:[%s3 + $0x17c] sm:$0xf]
      %v418 = vld [vmem:[%s3 + $0x180] sm:$0xf]
      %v419 = vld [vmem:[%s3 + $0x184] sm:$0xf]
      %v420 = vld [vmem:[%s3 + $0x188] sm:$0xf]
      %v421 = vld [vmem:[%s3 + $0x18c] sm:$0xf]
      %v422 = vld [vmem:[%s3 + $0x190] sm:$0xf]
      %v423 = vld [vmem:[%s3 + $0x194] sm:$0xf]
      %v424 = vld [vmem:[%s3 + $0x198] sm:$0xf]
      %v425 = vld [vmem:[%s3 + $0x19c] sm:$0xf]
      %v426 = vld [vmem:[%s3 + $0x1a0] sm:$0xf]
      %v427 = vld [vmem:[%s3 + $0x1a4] sm:$0xf]
      %v428 = vld [vmem:[%s3 + $0x1a8] sm:$0xf]
      %v429 = vld [vmem:[%s3 + $0x1ac] sm:$0xf]
      %v430 = vld [vmem:[%s3 + $0x1b0] sm:$0xf]
      %v431 = vld [vmem:[%s3 + $0x1b4] sm:$0xf]
      %v432 = vld [vmem:[%s3 + $0x1b8] sm:$0xf]
      %v433 = vld [vmem:[%s3 + $0x1bc] sm:$0xf]
      %v434 = vld [vmem:[%s3 + $0x1c0] sm:$0xf]
      %v435 = vld [vmem:[%s3 + $0x1c4] sm:$0xf]
      %v436 = vld [vmem:[%s3 + $0x1c8] sm:$0xf]
      %v437 = vld [vmem:[%s3 + $0x1cc] sm:$0xf]
      %v438 = vld [vmem:[%s3 + $0x1d0] sm:$0xf]
      %v439 = vld [vmem:[%s3 + $0x1d4] sm:$0xf]
      %v440 = vld [vmem:[%s3 + $0x1d8] sm:$0xf]
      %v441 = vld [vmem:[%s3 + $0x1dc] sm:$0xf]
      %v442 = vld [vmem:[%s3 + $0x1e0] sm:$0xf]
      %v443 = vld [vmem:[%s3 + $0x1e4] sm:$0xf]
      %v444 = vld [vmem:[%s3 + $0x1e8] sm:$0xf]
      %v445 = vld [vmem:[%s3 + $0x1ec] sm:$0xf]
      %v446 = vld [vmem:[%s3 + $0x1f0] sm:$0xf]
      %v447 = vld [vmem:[%s3 + $0x1f4] sm:$0xf]
      %v448 = vld [vmem:[%s3 + $0x1f8] sm:$0xf]
      %v449 = vld [vmem:[%s3 + $0x1fc] sm:$0xf]
      %v450 = vld [vmem:[%s3 + $0x200] sm:$0xf]
      %v451 = vld [vmem:[%s3 + $0x204] sm:$0xf]
      %v452 = vld [vmem:[%s3 + $0x208] sm:$0xf]
      %v453 = vld [vmem:[%s3 + $0x20c] sm:$0xf]
      %v454 = vld [vmem:[%s3 + $0x210] sm:$0xf]
      %v455 = vld [vmem:[%s3 + $0x214] sm:$0xf]
      %v456 = vld [vmem:[%s3 + $0x218] sm:$0xf]
      %v457 = vld [vmem:[%s3 + $0x21c] sm:$0xf]
      %v458 = vld [vmem:[%s3 + $0x220] sm:$0xf]
      %v459 = vld [vmem:[%s3 + $0x224] sm:$0xf]
      %v460 = vld [vmem:[%s3 + $0x228] sm:$0xf]
      %v461 = vld [vmem:[%s3 + $0x22c] sm:$0xf]
      %v462 = vld [vmem:[%s3 + $0x230] sm:$0xf]
      %v463 = vld [vmem:[%s3 + $0x234] sm:$0xf]
      %v464 = vld [vmem:[%s3 + $0x238] sm:$0xf]
      %v465 = vld [vmem:[%s3 + $0x23c] sm:$0xf]
      %v466 = vld [vmem:[%s4] sm:$0x1]
      %v468 = vlaneseq
      %v469 = vshrl.u32 %v468, 7
      %v470 = vsub.s32 0, %v469
      %v471 = vrot.slane %v466, %v470
      %v617 = vunpack.c.l.b16 %v322
      %v618 = vunpack.c.l.b16 %v323
      %v619 = vunpack.c.l.b16 %v324
      %v620 = vunpack.c.l.b16 %v325
      %v621 = vunpack.c.l.b16 %v326
      %v622 = vunpack.c.l.b16 %v327
      %v623 = vunpack.c.l.b16 %v328
      %v624 = vunpack.c.l.b16 %v329
      %v625 = vunpack.c.l.b16 %v330
      %v626 = vunpack.c.l.b16 %v331
      %v627 = vunpack.c.l.b16 %v332
      %v628 = vunpack.c.l.b16 %v333
      %v629 = vunpack.c.l.b16 %v334
      %v630 = vunpack.c.l.b16 %v335
      %v631 = vunpack.c.l.b16 %v336
      %v632 = vunpack.c.l.b16 %v337
      %v633 = vunpack.c.l.b16 %v338
      %v634 = vunpack.c.l.b16 %v339
      %v635 = vunpack.c.l.b16 %v340
      %v636 = vunpack.c.l.b16 %v341
      %v637 = vunpack.c.l.b16 %v342
      %v638 = vunpack.c.l.b16 %v343
      %v639 = vunpack.c.l.b16 %v344
      %v640 = vunpack.c.l.b16 %v345
      %v641 = vunpack.c.l.b16 %v346
      %v642 = vunpack.c.l.b16 %v347
      %v643 = vunpack.c.l.b16 %v348
      %v644 = vunpack.c.l.b16 %v349
      %v645 = vunpack.c.l.b16 %v350
      %v646 = vunpack.c.l.b16 %v351
      %v647 = vunpack.c.l.b16 %v352
      %v648 = vunpack.c.l.b16 %v353
      %v649 = vunpack.c.l.b16 %v354
      %v650 = vunpack.c.l.b16 %v355
      %v651 = vunpack.c.l.b16 %v356
      %v652 = vunpack.c.l.b16 %v357
      %v653 = vunpack.c.l.b16 %v358
      %v654 = vunpack.c.l.b16 %v359
      %v655 = vunpack.c.l.b16 %v360
      %v656 = vunpack.c.l.b16 %v361
      %v657 = vunpack.c.l.b16 %v362
      %v658 = vunpack.c.l.b16 %v363
      %v659 = vunpack.c.l.b16 %v364
      %v660 = vunpack.c.l.b16 %v365
      %v661 = vunpack.c.l.b16 %v366
      %v662 = vunpack.c.l.b16 %v367
      %v663 = vunpack.c.l.b16 %v368
      %v664 = vunpack.c.l.b16 %v369
      %v665 = vunpack.c.l.b16 %v370
      %v666 = vunpack.c.l.b16 %v371
      %v667 = vunpack.c.l.b16 %v372
      %v668 = vunpack.c.l.b16 %v373
      %v669 = vunpack.c.l.b16 %v374
      %v670 = vunpack.c.l.b16 %v375
      %v671 = vunpack.c.l.b16 %v376
      %v672 = vunpack.c.l.b16 %v377
      %v673 = vunpack.c.l.b16 %v378
      %v674 = vunpack.c.l.b16 %v379
      %v675 = vunpack.c.l.b16 %v380
      %v676 = vunpack.c.l.b16 %v381
      %v677 = vunpack.c.l.b16 %v382
      %v678 = vunpack.c.l.b16 %v383
      %v679 = vunpack.c.l.b16 %v384
      %v680 = vunpack.c.l.b16 %v385
      %v681 = vunpack.c.l.b16 %v386
      %v682 = vunpack.c.l.b16 %v387
      %v683 = vunpack.c.l.b16 %v388
      %v684 = vunpack.c.l.b16 %v389
      %v685 = vunpack.c.l.b16 %v390
      %v686 = vunpack.c.l.b16 %v391
      %v687 = vunpack.c.l.b16 %v392
      %v688 = vunpack.c.l.b16 %v393
      %v689 = vunpack.c.l.b16 %v394
      %v690 = vunpack.c.l.b16 %v395
      %v691 = vunpack.c.l.b16 %v396
      %v692 = vunpack.c.l.b16 %v397
      %v693 = vunpack.c.l.b16 %v398
      %v694 = vunpack.c.l.b16 %v399
      %v695 = vunpack.c.l.b16 %v400
      %v696 = vunpack.c.l.b16 %v401
      %v697 = vunpack.c.l.b16 %v402
      %v698 = vunpack.c.l.b16 %v403
      %v699 = vunpack.c.l.b16 %v404
      %v700 = vunpack.c.l.b16 %v405
      %v701 = vunpack.c.l.b16 %v406
      %v702 = vunpack.c.l.b16 %v407
      %v703 = vunpack.c.l.b16 %v408
      %v704 = vunpack.c.l.b16 %v409
      %v705 = vunpack.c.l.b16 %v410
      %v706 = vunpack.c.l.b16 %v411
      %v707 = vunpack.c.l.b16 %v412
      %v708 = vunpack.c.l.b16 %v413
      %v709 = vunpack.c.l.b16 %v414
      %v710 = vunpack.c.l.b16 %v415
      %v711 = vunpack.c.l.b16 %v416
      %v712 = vunpack.c.l.b16 %v417
      %v713 = vunpack.c.l.b16 %v418
      %v714 = vunpack.c.l.b16 %v419
      %v715 = vunpack.c.l.b16 %v420
      %v716 = vunpack.c.l.b16 %v421
      %v717 = vunpack.c.l.b16 %v422
      %v718 = vunpack.c.l.b16 %v423
      %v719 = vunpack.c.l.b16 %v424
      %v720 = vunpack.c.l.b16 %v425
      %v721 = vunpack.c.l.b16 %v426
      %v722 = vunpack.c.l.b16 %v427
      %v723 = vunpack.c.l.b16 %v428
      %v724 = vunpack.c.l.b16 %v429
      %v725 = vunpack.c.l.b16 %v430
      %v726 = vunpack.c.l.b16 %v431
      %v727 = vunpack.c.l.b16 %v432
      %v728 = vunpack.c.l.b16 %v433
      %v729 = vunpack.c.l.b16 %v434
      %v730 = vunpack.c.l.b16 %v435
      %v731 = vunpack.c.l.b16 %v436
      %v732 = vunpack.c.l.b16 %v437
      %v733 = vunpack.c.l.b16 %v438
      %v734 = vunpack.c.l.b16 %v439
      %v735 = vunpack.c.l.b16 %v440
      %v736 = vunpack.c.l.b16 %v441
      %v737 = vunpack.c.l.b16 %v442
      %v738 = vunpack.c.l.b16 %v443
      %v739 = vunpack.c.l.b16 %v444
      %v740 = vunpack.c.l.b16 %v445
      %v741 = vunpack.c.l.b16 %v446
      %v742 = vunpack.c.l.b16 %v447
      %v743 = vunpack.c.l.b16 %v448
      %v744 = vunpack.c.l.b16 %v449
      %v745 = vunpack.c.l.b16 %v450
      %v746 = vunpack.c.l.b16 %v451
      %v747 = vunpack.c.l.b16 %v452
      %v748 = vunpack.c.l.b16 %v453
      %v749 = vunpack.c.l.b16 %v454
      %v750 = vunpack.c.l.b16 %v455
      %v751 = vunpack.c.l.b16 %v456
      %v752 = vunpack.c.l.b16 %v457
      %v753 = vunpack.c.l.b16 %v458
      %v754 = vunpack.c.l.b16 %v459
      %v755 = vunpack.c.l.b16 %v460
      %v756 = vunpack.c.l.b16 %v461
      %v757 = vunpack.c.l.b16 %v462
      %v758 = vunpack.c.l.b16 %v463
      %v759 = vunpack.c.l.b16 %v464
      %v760 = vunpack.c.l.b16 %v465
      %v761 = vpack.c.b16 %v618, %v617
      %v762 = vpack.c.b16 %v620, %v619
      %v763 = vpack.c.b16 %v622, %v621
      %v764 = vpack.c.b16 %v624, %v623
      %v765 = vpack.c.b16 %v626, %v625
      %v766 = vpack.c.b16 %v628, %v627
      %v767 = vpack.c.b16 %v630, %v629
      %v768 = vpack.c.b16 %v632, %v631
      %v769 = vpack.c.b16 %v634, %v633
      %v770 = vpack.c.b16 %v636, %v635
      %v771 = vpack.c.b16 %v638, %v637
      %v772 = vpack.c.b16 %v640, %v639
      %v773 = vpack.c.b16 %v642, %v641
      %v774 = vpack.c.b16 %v644, %v643
      %v775 = vpack.c.b16 %v646, %v645
      %v776 = vpack.c.b16 %v648, %v647
      %v777 = vpack.c.b16 %v650, %v649
      %v778 = vpack.c.b16 %v652, %v651
      %v779 = vpack.c.b16 %v654, %v653
      %v780 = vpack.c.b16 %v656, %v655
      %v781 = vpack.c.b16 %v658, %v657
      %v782 = vpack.c.b16 %v660, %v659
      %v783 = vpack.c.b16 %v662, %v661
      %v784 = vpack.c.b16 %v664, %v663
      %v785 = vpack.c.b16 %v666, %v665
      %v786 = vpack.c.b16 %v668, %v667
      %v787 = vpack.c.b16 %v670, %v669
      %v788 = vpack.c.b16 %v672, %v671
      %v789 = vpack.c.b16 %v674, %v673
      %v790 = vpack.c.b16 %v676, %v675
      %v791 = vpack.c.b16 %v678, %v677
      %v792 = vpack.c.b16 %v680, %v679
      %v793 = vpack.c.b16 %v682, %v681
      %v794 = vpack.c.b16 %v684, %v683
      %v795 = vpack.c.b16 %v686, %v685
      %v796 = vpack.c.b16 %v688, %v687
      %v797 = vpack.c.b16 %v690, %v689
      %v798 = vpack.c.b16 %v692, %v691
      %v799 = vpack.c.b16 %v694, %v693
      %v800 = vpack.c.b16 %v696, %v695
      %v801 = vpack.c.b16 %v698, %v697
      %v802 = vpack.c.b16 %v700, %v699
      %v803 = vpack.c.b16 %v702, %v701
      %v804 = vpack.c.b16 %v704, %v703
      %v805 = vpack.c.b16 %v706, %v705
      %v806 = vpack.c.b16 %v708, %v707
      %v807 = vpack.c.b16 %v710, %v709
      %v808 = vpack.c.b16 %v712, %v711
      %v809 = vpack.c.b16 %v714, %v713
      %v810 = vpack.c.b16 %v716, %v715
      %v811 = vpack.c.b16 %v718, %v717
      %v812 = vpack.c.b16 %v720, %v719
      %v813 = vpack.c.b16 %v722, %v721
      %v814 = vpack.c.b16 %v724, %v723
      %v815 = vpack.c.b16 %v726, %v725
      %v816 = vpack.c.b16 %v728, %v727
      %v817 = vpack.c.b16 %v730, %v729
      %v818 = vpack.c.b16 %v732, %v731
      %v819 = vpack.c.b16 %v734, %v733
      %v820 = vpack.c.b16 %v736, %v735
      %v821 = vpack.c.b16 %v738, %v737
      %v822 = vpack.c.b16 %v740, %v739
      %v823 = vpack.c.b16 %v742, %v741
      %v824 = vpack.c.b16 %v744, %v743
      %v825 = vpack.c.b16 %v746, %v745
      %v826 = vpack.c.b16 %v748, %v747
      %v827 = vpack.c.b16 %v750, %v749
      %v828 = vpack.c.b16 %v752, %v751
      %v829 = vpack.c.b16 %v754, %v753
      %v830 = vpack.c.b16 %v756, %v755
      %v831 = vpack.c.b16 %v758, %v757
      %v832 = vpack.c.b16 %v760, %v759
      %905 = vmatprep.subr.bf16.mxu0 0
      %906 = vmatpush1.bf16.msra.mxu0 %v761
      %907 = vmatprep.subr.bf16.mxu0 0
      %908 = vmatpush1.bf16.msra.mxu0 %v762
      %909 = vmatprep.subr.bf16.mxu0 0
      %910 = vmatpush1.bf16.msra.mxu0 %v763
      %911 = vmatprep.subr.bf16.mxu0 0
      %912 = vmatpush1.bf16.msra.mxu0 %v764
      %913 = vmatprep.subr.bf16.mxu0 0
      %914 = vmatpush1.bf16.msra.mxu0 %v765
      %915 = vmatprep.subr.bf16.mxu0 0
      %916 = vmatpush1.bf16.msra.mxu0 %v766
      %917 = vmatprep.subr.bf16.mxu0 0
      %918 = vmatpush1.bf16.msra.mxu0 %v767
      %919 = vmatprep.subr.bf16.mxu0 0
      %920 = vmatpush1.bf16.msra.mxu0 %v768
      %921 = vmatprep.subr.bf16.mxu0 0
      %922 = vmatpush1.bf16.msra.mxu0 %v769
      %923 = vmatprep.subr.bf16.mxu0 0
      %924 = vmatpush1.bf16.msra.mxu0 %v770
      %925 = vmatprep.subr.bf16.mxu0 0
      %926 = vmatpush1.bf16.msra.mxu0 %v771
      %927 = vmatprep.subr.bf16.mxu0 0
      %928 = vmatpush1.bf16.msra.mxu0 %v772
      %929 = vmatprep.subr.bf16.mxu0 0
      %930 = vmatpush1.bf16.msra.mxu0 %v773
      %931 = vmatprep.subr.bf16.mxu0 0
      %932 = vmatpush1.bf16.msra.mxu0 %v774
      %933 = vmatprep.subr.bf16.mxu0 0
      %934 = vmatpush1.bf16.msra.mxu0 %v775
      %935 = vmatprep.subr.bf16.mxu0 0
      %936 = vmatpush1.bf16.msra.mxu0 %v776
      %937 = vmatprep.mubr.bf16.mxu0 %v272
      %938 = vmatmul.mubr.bf16.gmra.mrb[0].mxu0 %v255
      %v939 = vpop.f32.mrb[0].mxu0
      %v940 = vadd.f32 %v471, %v939
      %v941 = vpop.f32.mrb[0].mxu0
      %v942 = vpop.f32.mrb[0].mxu0
      %v943 = vpop.f32.mrb[0].mxu0
      %944 = vdwg.mxu0
      %945 = vmatprep.subr.bf16.mxu0 0
      %946 = vmatpush1.bf16.msra.mxu0 %v777
      %947 = vmatprep.subr.bf16.mxu0 0
      %948 = vmatpush1.bf16.msra.mxu0 %v778
      %949 = vmatprep.subr.bf16.mxu0 0
      %950 = vmatpush1.bf16.msra.mxu0 %v779
      %951 = vmatprep.subr.bf16.mxu0 0
      %952 = vmatpush1.bf16.msra.mxu0 %v780
      %953 = vmatprep.subr.bf16.mxu0 0
      %954 = vmatpush1.bf16.msra.mxu0 %v781
      %955 = vmatprep.subr.bf16.mxu0 0
      %956 = vmatpush1.bf16.msra.mxu0 %v782
      %957 = vmatprep.subr.bf16.mxu0 0
      %958 = vmatpush1.bf16.msra.mxu0 %v783
      %959 = vmatprep.subr.bf16.mxu0 0
      %960 = vmatpush1.bf16.msra.mxu0 %v784
      %961 = vmatprep.subr.bf16.mxu0 0
      %962 = vmatpush1.bf16.msra.mxu0 %v785
      %963 = vmatprep.subr.bf16.mxu0 0
      %964 = vmatpush1.bf16.msra.mxu0 %v786
      %965 = vmatprep.subr.bf16.mxu0 0
      %966 = vmatpush1.bf16.msra.mxu0 %v787
      %967 = vmatprep.subr.bf16.mxu0 0
      %968 = vmatpush1.bf16.msra.mxu0 %v788
      %969 = vmatprep.subr.bf16.mxu0 0
      %970 = vmatpush1.bf16.msra.mxu0 %v789
      %971 = vmatprep.subr.bf16.mxu0 0
      %972 = vmatpush1.bf16.msra.mxu0 %v790
      %973 = vmatprep.subr.bf16.mxu0 0
      %974 = vmatpush1.bf16.msra.mxu0 %v791
      %975 = vmatprep.subr.bf16.mxu0 0
      %976 = vmatpush1.bf16.msra.mxu0 %v792
      %977 = vmatprep.mubr.bf16.mxu0 %v280
      %978 = vmatmul.mubr.bf16.gmra.mrb[0].mxu0 %v278
      %v979 = vpop.f32.mrb[0].mxu0
      %v980 = vadd.f32 %v940, %v979
      %v981 = vpop.f32.mrb[0].mxu0
      %v982 = vpop.f32.mrb[0].mxu0
      %v983 = vpop.f32.mrb[0].mxu0
      %984 = vdwg.mxu0
      %985 = vmatprep.subr.bf16.mxu0 0
      %986 = vmatpush1.bf16.msra.mxu0 %v793
      %987 = vmatprep.subr.bf16.mxu0 0
      %988 = vmatpush1.bf16.msra.mxu0 %v794
      %989 = vmatprep.subr.bf16.mxu0 0
      %990 = vmatpush1.bf16.msra.mxu0 %v795
      %991 = vmatprep.subr.bf16.mxu0 0
      %992 = vmatpush1.bf16.msra.mxu0 %v796
      %993 = vmatprep.subr.bf16.mxu0 0
      %994 = vmatpush1.bf16.msra.mxu0 %v797
      %995 = vmatprep.subr.bf16.mxu0 0
      %996 = vmatpush1.bf16.msra.mxu0 %v798
      %997 = vmatprep.subr.bf16.mxu0 0
      %998 = vmatpush1.bf16.msra.mxu0 %v799
      %999 = vmatprep.subr.bf16.mxu0 0
      %1000 = vmatpush1.bf16.msra.mxu0 %v800
      %1001 = vmatprep.subr.bf16.mxu0 0
      %1002 = vmatpush1.bf16.msra.mxu0 %v801
      %1003 = vmatprep.subr.bf16.mxu0 0
      %1004 = vmatpush1.bf16.msra.mxu0 %v802
      %1005 = vmatprep.subr.bf16.mxu0 0
      %1006 = vmatpush1.bf16.msra.mxu0 %v803
      %1007 = vmatprep.subr.bf16.mxu0 0
      %1008 = vmatpush1.bf16.msra.mxu0 %v804
      %1009 = vmatprep.subr.bf16.mxu0 0
      %1010 = vmatpush1.bf16.msra.mxu0 %v805
      %1011 = vmatprep.subr.bf16.mxu0 0
      %1012 = vmatpush1.bf16.msra.mxu0 %v806
      %1013 = vmatprep.subr.bf16.mxu0 0
      %1014 = vmatpush1.bf16.msra.mxu0 %v807
      %1015 = vmatprep.subr.bf16.mxu0 0
      %1016 = vmatpush1.bf16.msra.mxu0 %v808
      %1017 = vmatprep.mubr.bf16.mxu0 %v299
      %1018 = vmatmul.mubr.bf16.gmra.mrb[0].mxu0 %v294
      %v1019 = vpop.f32.mrb[0].mxu0
      %v1020 = vadd.f32 %v980, %v1019
      %v1021 = vpop.f32.mrb[0].mxu0
      %v1022 = vpop.f32.mrb[0].mxu0
      %v1023 = vpop.f32.mrb[0].mxu0
      %1024 = vdwg.mxu0
      %1025 = vmatprep.subr.bf16.mxu0 0
      %1026 = vmatpush1.bf16.msra.mxu0 %v809
      %1027 = vmatprep.subr.bf16.mxu0 0
      %1028 = vmatpush1.bf16.msra.mxu0 %v810
      %1029 = vmatprep.subr.bf16.mxu0 0
      %1030 = vmatpush1.bf16.msra.mxu0 %v811
      %1031 = vmatprep.subr.bf16.mxu0 0
      %1032 = vmatpush1.bf16.msra.mxu0 %v812
      %1033 = vmatprep.subr.bf16.mxu0 0
      %1034 = vmatpush1.bf16.msra.mxu0 %v813
      %1035 = vmatprep.subr.bf16.mxu0 0
      %1036 = vmatpush1.bf16.msra.mxu0 %v814
      %1037 = vmatprep.subr.bf16.mxu0 0
      %1038 = vmatpush1.bf16.msra.mxu0 %v815
      %1039 = vmatprep.subr.bf16.mxu0 0
      %1040 = vmatpush1.bf16.msra.mxu0 %v816
      %1041 = vmatprep.subr.bf16.mxu0 0
      %1042 = vmatpush1.bf16.msra.mxu0 %v817
      %1043 = vmatprep.subr.bf16.mxu0 0
      %1044 = vmatpush1.bf16.msra.mxu0 %v818
      %1045 = vmatprep.subr.bf16.mxu0 0
      %1046 = vmatpush1.bf16.msra.mxu0 %v819
      %1047 = vmatprep.subr.bf16.mxu0 0
      %1048 = vmatpush1.bf16.msra.mxu0 %v820
      %1049 = vmatprep.subr.bf16.mxu0 0
      %1050 = vmatpush1.bf16.msra.mxu0 %v821
      %1051 = vmatprep.subr.bf16.mxu0 0
      %1052 = vmatpush1.bf16.msra.mxu0 %v822
      %1053 = vmatprep.subr.bf16.mxu0 0
      %1054 = vmatpush1.bf16.msra.mxu0 %v823
      %1055 = vmatprep.subr.bf16.mxu0 0
      %1056 = vmatpush1.bf16.msra.mxu0 %v824
      %1057 = vmatprep.mubr.bf16.mxu0 %v315
      %1058 = vmatmul.mubr.bf16.gmra.mrb[0].mxu0 %v301
      %v1059 = vpop.f32.mrb[0].mxu0
      %v1060 = vadd.f32 %v1020, %v1059
      %v1061 = vpop.f32.mrb[0].mxu0
      %v1062 = vpop.f32.mrb[0].mxu0
      %v1063 = vpop.f32.mrb[0].mxu0
      %1064 = vdwg.mxu0
      %1065 = vmatprep.subr.bf16.mxu0 0
      %1066 = vmatpush1.bf16.msra.mxu0 %v825
      %1067 = vmatprep.subr.bf16.mxu0 0
      %1068 = vmatpush1.bf16.msra.mxu0 %v826
      %1069 = vmatprep.subr.bf16.mxu0 0
      %1070 = vmatpush1.bf16.msra.mxu0 %v827
      %1071 = vmatprep.subr.bf16.mxu0 0
      %1072 = vmatpush1.bf16.msra.mxu0 %v828
      %1073 = vmatprep.subr.bf16.mxu0 0
      %1074 = vmatpush1.bf16.msra.mxu0 %v829
      %1075 = vmatprep.subr.bf16.mxu0 0
      %1076 = vmatpush1.bf16.msra.mxu0 %v830
      %1077 = vmatprep.subr.bf16.mxu0 0
      %1078 = vmatpush1.bf16.msra.mxu0 %v831
      %1079 = vmatprep.subr.bf16.mxu0 0
      %1080 = vmatpush1.bf16.msra.mxu0 %v832
      %1081 = vmatprep.subr.bf16.mxu0 0
      %1082 = vmatpush1.bf16.msra.mxu0 0
      %1083 = vmatprep.subr.bf16.mxu0 0
      %1084 = vmatpush1.bf16.msra.mxu0 0
      %1085 = vmatprep.subr.bf16.mxu0 0
      %1086 = vmatpush1.bf16.msra.mxu0 0
      %1087 = vmatprep.subr.bf16.mxu0 0
      %1088 = vmatpush1.bf16.msra.mxu0 0
      %1089 = vmatprep.subr.bf16.mxu0 0
      %1090 = vmatpush1.bf16.msra.mxu0 0
      %1091 = vmatprep.subr.bf16.mxu0 0
      %1092 = vmatpush1.bf16.msra.mxu0 0
      %1093 = vmatprep.subr.bf16.mxu0 0
      %1094 = vmatpush1.bf16.msra.mxu0 0
      %1095 = vmatprep.subr.bf16.mxu0 0
      %1096 = vmatpush1.bf16.msra.mxu0 0
      %1097 = vmatprep.mubr.bf16.mxu0 0
      %1098 = vmatmul.mubr.bf16.gmra.mrb[0].mxu0 %v320
      %v1099 = vpop.f32.mrb[0].mxu0
      %v1100 = vadd.f32 %v1060, %v1099
      %v1101 = vpop.f32.mrb[0].mxu0
      %v1102 = vpop.f32.mrb[0].mxu0
      %v1103 = vpop.f32.mrb[0].mxu0
      %1104 = vdwg.mxu0
      %v1105 = vmax.f32 %v1100, 0.0
      %v1106 = vpack.c.bf16 %v1105, %v1105
      %1107 = vst [vmem:[%s253] sm:$0xf] %v1106
      %p1108 = scmp.lt.s32.totalorder %s16, 1
      %s1109 = scalar_select %p1108, %s16, 1
      %s1110 = smul.addr %s1109, 4
      %s1111 = scalar_lea.vmem %s5, %s1110
      // Predicated region
      $region41: #{_detect_jit.15} parent=39 // pred_check
        %p1112 = pneg %p154
      $region42: #{_detect_jit.15} parent=39 // pred_check_branch
        %1114 = sbr.rel (%p1112) target = $region44
      $region43: #{_detect_jit.15} parent=39 // pred_region
        _
      $region44: #{_detect_jit.15} parent=39 // pred_fallthru
        _
    $region40: #{_detect_jit.15} parent=5 // pred_fallthru
      _
    %p1115 = scmp.le.s32.totalorder 2, %s11
    // Predicated region
    $region45: #{_detect_jit.15} parent=5 // pred_check
      %p1116 = pneg %p1115
    $region46: #{_detect_jit.15} parent=5 // pred_check_branch
      %1118 = sbr.rel (%p1116) target = $region48
    $region47: #{_detect_jit.15} parent=5 // pred_region
      %s1119 = ssub.s32 %s11, 2
      // Predicated region
      $region49: #{_detect_jit.15} parent=47 // pred_check
        %p1120 = pneg %p160
      $region50: #{_detect_jit.15} parent=47 // pred_check_branch
        %1122 = sbr.rel (%p1120) target = $region52
      $region51: #{_detect_jit.15} parent=47 // pred_region
        %p1123 = scmp.lt.s32.totalorder %s17, 1
        %s1124 = scalar_select %p1123, %s17, 1
        %s1125 = smul.addr %s1124, 4
        %s1126 = scalar_lea.vmem %s5, %s1125
      $region52: #{_detect_jit.15} parent=47 // pred_fallthru
        _
    $region48: #{_detect_jit.15} parent=5 // pred_fallthru
      _
  $region6: #{_detect_jit.15} parent=0 // loop_footer
    %s15 = sadd.s32 1, %s11
  $region7: #{_detect_jit.15} parent=0 // loop_footer_branch
    %10 = sbr.rel target = $region3
  $region8: #{_detect_jit.15} parent=0 // loop_exit
    _

// kernel: _detect_jit.12
$region0: #{_detect_jit.12}
  #allocation0 [shape = 'u32[]', space=smem, size = 0x4, offset = 0x4, fixed_abs, tag = 'smem constant byte address 0x4 - core index']
  #allocation1 [shape = 'u32[144,128]{1,0:T(1,128)}', space=vmem, size = 0x12000, scoped, tag = 'internal scratch']
  %s0 = inlined_call_operand.vmem [shape: bf16[16,32], index: 0, kind: input, shape index: {}]
  %s1 = inlined_call_operand.vmem [shape: bf16[32,128], index: 1, kind: input, shape index: {}]
  %s2 = inlined_call_operand.vmem [shape: f32[1,128], index: 2, kind: input, shape index: {}]
  %s3 = inlined_call_operand.vmem [shape: bf16[16,128], index: 3, kind: output, shape index: {}]
  %s4 = sld [smem:[#allocation0]]
  $region45: #{_detect_jit.12} parent=0
    _
  %s6 = ssub.s32 1, %s4
  %s7 = scalar_select 0, %s6, %s4
  loop: start=0, step=1, limit=4
  $region2: #{_detect_jit.12} parent=0 // loop_pre_header
    _
  $region3: #{_detect_jit.12} parent=0 // loop_header
    %s9 = sphi 0, %s13
    %p10 = scmp.ge.s32.totalorder %s9, 4
    %s19 = sphi 0, %s21
    %s22 = sphi 0, %s19
    %s23 = sphi 0, %s22
    %s39 = sphi 0, %s23
    %s43 = sphi 0, %s43
    %s45 = sphi 0, %s43
    %s46 = sphi 0, %s45
    %s60 = sphi 0, %s46
    %s64 = sphi 0, %s64
    %s66 = sphi 0, %s64
    %s67 = sphi 0, %s66
    %s81 = sphi 0, %s67
    %s87 = sphi 0, %s89
    %s90 = sphi 0, %s87
    %s91 = sphi 0, %s90
    %s107 = sphi 0, %s91
  $region4: #{_detect_jit.12} parent=0 // loop_header_branch
    %12 = sbr.rel (%p10) target = $region8
  $region5: #{_detect_jit.12} parent=0 // loop_body
    %s14 = ssub.s32 %s9, 1
    %s15 = ssub.s32 %s9, 2
    %s16 = sadd.s32 %s9, 1
    %s17 = ssub.s32 %s9, %s16
    %p18 = scmp.eq.s32.totalorder %s17, 0
    %s20 = sadd.s32 %s19, 1
    %s21 = scalar_select %p18, %s19, %s20
    %p24 = pneg %p18
    %p25 = scmp.eq.s32.totalorder %s9, 1
    %p26 = por %p24, %p25
    %p27 = scmp.ne.s32.totalorder %s19, %s22
    %p28 = scmp.eq.s32.totalorder %s9, 0
    %p29 = por %p27, %p28
    %p30 = scmp.ne.s32.totalorder %s19, %s22
    %p31 = scmp.eq.s32.totalorder %s14, 1
    %p32 = por %p30, %p31
    %p33 = scmp.ne.s32.totalorder %s22, %s23
    %p34 = scmp.eq.s32.totalorder %s14, 0
    %p35 = por %p33, %p34
    %p36 = scmp.ne.s32.totalorder %s22, %s23
    %p37 = scmp.eq.s32.totalorder %s15, 1
    %p38 = por %p36, %p37
    %p40 = scmp.ne.s32.totalorder %s23, %s39
    %p41 = scmp.eq.s32.totalorder %s15, 0
    %p42 = por %p40, %p41
    %s44 = sadd.s32 %s43, 1
    %p47 = scmp.eq.s32.totalorder %s9, 1
    %p48 = scmp.ne.s32.totalorder %s43, %s45
    %p49 = scmp.eq.s32.totalorder %s9, 0
    %p50 = por %p48, %p49
    %p51 = scmp.ne.s32.totalorder %s43, %s45
    %p52 = scmp.eq.s32.totalorder %s14, 1
    %p53 = por %p51, %p52
    %p54 = scmp.ne.s32.totalorder %s45, %s46
    %p55 = scmp.eq.s32.totalorder %s14, 0
    %p56 = por %p54, %p55
    %p57 = scmp.ne.s32.totalorder %s45, %s46
    %p58 = scmp.eq.s32.totalorder %s15, 1
    %p59 = por %p57, %p58
    %p61 = scmp.ne.s32.totalorder %s46, %s60
    %p62 = scmp.eq.s32.totalorder %s15, 0
    %p63 = por %p61, %p62
    %s65 = sadd.s32 %s64, 1
    %p68 = scmp.eq.s32.totalorder %s9, 1
    %p69 = scmp.ne.s32.totalorder %s64, %s66
    %p70 = scmp.eq.s32.totalorder %s9, 0
    %p71 = por %p69, %p70
    %p72 = scmp.ne.s32.totalorder %s64, %s66
    %p73 = scmp.eq.s32.totalorder %s14, 1
    %p74 = por %p72, %p73
    %p75 = scmp.ne.s32.totalorder %s66, %s67
    %p76 = scmp.eq.s32.totalorder %s14, 0
    %p77 = por %p75, %p76
    %p78 = scmp.ne.s32.totalorder %s66, %s67
    %p79 = scmp.eq.s32.totalorder %s15, 1
    %p80 = por %p78, %p79
    %p82 = scmp.ne.s32.totalorder %s67, %s81
    %p83 = scmp.eq.s32.totalorder %s15, 0
    %p84 = por %p82, %p83
    %s85 = ssub.s32 %s9, %s16
    %p86 = scmp.eq.s32.totalorder %s85, 0
    %s88 = sadd.s32 %s87, 1
    %s89 = scalar_select %p86, %s87, %s88
    %p92 = pneg %p86
    %p93 = scmp.eq.s32.totalorder %s9, 1
    %p94 = por %p92, %p93
    %p95 = scmp.ne.s32.totalorder %s87, %s90
    %p96 = scmp.eq.s32.totalorder %s9, 0
    %p97 = por %p95, %p96
    %p98 = scmp.ne.s32.totalorder %s87, %s90
    %p99 = scmp.eq.s32.totalorder %s14, 1
    %p100 = por %p98, %p99
    %p101 = scmp.ne.s32.totalorder %s90, %s91
    %p102 = scmp.eq.s32.totalorder %s14, 0
    %p103 = por %p101, %p102
    %p104 = scmp.ne.s32.totalorder %s90, %s91
    %p105 = scmp.eq.s32.totalorder %s15, 1
    %p106 = por %p104, %p105
    %p108 = scmp.ne.s32.totalorder %s91, %s107
    %p109 = scmp.eq.s32.totalorder %s15, 0
    %p110 = por %p108, %p109
    %p111 = scmp.le.s32.totalorder 1, %s9
    %p112 = scmp.lt.s32.totalorder %s9, 3
    %p113 = pnand %p111, %p112
    %p114 = pneg %p113
    // Predicated region
    $region9: #{_detect_jit.12} parent=5 // pred_check
      _
    $region10: #{_detect_jit.12} parent=5 // pred_check_branch
      %116 = sbr.rel (%p113) target = $region12
    $region11: #{_detect_jit.12} parent=5 // pred_region
      %s117 = ssub.s32 %s9, 1
      // Predicated region
      $region13: #{_detect_jit.12} parent=11 // pred_check
        %p118 = pneg %p56
      $region14: #{_detect_jit.12} parent=11 // pred_check_branch
        %120 = sbr.rel (%p118) target = $region16
      $region15: #{_detect_jit.12} parent=11 // pred_region
        _
      $region16: #{_detect_jit.12} parent=11 // pred_fallthru
        _
      // Predicated region
      $region17: #{_detect_jit.12} parent=11 // pred_check
        %p121 = pneg %p77
      $region18: #{_detect_jit.12} parent=11 // pred_check_branch
        %123 = sbr.rel (%p121) target = $region20
      $region19: #{_detect_jit.12} parent=11 // pred_region
        _
      $region20: #{_detect_jit.12} parent=11 // pred_fallthru
        _
    $region12: #{_detect_jit.12} parent=5 // pred_fallthru
      _
    %p124 = scmp.lt.s32.totalorder %s9, 2
    // Predicated region
    $region21: #{_detect_jit.12} parent=5 // pred_check
      %p125 = pneg %p124
    $region22: #{_detect_jit.12} parent=5 // pred_check_branch
      %127 = sbr.rel (%p125) target = $region24
    $region23: #{_detect_jit.12} parent=5 // pred_region
      // Predicated region
      $region25: #{_detect_jit.12} parent=23 // pred_check
        %p128 = pneg %p29
      $region26: #{_detect_jit.12} parent=23 // pred_check_branch
        %130 = sbr.rel (%p128) target = $region28
      $region27: #{_detect_jit.12} parent=23 // pred_region
        %p131 = scmp.lt.s32.totalorder %s9, 1
        %s132 = scalar_select %p131, %s9, 1
        %s133 = smul.addr %s132, 4
        %s134 = scalar_lea.vmem %s0, %s133
      $region28: #{_detect_jit.12} parent=23 // pred_fallthru
        _
    $region24: #{_detect_jit.12} parent=5 // pred_fallthru
      _
    %p135 = scmp.le.s32.totalorder 1, %s9
    %p136 = scmp.lt.s32.totalorder %s9, 3
    %p137 = pnand %p135, %p136
    %p138 = pneg %p137
    // Predicated region
    $region29: #{_detect_jit.12} parent=5 // pred_check
      _
    $region30: #{_detect_jit.12} parent=5 // pred_check_branch
      %140 = sbr.rel (%p137) target = $region32
    $region31: #{_detect_jit.12} parent=5 // pred_region
      %s141 = ssub.s32 %s9, 1
      %p142 = scmp.lt.s32.totalorder %s14, 1
      %s143 = scalar_select %p142, %s14, 1
      %s144 = smul.addr %s143, 4
      %s145 = scalar_lea.vmem %s0, %s144
      %p146 = pneg %p35
      %p147 = pneg %p32
      %p148 = pneg %p56
      %p149 = pneg %p53
      %p150 = pneg %p77
      %p151 = pneg %p74
      %p152 = pneg %p103
      %p153 = pneg %p100
      %p154 = scmp.lt.s32.totalorder %s14, 1
      %s155 = scalar_select %p154, %s14, 1
      %s156 = smul.addr %s155, 4
      %s157 = scalar_lea.vmem %s3, %s156
      %p158 = scmp.lt.s32.totalorder %s14, 1
      %s159 = scalar_select %p158, %s14, 1
      %s160 = smul.addr %s159, 4
      %s161 = scalar_lea.vmem %s0, %s160
      %p162 = scmp.lt.s32.totalorder %s14, 1
      %s163 = scalar_select %p162, %s14, 1
      %s164 = smul.addr %s163, 4
      %s165 = scalar_lea.vmem %s3, %s164
      %v167 = vld [vmem:[%s161] sm:$0xf]
      %v168 = vld [vmem:[%s1] sm:$0xf]
      %v169 = vld [vmem:[%s1 + $0x4] sm:$0xf]
      %v170 = vld [vmem:[%s1 + $0x8] sm:$0xf]
      %v171 = vld [vmem:[%s1 + $0xc] sm:$0xf]
      %v172 = vld [vmem:[%s2] sm:$0x1]
      %v174 = vlaneseq
      %v175 = vshrl.u32 %v174, 7
      %v176 = vsub.s32 0, %v175
      %v177 = vrot.slane %v172, %v176
      %v183 = vunpack.c.l.b16 %v168
      %v184 = vunpack.c.l.b16 %v169
      %v185 = vunpack.c.l.b16 %v170
      %v186 = vunpack.c.l.b16 %v171
      %v187 = vpack.c.b16 %v184, %v183
      %v188 = vpack.c.b16 %v186, %v185
      %vm191 = vcmask 261120
      %v193 = vsel %vm191, %v167, 0
      %195 = vmatprep.subr.bf16.mxu0 0
      %196 = vmatpush1.bf16.msra.mxu0 %v187
      %197 = vmatprep.subr.bf16.mxu0 0
      %198 = vmatpush1.bf16.msra.mxu0 %v188
      %199 = vmatprep.subr.bf16.mxu0 0
      %200 = vmatpush1.bf16.msra.mxu0 0
      %201 = vmatprep.subr.bf16.mxu0 0
      %202 = vmatpush1.bf16.msra.mxu0 0
      %203 = vmatprep.subr.bf16.mxu0 0
      %204 = vmatpush1.bf16.msra.mxu0 0
      %205 = vmatprep.subr.bf16.mxu0 0
      %206 = vmatpush1.bf16.msra.mxu0 0
      %207 = vmatprep.subr.bf16.mxu0 0
      %208 = vmatpush1.bf16.msra.mxu0 0
      %209 = vmatprep.subr.bf16.mxu0 0
      %210 = vmatpush1.bf16.msra.mxu0 0
      %211 = vmatprep.subr.bf16.mxu0 0
      %212 = vmatpush1.bf16.msra.mxu0 0
      %213 = vmatprep.subr.bf16.mxu0 0
      %214 = vmatpush1.bf16.msra.mxu0 0
      %215 = vmatprep.subr.bf16.mxu0 0
      %216 = vmatpush1.bf16.msra.mxu0 0
      %217 = vmatprep.subr.bf16.mxu0 0
      %218 = vmatpush1.bf16.msra.mxu0 0
      %219 = vmatprep.subr.bf16.mxu0 0
      %220 = vmatpush1.bf16.msra.mxu0 0
      %221 = vmatprep.subr.bf16.mxu0 0
      %222 = vmatpush1.bf16.msra.mxu0 0
      %223 = vmatprep.subr.bf16.mxu0 0
      %224 = vmatpush1.bf16.msra.mxu0 0
      %225 = vmatprep.subr.bf16.mxu0 0
      %226 = vmatpush1.bf16.msra.mxu0 0
      %227 = vmatprep.mubr.bf16.mxu0 0
      %228 = vmatmul.mubr.bf16.gmra.mrb[0].mxu0 %v193
      %v229 = vpop.f32.mrb[0].mxu0
      %v230 = vadd.f32 %v177, %v229
      %v231 = vpop.f32.mrb[0].mxu0
      %v232 = vpop.f32.mrb[0].mxu0
      %v233 = vpop.f32.mrb[0].mxu0
      %234 = vdwg.mxu0
      %v235 = vmax.f32 %v230, 0.0
      %v236 = vpack.c.bf16 %v235, %v235
      %237 = vst [vmem:[%s165] sm:$0xf] %v236
      %p238 = scmp.lt.s32.totalorder %s14, 1
      %s239 = scalar_select %p238, %s14, 1
      %s240 = smul.addr %s239, 4
      %s241 = scalar_lea.vmem %s3, %s240
      // Predicated region
      $region33: #{_detect_jit.12} parent=31 // pred_check
        %p242 = pneg %p100
      $region34: #{_detect_jit.12} parent=31 // pred_check_branch
        %244 = sbr.rel (%p242) target = $region36
      $region35: #{_detect_jit.12} parent=31 // pred_region
        _
      $region36: #{_detect_jit.12} parent=31 // pred_fallthru
        _
    $region32: #{_detect_jit.12} parent=5 // pred_fallthru
      _
    %p245 = scmp.le.s32.totalorder 2, %s9
    // Predicated region
    $region37: #{_detect_jit.12} parent=5 // pred_check
      %p246 = pneg %p245
    $region38: #{_detect_jit.12} parent=5 // pred_check_branch
      %248 = sbr.rel (%p246) target = $region40
    $region39: #{_detect_jit.12} parent=5 // pred_region
      %s249 = ssub.s32 %s9, 2
      // Predicated region
      $region41: #{_detect_jit.12} parent=39 // pred_check
        %p250 = pneg %p106
      $region42: #{_detect_jit.12} parent=39 // pred_check_branch
        %252 = sbr.rel (%p250) target = $region44
      $region43: #{_detect_jit.12} parent=39 // pred_region
        %p253 = scmp.lt.s32.totalorder %s15, 1
        %s254 = scalar_select %p253, %s15, 1
        %s255 = smul.addr %s254, 4
        %s256 = scalar_lea.vmem %s3, %s255
      $region44: #{_detect_jit.12} parent=39 // pred_fallthru
        _
    $region40: #{_detect_jit.12} parent=5 // pred_fallthru
      _
  $region6: #{_detect_jit.12} parent=0 // loop_footer
    %s13 = sadd.s32 1, %s9
  $region7: #{_detect_jit.12} parent=0 // loop_footer_branch
    %8 = sbr.rel target = $region3
  $region8: #{_detect_jit.12} parent=0 // loop_exit
    _

// kernel: _detect_jit.21
$region0: #{_detect_jit.21}
  #allocation0 [shape = 'u32[]', space=smem, size = 0x4, offset = 0x4, fixed_abs, tag = 'smem constant byte address 0x4 - core index']
  #allocation1 [shape = 'u32[144,128]{1,0:T(1,128)}', space=vmem, size = 0x12000, scoped, tag = 'internal scratch']
  %s0 = inlined_call_operand.vmem [shape: bf16[8,128], index: 0, kind: input, shape index: {}]
  %s1 = inlined_call_operand.vmem [shape: bf16[32,128], index: 1, kind: input, shape index: {}]
  %s2 = inlined_call_operand.vmem [shape: f32[32,1], index: 2, kind: input, shape index: {}]
  %s3 = inlined_call_operand.vmem [shape: f32[32,8], index: 3, kind: output, shape index: {}]
  %s4 = sld [smem:[#allocation0]]
  $region22: #{_detect_jit.21} parent=0
    _
  %s6 = ssub.s32 1, %s4
  %s7 = scalar_select 0, %s6, %s4
  // Predicated region
  $region2: #{_detect_jit.21} parent=0 // pred_check
    _
  $region3: #{_detect_jit.21} parent=0 // pred_check_branch
    %9 = sbr.rel (0) target = $region5
  $region4: #{_detect_jit.21} parent=0 // pred_region
    _
  $region5: #{_detect_jit.21} parent=0 // pred_fallthru
    _
  // Predicated region
  $region6: #{_detect_jit.21} parent=0 // pred_check
    _
  $region7: #{_detect_jit.21} parent=0 // pred_check_branch
    %11 = sbr.rel (0) target = $region9
  $region8: #{_detect_jit.21} parent=0 // pred_region
    _
  $region9: #{_detect_jit.21} parent=0 // pred_fallthru
    _
  // Predicated region
  $region10: #{_detect_jit.21} parent=0 // pred_check
    _
  $region11: #{_detect_jit.21} parent=0 // pred_check_branch
    %13 = sbr.rel (0) target = $region13
  $region12: #{_detect_jit.21} parent=0 // pred_region
    _
  $region13: #{_detect_jit.21} parent=0 // pred_fallthru
    _
  %v15 = vld [vmem:[%s1] sm:$0xf]
  %v16 = vld [vmem:[%s1 + $0x4] sm:$0xf]
  %v17 = vld [vmem:[%s1 + $0x8] sm:$0xf]
  %v18 = vld [vmem:[%s1 + $0xc] sm:$0xf]
  %v19 = vld [vmem:[%s0] sm:$0xf]
  %v20 = vld [vmem:[%s2] sm:$0xff]
  %v21 = vld [vmem:[%s2 + $0x8] sm:$0xff]
  %v22 = vld [vmem:[%s2 + $0x10] sm:$0xff]
  %v23 = vld [vmem:[%s2 + $0x18] sm:$0xff]
  %25 = vset.pattern.permute.xlu0 0
  %26 = vperm.xlu0 %25, %v20
  %v27 = vpop.permute.xlu0 %26
  %30 = vset.pattern.permute.xlu0 0
  %31 = vperm.xlu0 %30, %v21
  %v32 = vpop.permute.xlu0 %31
  %35 = vset.pattern.permute.xlu0 0
  %36 = vperm.xlu0 %35, %v22
  %v37 = vpop.permute.xlu0 %36
  %40 = vset.pattern.permute.xlu0 0
  %41 = vperm.xlu0 %40, %v23
  %v42 = vpop.permute.xlu0 %41
  %v48 = vunpack.c.l.b16 %v15
  %v49 = vunpack.c.l.b16 %v16
  %v50 = vunpack.c.l.b16 %v17
  %v51 = vunpack.c.l.b16 %v18
  %v52 = vpack.c.b16 %v49, %v48
  %v53 = vpack.c.b16 %v51, %v50
  %56 = vmatprep.subr.bf16.mxu0 0
  %57 = vmatpush1.bf16.xpose.msra.mxu0 %v19
  %58 = vmatprep.subr.bf16.mxu0 0
  %59 = vmatpush1.bf16.xpose.msra.mxu0 0
  %60 = vmatprep.subr.bf16.mxu0 0
  %61 = vmatpush1.bf16.xpose.msra.mxu0 0
  %62 = vmatprep.subr.bf16.mxu0 0
  %63 = vmatpush1.bf16.xpose.msra.mxu0 0
  %64 = vmatprep.subr.bf16.mxu0 0
  %65 = vmatpush1.bf16.xpose.msra.mxu0 0
  %66 = vmatprep.subr.bf16.mxu0 0
  %67 = vmatpush1.bf16.xpose.msra.mxu0 0
  %68 = vmatprep.subr.bf16.mxu0 0
  %69 = vmatpush1.bf16.xpose.msra.mxu0 0
  %70 = vmatprep.subr.bf16.mxu0 0
  %71 = vmatpush1.bf16.xpose.msra.mxu0 0
  %72 = vmatprep.subr.bf16.mxu0 0
  %73 = vmatpush1.bf16.xpose.msra.mxu0 0
  %74 = vmatprep.subr.bf16.mxu0 0
  %75 = vmatpush1.bf16.xpose.msra.mxu0 0
  %76 = vmatprep.subr.bf16.mxu0 0
  %77 = vmatpush1.bf16.xpose.msra.mxu0 0
  %78 = vmatprep.subr.bf16.mxu0 0
  %79 = vmatpush1.bf16.xpose.msra.mxu0 0
  %80 = vmatprep.subr.bf16.mxu0 0
  %81 = vmatpush1.bf16.xpose.msra.mxu0 0
  %82 = vmatprep.subr.bf16.mxu0 0
  %83 = vmatpush1.bf16.xpose.msra.mxu0 0
  %84 = vmatprep.subr.bf16.mxu0 0
  %85 = vmatpush1.bf16.xpose.msra.mxu0 0
  %86 = vmatprep.subr.bf16.mxu0 0
  %87 = vmatpush1.bf16.xpose.msra.mxu0 0
  %88 = vmatprep.mubr.bf16.mxu0 0
  %89 = vmatmul.mubr.bf16.gmra.mrb[0].mxu0 %v52
  %v90 = vpop.f32.mrb[0].mxu0
  %v91 = vadd.f32 %v27, %v90
  %v92 = vpop.f32.mrb[0].mxu0
  %v93 = vpop.f32.mrb[0].mxu0
  %v94 = vadd.f32 %v32, %v93
  %v95 = vpop.f32.mrb[0].mxu0
  %96 = vmatprep.mubr.bf16.mxu0 0
  %97 = vmatmul.mubr.bf16.gmra.mrb[0].mxu0 %v53
  %v98 = vpop.f32.mrb[0].mxu0
  %v99 = vadd.f32 %v37, %v98
  %v100 = vpop.f32.mrb[0].mxu0
  %v101 = vpop.f32.mrb[0].mxu0
  %v102 = vadd.f32 %v42, %v101
  %v103 = vpop.f32.mrb[0].mxu0
  %104 = vdwg.mxu0
  %vm105 = vcmask 64512
  %106 = vst.msk [vmem:[%s3] sm:$0xff] %vm105, %v91
  %107 = vst.msk [vmem:[%s3 + $0x8] sm:$0xff] %vm105, %v94
  %108 = vst.msk [vmem:[%s3 + $0x10] sm:$0xff] %vm105, %v99
  %109 = vst.msk [vmem:[%s3 + $0x18] sm:$0xff] %vm105, %v102
  // Predicated region
  $region14: #{_detect_jit.21} parent=0 // pred_check
    _
  $region15: #{_detect_jit.21} parent=0 // pred_check_branch
    %111 = sbr.rel (0) target = $region17
  $region16: #{_detect_jit.21} parent=0 // pred_region
    _
  $region17: #{_detect_jit.21} parent=0 // pred_fallthru
    _
  // Predicated region
  $region18: #{_detect_jit.21} parent=0 // pred_check
    _
  $region19: #{_detect_jit.21} parent=0 // pred_check_branch
    %113 = sbr.rel (0) target = $region21
  $region20: #{_detect_jit.21} parent=0 // pred_region
    _
  $region21: #{_detect_jit.21} parent=0 // pred_fallthru
    _

// kernel: _detect_jit.20
$region0: #{_detect_jit.20}
  #allocation0 [shape = 'u32[]', space=smem, size = 0x4, offset = 0x4, fixed_abs, tag = 'smem constant byte address 0x4 - core index']
  #allocation1 [shape = 'u32[144,128]{1,0:T(1,128)}', space=vmem, size = 0x12000, scoped, tag = 'internal scratch']
  %s0 = inlined_call_operand.vmem [shape: bf16[16,128], index: 0, kind: input, shape index: {}]
  %s1 = inlined_call_operand.vmem [shape: bf16[32,128], index: 1, kind: input, shape index: {}]
  %s2 = inlined_call_operand.vmem [shape: f32[32,1], index: 2, kind: input, shape index: {}]
  %s3 = inlined_call_operand.vmem [shape: f32[32,16], index: 3, kind: output, shape index: {}]
  %s4 = sld [smem:[#allocation0]]
  $region22: #{_detect_jit.20} parent=0
    _
  %s6 = ssub.s32 1, %s4
  %s7 = scalar_select 0, %s6, %s4
  // Predicated region
  $region2: #{_detect_jit.20} parent=0 // pred_check
    _
  $region3: #{_detect_jit.20} parent=0 // pred_check_branch
    %9 = sbr.rel (0) target = $region5
  $region4: #{_detect_jit.20} parent=0 // pred_region
    _
  $region5: #{_detect_jit.20} parent=0 // pred_fallthru
    _
  // Predicated region
  $region6: #{_detect_jit.20} parent=0 // pred_check
    _
  $region7: #{_detect_jit.20} parent=0 // pred_check_branch
    %11 = sbr.rel (0) target = $region9
  $region8: #{_detect_jit.20} parent=0 // pred_region
    _
  $region9: #{_detect_jit.20} parent=0 // pred_fallthru
    _
  // Predicated region
  $region10: #{_detect_jit.20} parent=0 // pred_check
    _
  $region11: #{_detect_jit.20} parent=0 // pred_check_branch
    %13 = sbr.rel (0) target = $region13
  $region12: #{_detect_jit.20} parent=0 // pred_region
    _
  $region13: #{_detect_jit.20} parent=0 // pred_fallthru
    _
  %v15 = vld [vmem:[%s1] sm:$0xf]
  %v16 = vld [vmem:[%s1 + $0x4] sm:$0xf]
  %v17 = vld [vmem:[%s1 + $0x8] sm:$0xf]
  %v18 = vld [vmem:[%s1 + $0xc] sm:$0xf]
  %v19 = vld [vmem:[%s0] sm:$0xf]
  %v20 = vld [vmem:[%s0 + $0x4] sm:$0xf]
  %v21 = vld [vmem:[%s2] sm:$0xff]
  %v22 = vld [vmem:[%s2 + $0x8] sm:$0xff]
  %v23 = vld [vmem:[%s2 + $0x10] sm:$0xff]
  %v24 = vld [vmem:[%s2 + $0x18] sm:$0xff]
  %26 = vset.pattern.permute.xlu0 0
  %27 = vperm.xlu0 %26, %v21
  %v28 = vpop.permute.xlu0 %27
  %31 = vset.pattern.permute.xlu0 0
  %32 = vperm.xlu0 %31, %v22
  %v33 = vpop.permute.xlu0 %32
  %36 = vset.pattern.permute.xlu0 0
  %37 = vperm.xlu0 %36, %v23
  %v38 = vpop.permute.xlu0 %37
  %41 = vset.pattern.permute.xlu0 0
  %42 = vperm.xlu0 %41, %v24
  %v43 = vpop.permute.xlu0 %42
  %v49 = vunpack.c.l.b16 %v15
  %v50 = vunpack.c.l.b16 %v16
  %v51 = vunpack.c.l.b16 %v17
  %v52 = vunpack.c.l.b16 %v18
  %v53 = vpack.c.b16 %v50, %v49
  %v54 = vpack.c.b16 %v52, %v51
  %v59 = vunpack.c.l.b16 %v19
  %v60 = vunpack.c.l.b16 %v20
  %v61 = vpack.c.b16 %v60, %v59
  %63 = vmatprep.subr.bf16.mxu0 0
  %64 = vmatpush1.bf16.xpose.msra.mxu0 %v61
  %65 = vmatprep.subr.bf16.mxu0 0
  %66 = vmatpush1.bf16.xpose.msra.mxu0 0
  %67 = vmatprep.subr.bf16.mxu0 0
  %68 = vmatpush1.bf16.xpose.msra.mxu0 0
  %69 = vmatprep.subr.bf16.mxu0 0
  %70 = vmatpush1.bf16.xpose.msra.mxu0 0
  %71 = vmatprep.subr.bf16.mxu0 0
  %72 = vmatpush1.bf16.xpose.msra.mxu0 0
  %73 = vmatprep.subr.bf16.mxu0 0
  %74 = vmatpush1.bf16.xpose.msra.mxu0 0
  %75 = vmatprep.subr.bf16.mxu0 0
  %76 = vmatpush1.bf16.xpose.msra.mxu0 0
  %77 = vmatprep.subr.bf16.mxu0 0
  %78 = vmatpush1.bf16.xpose.msra.mxu0 0
  %79 = vmatprep.subr.bf16.mxu0 0
  %80 = vmatpush1.bf16.xpose.msra.mxu0 0
  %81 = vmatprep.subr.bf16.mxu0 0
  %82 = vmatpush1.bf16.xpose.msra.mxu0 0
  %83 = vmatprep.subr.bf16.mxu0 0
  %84 = vmatpush1.bf16.xpose.msra.mxu0 0
  %85 = vmatprep.subr.bf16.mxu0 0
  %86 = vmatpush1.bf16.xpose.msra.mxu0 0
  %87 = vmatprep.subr.bf16.mxu0 0
  %88 = vmatpush1.bf16.xpose.msra.mxu0 0
  %89 = vmatprep.subr.bf16.mxu0 0
  %90 = vmatpush1.bf16.xpose.msra.mxu0 0
  %91 = vmatprep.subr.bf16.mxu0 0
  %92 = vmatpush1.bf16.xpose.msra.mxu0 0
  %93 = vmatprep.subr.bf16.mxu0 0
  %94 = vmatpush1.bf16.xpose.msra.mxu0 0
  %95 = vmatprep.mubr.bf16.mxu0 0
  %96 = vmatmul.mubr.bf16.gmra.mrb[0].mxu0 %v53
  %v97 = vpop.f32.mrb[0].mxu0
  %v98 = vadd.f32 %v28, %v97
  %v99 = vpop.f32.mrb[0].mxu0
  %v100 = vpop.f32.mrb[0].mxu0
  %v101 = vadd.f32 %v33, %v100
  %v102 = vpop.f32.mrb[0].mxu0
  %103 = vmatprep.mubr.bf16.mxu0 0
  %104 = vmatmul.mubr.bf16.gmra.mrb[0].mxu0 %v54
  %v105 = vpop.f32.mrb[0].mxu0
  %v106 = vadd.f32 %v38, %v105
  %v107 = vpop.f32.mrb[0].mxu0
  %v108 = vpop.f32.mrb[0].mxu0
  %v109 = vadd.f32 %v43, %v108
  %v110 = vpop.f32.mrb[0].mxu0
  %111 = vdwg.mxu0
  %vm112 = vcmask 130048
  %113 = vst.msk [vmem:[%s3] sm:$0xff] %vm112, %v98
  %114 = vst.msk [vmem:[%s3 + $0x8] sm:$0xff] %vm112, %v101
  %115 = vst.msk [vmem:[%s3 + $0x10] sm:$0xff] %vm112, %v106
  %116 = vst.msk [vmem:[%s3 + $0x18] sm:$0xff] %vm112, %v109
  // Predicated region
  $region14: #{_detect_jit.20} parent=0 // pred_check
    _
  $region15: #{_detect_jit.20} parent=0 // pred_check_branch
    %118 = sbr.rel (0) target = $region17
  $region16: #{_detect_jit.20} parent=0 // pred_region
    _
  $region17: #{_detect_jit.20} parent=0 // pred_fallthru
    _
  // Predicated region
  $region18: #{_detect_jit.20} parent=0 // pred_check
    _
  $region19: #{_detect_jit.20} parent=0 // pred_check_branch
    %120 = sbr.rel (0) target = $region21
  $region20: #{_detect_jit.20} parent=0 // pred_region
    _
  $region21: #{_detect_jit.20} parent=0 // pred_fallthru
    _

// kernel: _detect_jit.16
$region0: #{_detect_jit.16}
  #allocation0 [shape = 'u32[]', space=smem, size = 0x4, offset = 0x4, fixed_abs, tag = 'smem constant byte address 0x4 - core index']
  #allocation1 [shape = 'u32[144,128]{1,0:T(1,128)}', space=vmem, size = 0x12000, scoped, tag = 'internal scratch']
  %s0 = inlined_call_operand.vmem [shape: bf16[32,128], index: 0, kind: input, shape index: {}]
  %s1 = inlined_call_operand.vmem [shape: bf16[32,128], index: 1, kind: input, shape index: {}]
  %s2 = inlined_call_operand.vmem [shape: bf16[32,128], index: 2, kind: input, shape index: {}]
  %s3 = inlined_call_operand.vmem [shape: bf16[1152,128], index: 3, kind: input, shape index: {}]
  %s4 = inlined_call_operand.vmem [shape: f32[1,128], index: 4, kind: input, shape index: {}]
  %s5 = inlined_call_operand.vmem [shape: bf16[32,128], index: 5, kind: output, shape index: {}]
  %s6 = sld [smem:[#allocation0]]
  $region53: #{_detect_jit.16} parent=0
    _
  %s8 = ssub.s32 1, %s6
  %s9 = scalar_select 0, %s8, %s6
  loop: start=0, step=1, limit=4
  $region2: #{_detect_jit.16} parent=0 // loop_pre_header
    _
  $region3: #{_detect_jit.16} parent=0 // loop_header
    %s11 = sphi 0, %s15
    %p12 = scmp.ge.s32.totalorder %s11, 4
    %s21 = sphi 0, %s23
    %s24 = sphi 0, %s21
    %s25 = sphi 0, %s24
    %s41 = sphi 0, %s25
    %s47 = sphi 0, %s49
    %s50 = sphi 0, %s47
    %s51 = sphi 0, %s50
    %s67 = sphi 0, %s51
    %s73 = sphi 0, %s75
    %s76 = sphi 0, %s73
    %s77 = sphi 0, %s76
    %s93 = sphi 0, %s77
    %s97 = sphi 0, %s97
    %s99 = sphi 0, %s97
    %s100 = sphi 0, %s99
    %s114 = sphi 0, %s100
    %s118 = sphi 0, %s118
    %s120 = sphi 0, %s118
    %s121 = sphi 0, %s120
    %s135 = sphi 0, %s121
    %s141 = sphi 0, %s143
    %s144 = sphi 0, %s141
    %s145 = sphi 0, %s144
    %s161 = sphi 0, %s145
  $region4: #{_detect_jit.16} parent=0 // loop_header_branch
    %14 = sbr.rel (%p12) target = $region8
  $region5: #{_detect_jit.16} parent=0 // loop_body
    %s16 = ssub.s32 %s11, 1
    %s17 = ssub.s32 %s11, 2
    %s18 = sadd.s32 %s11, 1
    %s19 = ssub.s32 %s11, %s18
    %p20 = scmp.eq.s32.totalorder %s19, 0
    %s22 = sadd.s32 %s21, 1
    %s23 = scalar_select %p20, %s21, %s22
    %p26 = pneg %p20
    %p27 = scmp.eq.s32.totalorder %s11, 1
    %p28 = por %p26, %p27
    %p29 = scmp.ne.s32.totalorder %s21, %s24
    %p30 = scmp.eq.s32.totalorder %s11, 0
    %p31 = por %p29, %p30
    %p32 = scmp.ne.s32.totalorder %s21, %s24
    %p33 = scmp.eq.s32.totalorder %s16, 1
    %p34 = por %p32, %p33
    %p35 = scmp.ne.s32.totalorder %s24, %s25
    %p36 = scmp.eq.s32.totalorder %s16, 0
    %p37 = por %p35, %p36
    %p38 = scmp.ne.s32.totalorder %s24, %s25
    %p39 = scmp.eq.s32.totalorder %s17, 1
    %p40 = por %p38, %p39
    %p42 = scmp.ne.s32.totalorder %s25, %s41
    %p43 = scmp.eq.s32.totalorder %s17, 0
    %p44 = por %p42, %p43
    %s45 = ssub.s32 %s11, %s18
    %p46 = scmp.eq.s32.totalorder %s45, 0
    %s48 = sadd.s32 %s47, 1
    %s49 = scalar_select %p46, %s47, %s48
    %p52 = pneg %p46
    %p53 = scmp.eq.s32.totalorder %s11, 1
    %p54 = por %p52, %p53
    %p55 = scmp.ne.s32.totalorder %s47, %s50
    %p56 = scmp.eq.s32.totalorder %s11, 0
    %p57 = por %p55, %p56
    %p58 = scmp.ne.s32.totalorder %s47, %s50
    %p59 = scmp.eq.s32.totalorder %s16, 1
    %p60 = por %p58, %p59
    %p61 = scmp.ne.s32.totalorder %s50, %s51
    %p62 = scmp.eq.s32.totalorder %s16, 0
    %p63 = por %p61, %p62
    %p64 = scmp.ne.s32.totalorder %s50, %s51
    %p65 = scmp.eq.s32.totalorder %s17, 1
    %p66 = por %p64, %p65
    %p68 = scmp.ne.s32.totalorder %s51, %s67
    %p69 = scmp.eq.s32.totalorder %s17, 0
    %p70 = por %p68, %p69
    %s71 = ssub.s32 %s11, %s18
    %p72 = scmp.eq.s32.totalorder %s71, 0
    %s74 = sadd.s32 %s73, 1
    %s75 = scalar_select %p72, %s73, %s74
    %p78 = pneg %p72
    %p79 = scmp.eq.s32.totalorder %s11, 1
    %p80 = por %p78, %p79
    %p81 = scmp.ne.s32.totalorder %s73, %s76
    %p82 = scmp.eq.s32.totalorder %s11, 0
    %p83 = por %p81, %p82
    %p84 = scmp.ne.s32.totalorder %s73, %s76
    %p85 = scmp.eq.s32.totalorder %s16, 1
    %p86 = por %p84, %p85
    %p87 = scmp.ne.s32.totalorder %s76, %s77
    %p88 = scmp.eq.s32.totalorder %s16, 0
    %p89 = por %p87, %p88
    %p90 = scmp.ne.s32.totalorder %s76, %s77
    %p91 = scmp.eq.s32.totalorder %s17, 1
    %p92 = por %p90, %p91
    %p94 = scmp.ne.s32.totalorder %s77, %s93
    %p95 = scmp.eq.s32.totalorder %s17, 0
    %p96 = por %p94, %p95
    %s98 = sadd.s32 %s97, 1
    %p101 = scmp.eq.s32.totalorder %s11, 1
    %p102 = scmp.ne.s32.totalorder %s97, %s99
    %p103 = scmp.eq.s32.totalorder %s11, 0
    %p104 = por %p102, %p103
    %p105 = scmp.ne.s32.totalorder %s97, %s99
    %p106 = scmp.eq.s32.totalorder %s16, 1
    %p107 = por %p105, %p106
    %p108 = scmp.ne.s32.totalorder %s99, %s100
    %p109 = scmp.eq.s32.totalorder %s16, 0
    %p110 = por %p108, %p109
    %p111 = scmp.ne.s32.totalorder %s99, %s100
    %p112 = scmp.eq.s32.totalorder %s17, 1
    %p113 = por %p111, %p112
    %p115 = scmp.ne.s32.totalorder %s100, %s114
    %p116 = scmp.eq.s32.totalorder %s17, 0
    %p117 = por %p115, %p116
    %s119 = sadd.s32 %s118, 1
    %p122 = scmp.eq.s32.totalorder %s11, 1
    %p123 = scmp.ne.s32.totalorder %s118, %s120
    %p124 = scmp.eq.s32.totalorder %s11, 0
    %p125 = por %p123, %p124
    %p126 = scmp.ne.s32.totalorder %s118, %s120
    %p127 = scmp.eq.s32.totalorder %s16, 1
    %p128 = por %p126, %p127
    %p129 = scmp.ne.s32.totalorder %s120, %s121
    %p130 = scmp.eq.s32.totalorder %s16, 0
    %p131 = por %p129, %p130
    %p132 = scmp.ne.s32.totalorder %s120, %s121
    %p133 = scmp.eq.s32.totalorder %s17, 1
    %p134 = por %p132, %p133
    %p136 = scmp.ne.s32.totalorder %s121, %s135
    %p137 = scmp.eq.s32.totalorder %s17, 0
    %p138 = por %p136, %p137
    %s139 = ssub.s32 %s11, %s18
    %p140 = scmp.eq.s32.totalorder %s139, 0
    %s142 = sadd.s32 %s141, 1
    %s143 = scalar_select %p140, %s141, %s142
    %p146 = pneg %p140
    %p147 = scmp.eq.s32.totalorder %s11, 1
    %p148 = por %p146, %p147
    %p149 = scmp.ne.s32.totalorder %s141, %s144
    %p150 = scmp.eq.s32.totalorder %s11, 0
    %p151 = por %p149, %p150
    %p152 = scmp.ne.s32.totalorder %s141, %s144
    %p153 = scmp.eq.s32.totalorder %s16, 1
    %p154 = por %p152, %p153
    %p155 = scmp.ne.s32.totalorder %s144, %s145
    %p156 = scmp.eq.s32.totalorder %s16, 0
    %p157 = por %p155, %p156
    %p158 = scmp.ne.s32.totalorder %s144, %s145
    %p159 = scmp.eq.s32.totalorder %s17, 1
    %p160 = por %p158, %p159
    %p162 = scmp.ne.s32.totalorder %s145, %s161
    %p163 = scmp.eq.s32.totalorder %s17, 0
    %p164 = por %p162, %p163
    %p165 = scmp.le.s32.totalorder 1, %s11
    %p166 = scmp.lt.s32.totalorder %s11, 3
    %p167 = pnand %p165, %p166
    %p168 = pneg %p167
    // Predicated region
    $region9: #{_detect_jit.16} parent=5 // pred_check
      _
    $region10: #{_detect_jit.16} parent=5 // pred_check_branch
      %170 = sbr.rel (%p167) target = $region12
    $region11: #{_detect_jit.16} parent=5 // pred_region
      %s171 = ssub.s32 %s11, 1
      // Predicated region
      $region13: #{_detect_jit.16} parent=11 // pred_check
        %p172 = pneg %p110
      $region14: #{_detect_jit.16} parent=11 // pred_check_branch
        %174 = sbr.rel (%p172) target = $region16
      $region15: #{_detect_jit.16} parent=11 // pred_region
        _
      $region16: #{_detect_jit.16} parent=11 // pred_fallthru
        _
      // Predicated region
      $region17: #{_detect_jit.16} parent=11 // pred_check
        %p175 = pneg %p131
      $region18: #{_detect_jit.16} parent=11 // pred_check_branch
        %177 = sbr.rel (%p175) target = $region20
      $region19: #{_detect_jit.16} parent=11 // pred_region
        _
      $region20: #{_detect_jit.16} parent=11 // pred_fallthru
        _
    $region12: #{_detect_jit.16} parent=5 // pred_fallthru
      _
    %p178 = scmp.lt.s32.totalorder %s11, 2
    // Predicated region
    $region21: #{_detect_jit.16} parent=5 // pred_check
      %p179 = pneg %p178
    $region22: #{_detect_jit.16} parent=5 // pred_check_branch
      %181 = sbr.rel (%p179) target = $region24
    $region23: #{_detect_jit.16} parent=5 // pred_region
      // Predicated region
      $region25: #{_detect_jit.16} parent=23 // pred_check
        %p182 = pneg %p31
      $region26: #{_detect_jit.16} parent=23 // pred_check_branch
        %184 = sbr.rel (%p182) target = $region28
      $region27: #{_detect_jit.16} parent=23 // pred_region
        %s185 = smul.u32 2, %s11
        %p186 = scmp.lt.s32.totalorder %s185, 3
        %s187 = scalar_select %p186, %s185, 3
        %s188 = smul.addr %s187, 4
        %s189 = scalar_lea.vmem %s0, %s188
        %s190 = smul.u32 2, %s11
      $region28: #{_detect_jit.16} parent=23 // pred_fallthru
        _
      // Predicated region
      $region29: #{_detect_jit.16} parent=23 // pred_check
        %p191 = pneg %p57
      $region30: #{_detect_jit.16} parent=23 // pred_check_branch
        %193 = sbr.rel (%p191) target = $region32
      $region31: #{_detect_jit.16} parent=23 // pred_region
        %s194 = smul.u32 2, %s11
        %p195 = scmp.lt.s32.totalorder %s194, 3
        %s196 = scalar_select %p195, %s194, 3
        %s197 = smul.addr %s196, 4
        %s198 = scalar_lea.vmem %s1, %s197
        %s199 = smul.u32 2, %s11
      $region32: #{_detect_jit.16} parent=23 // pred_fallthru
        _
      // Predicated region
      $region33: #{_detect_jit.16} parent=23 // pred_check
        %p200 = pneg %p83
      $region34: #{_detect_jit.16} parent=23 // pred_check_branch
        %202 = sbr.rel (%p200) target = $region36
      $region35: #{_detect_jit.16} parent=23 // pred_region
        %s203 = smul.u32 2, %s11
        %p204 = scmp.lt.s32.totalorder %s203, 3
        %s205 = scalar_select %p204, %s203, 3
        %s206 = smul.addr %s205, 4
        %s207 = scalar_lea.vmem %s2, %s206
        %s208 = smul.u32 2, %s11
      $region36: #{_detect_jit.16} parent=23 // pred_fallthru
        _
    $region24: #{_detect_jit.16} parent=5 // pred_fallthru
      _
    %p209 = scmp.le.s32.totalorder 1, %s11
    %p210 = scmp.lt.s32.totalorder %s11, 3
    %p211 = pnand %p209, %p210
    %p212 = pneg %p211
    // Predicated region
    $region37: #{_detect_jit.16} parent=5 // pred_check
      _
    $region38: #{_detect_jit.16} parent=5 // pred_check_branch
      %214 = sbr.rel (%p211) target = $region40
    $region39: #{_detect_jit.16} parent=5 // pred_region
      %s215 = ssub.s32 %s11, 1
      %s216 = smul.u32 2, %s16
      %p217 = scmp.lt.s32.totalorder %s216, 3
      %s218 = scalar_select %p217, %s216, 3
      %s219 = smul.addr %s218, 4
      %s220 = scalar_lea.vmem %s0, %s219
      %p221 = pneg %p37
      %p222 = pneg %p34
      %s223 = smul.u32 2, %s16
      %p224 = scmp.lt.s32.totalorder %s223, 3
      %s225 = scalar_select %p224, %s223, 3
      %s226 = smul.addr %s225, 4
      %s227 = scalar_lea.vmem %s1, %s226
      %p228 = pneg %p63
      %p229 = pneg %p60
      %s230 = smul.u32 2, %s16
      %p231 = scmp.lt.s32.totalorder %s230, 3
      %s232 = scalar_select %p231, %s230, 3
      %s233 = smul.addr %s232, 4
      %s234 = scalar_lea.vmem %s2, %s233
      %p235 = pneg %p89
      %p236 = pneg %p86
      %p237 = pneg %p110
      %p238 = pneg %p107
      %p239 = pneg %p131
      %p240 = pneg %p128
      %p241 = pneg %p157
      %p242 = pneg %p154
      %s243 = smul.u32 2, %s16
      %p244 = scmp.lt.s32.totalorder %s243, 3
      %s245 = scalar_select %p244, %s243, 3
      %s246 = smul.addr %s245, 4
      %s247 = scalar_lea.vmem %s5, %s246
      %s248 = smul.u32 2, %s16
      %p249 = scmp.lt.s32.totalorder %s248, 3
      %s250 = scalar_select %p249, %s248, 3
      %s251 = smul.addr %s250, 4
      %s252 = scalar_lea.vmem %s0, %s251
      %s253 = smul.u32 2, %s16
      %s254 = smul.u32 2, %s16
      %p255 = scmp.lt.s32.totalorder %s254, 3
      %s256 = scalar_select %p255, %s254, 3
      %s257 = smul.addr %s256, 4
      %s258 = scalar_lea.vmem %s1, %s257
      %s259 = smul.u32 2, %s16
      %s260 = smul.u32 2, %s16
      %p261 = scmp.lt.s32.totalorder %s260, 3
      %s262 = scalar_select %p261, %s260, 3
      %s263 = smul.addr %s262, 4
      %s264 = scalar_lea.vmem %s2, %s263
      %s265 = smul.u32 2, %s16
      %s266 = smul.u32 2, %s16
      %p267 = scmp.lt.s32.totalorder %s266, 3
      %s268 = scalar_select %p267, %s266, 3
      %s269 = smul.addr %s268, 4
      %s270 = scalar_lea.vmem %s5, %s269
      %s271 = smul.u32 2, %s16
      %v273 = vld [vmem:[%s252] sm:$0xf]
      %v274 = vld [vmem:[%s252 + $0x4] sm:$0xf]
      %v277 = vunpack.c.l.b16 %v273
      %v278 = vunpack.c.l.b16 %v274
      %v279 = vpack.c.b16 %v278, %v277
      %v281 = vshrl.u32 %v279, 16
      %v283 = vshll.u32 %v279, 16
      %v285 = vrot.slane %v283, 1
      %v286 = vor.u32 %v281, %v285
      %v288 = vpack.c.b16 %v277, %v277
      %v290 = vshll.u32 %v288, 16
      %v292 = vrot.slane %v290, 1
      %vm294 = vcmask 1047552
      %vm295 = vsmask.f32 7424
      %vm296 = vmand %vm294, %vm295
      %v297 = vsel %vm296, %v286, %v292
      %v298 = vrot.slane %v279, 1
      %v299 = vrot.slane %v288, 1
      %vm300 = vcmask 1046528
      %v303 = vsel %vm300, %v298, %v299
      %v305 = vld [vmem:[%s258] sm:$0xf]
      %v306 = vld [vmem:[%s258 + $0x4] sm:$0xf]
      %v309 = vunpack.c.l.b16 %v305
      %v310 = vunpack.c.l.b16 %v306
      %v311 = vpack.c.b16 %v310, %v309
      %v313 = vshrl.u32 %v311, 16
      %v315 = vshll.u32 %v311, 16
      %v317 = vrot.slane %v315, 1
      %v318 = vor.u32 %v313, %v317
      %v320 = vpack.c.b16 %v309, %v309
      %v322 = vshll.u32 %v320, 16
      %v324 = vrot.slane %v322, 1
      %v326 = vsel %vm296, %v318, %v324
      %v327 = vrot.slane %v311, 1
      %v328 = vrot.slane %v320, 1
      %v331 = vsel %vm300, %v327, %v328
      %v333 = vld [vmem:[%s264] sm:$0xf]
      %v334 = vld [vmem:[%s264 + $0x4] sm:$0xf]
      %v337 = vunpack.c.l.b16 %v333
      %v338 = vunpack.c.l.b16 %v334
      %v339 = vpack.c.b16 %v338, %v337
      %v341 = vshrl.u32 %v339, 16
      %v343 = vshll.u32 %v339, 16
      %v345 = vrot.slane %v343, 1
      %v346 = vor.u32 %v341, %v345
      %v348 = vpack.c.b16 %v337, %v337
      %v350 = vshll.u32 %v348, 16
      %v352 = vrot.slane %v350, 1
      %v354 = vsel %vm296, %v346, %v352
      %v355 = vrot.slane %v339, 1
      %v356 = vrot.slane %v348, 1
      %v359 = vsel %vm300, %v355, %v356
      %v364 = vld [vmem:[%s3] sm:$0xf]
      %v365 = vld [vmem:[%s3 + $0x4] sm:$0xf]
      %v366 = vld [vmem:[%s3 + $0x8] sm:$0xf]
      %v367 = vld [vmem:[%s3 + $0xc] sm:$0xf]
      %v368 = vld [vmem:[%s3 + $0x10] sm:$0xf]
      %v369 = vld [vmem:[%s3 + $0x14] sm:$0xf]
      %v370 = vld [vmem:[%s3 + $0x18] sm:$0xf]
      %v371 = vld [vmem:[%s3 + $0x1c] sm:$0xf]
      %v372 = vld [vmem:[%s3 + $0x20] sm:$0xf]
      %v373 = vld [vmem:[%s3 + $0x24] sm:$0xf]
      %v374 = vld [vmem:[%s3 + $0x28] sm:$0xf]
      %v375 = vld [vmem:[%s3 + $0x2c] sm:$0xf]
      %v376 = vld [vmem:[%s3 + $0x30] sm:$0xf]
      %v377 = vld [vmem:[%s3 + $0x34] sm:$0xf]
      %v378 = vld [vmem:[%s3 + $0x38] sm:$0xf]
      %v379 = vld [vmem:[%s3 + $0x3c] sm:$0xf]
      %v380 = vld [vmem:[%s3 + $0x40] sm:$0xf]
      %v381 = vld [vmem:[%s3 + $0x44] sm:$0xf]
      %v382 = vld [vmem:[%s3 + $0x48] sm:$0xf]
      %v383 = vld [vmem:[%s3 + $0x4c] sm:$0xf]
      %v384 = vld [vmem:[%s3 + $0x50] sm:$0xf]
      %v385 = vld [vmem:[%s3 + $0x54] sm:$0xf]
      %v386 = vld [vmem:[%s3 + $0x58] sm:$0xf]
      %v387 = vld [vmem:[%s3 + $0x5c] sm:$0xf]
      %v388 = vld [vmem:[%s3 + $0x60] sm:$0xf]
      %v389 = vld [vmem:[%s3 + $0x64] sm:$0xf]
      %v390 = vld [vmem:[%s3 + $0x68] sm:$0xf]
      %v391 = vld [vmem:[%s3 + $0x6c] sm:$0xf]
      %v392 = vld [vmem:[%s3 + $0x70] sm:$0xf]
      %v393 = vld [vmem:[%s3 + $0x74] sm:$0xf]
      %v394 = vld [vmem:[%s3 + $0x78] sm:$0xf]
      %v395 = vld [vmem:[%s3 + $0x7c] sm:$0xf]
      %v396 = vld [vmem:[%s3 + $0x80] sm:$0xf]
      %v397 = vld [vmem:[%s3 + $0x84] sm:$0xf]
      %v398 = vld [vmem:[%s3 + $0x88] sm:$0xf]
      %v399 = vld [vmem:[%s3 + $0x8c] sm:$0xf]
      %v400 = vld [vmem:[%s3 + $0x90] sm:$0xf]
      %v401 = vld [vmem:[%s3 + $0x94] sm:$0xf]
      %v402 = vld [vmem:[%s3 + $0x98] sm:$0xf]
      %v403 = vld [vmem:[%s3 + $0x9c] sm:$0xf]
      %v404 = vld [vmem:[%s3 + $0xa0] sm:$0xf]
      %v405 = vld [vmem:[%s3 + $0xa4] sm:$0xf]
      %v406 = vld [vmem:[%s3 + $0xa8] sm:$0xf]
      %v407 = vld [vmem:[%s3 + $0xac] sm:$0xf]
      %v408 = vld [vmem:[%s3 + $0xb0] sm:$0xf]
      %v409 = vld [vmem:[%s3 + $0xb4] sm:$0xf]
      %v410 = vld [vmem:[%s3 + $0xb8] sm:$0xf]
      %v411 = vld [vmem:[%s3 + $0xbc] sm:$0xf]
      %v412 = vld [vmem:[%s3 + $0xc0] sm:$0xf]
      %v413 = vld [vmem:[%s3 + $0xc4] sm:$0xf]
      %v414 = vld [vmem:[%s3 + $0xc8] sm:$0xf]
      %v415 = vld [vmem:[%s3 + $0xcc] sm:$0xf]
      %v416 = vld [vmem:[%s3 + $0xd0] sm:$0xf]
      %v417 = vld [vmem:[%s3 + $0xd4] sm:$0xf]
      %v418 = vld [vmem:[%s3 + $0xd8] sm:$0xf]
      %v419 = vld [vmem:[%s3 + $0xdc] sm:$0xf]
      %v420 = vld [vmem:[%s3 + $0xe0] sm:$0xf]
      %v421 = vld [vmem:[%s3 + $0xe4] sm:$0xf]
      %v422 = vld [vmem:[%s3 + $0xe8] sm:$0xf]
      %v423 = vld [vmem:[%s3 + $0xec] sm:$0xf]
      %v424 = vld [vmem:[%s3 + $0xf0] sm:$0xf]
      %v425 = vld [vmem:[%s3 + $0xf4] sm:$0xf]
      %v426 = vld [vmem:[%s3 + $0xf8] sm:$0xf]
      %v427 = vld [vmem:[%s3 + $0xfc] sm:$0xf]
      %v428 = vld [vmem:[%s3 + $0x100] sm:$0xf]
      %v429 = vld [vmem:[%s3 + $0x104] sm:$0xf]
      %v430 = vld [vmem:[%s3 + $0x108] sm:$0xf]
      %v431 = vld [vmem:[%s3 + $0x10c] sm:$0xf]
      %v432 = vld [vmem:[%s3 + $0x110] sm:$0xf]
      %v433 = vld [vmem:[%s3 + $0x114] sm:$0xf]
      %v434 = vld [vmem:[%s3 + $0x118] sm:$0xf]
      %v435 = vld [vmem:[%s3 + $0x11c] sm:$0xf]
      %v436 = vld [vmem:[%s3 + $0x120] sm:$0xf]
      %v437 = vld [vmem:[%s3 + $0x124] sm:$0xf]
      %v438 = vld [vmem:[%s3 + $0x128] sm:$0xf]
      %v439 = vld [vmem:[%s3 + $0x12c] sm:$0xf]
      %v440 = vld [vmem:[%s3 + $0x130] sm:$0xf]
      %v441 = vld [vmem:[%s3 + $0x134] sm:$0xf]
      %v442 = vld [vmem:[%s3 + $0x138] sm:$0xf]
      %v443 = vld [vmem:[%s3 + $0x13c] sm:$0xf]
      %v444 = vld [vmem:[%s3 + $0x140] sm:$0xf]
      %v445 = vld [vmem:[%s3 + $0x144] sm:$0xf]
      %v446 = vld [vmem:[%s3 + $0x148] sm:$0xf]
      %v447 = vld [vmem:[%s3 + $0x14c] sm:$0xf]
      %v448 = vld [vmem:[%s3 + $0x150] sm:$0xf]
      %v449 = vld [vmem:[%s3 + $0x154] sm:$0xf]
      %v450 = vld [vmem:[%s3 + $0x158] sm:$0xf]
      %v451 = vld [vmem:[%s3 + $0x15c] sm:$0xf]
      %v452 = vld [vmem:[%s3 + $0x160] sm:$0xf]
      %v453 = vld [vmem:[%s3 + $0x164] sm:$0xf]
      %v454 = vld [vmem:[%s3 + $0x168] sm:$0xf]
      %v455 = vld [vmem:[%s3 + $0x16c] sm:$0xf]
      %v456 = vld [vmem:[%s3 + $0x170] sm:$0xf]
      %v457 = vld [vmem:[%s3 + $0x174] sm:$0xf]
      %v458 = vld [vmem:[%s3 + $0x178] sm:$0xf]
      %v459 = vld [vmem:[%s3 + $0x17c] sm:$0xf]
      %v460 = vld [vmem:[%s3 + $0x180] sm:$0xf]
      %v461 = vld [vmem:[%s3 + $0x184] sm:$0xf]
      %v462 = vld [vmem:[%s3 + $0x188] sm:$0xf]
      %v463 = vld [vmem:[%s3 + $0x18c] sm:$0xf]
      %v464 = vld [vmem:[%s3 + $0x190] sm:$0xf]
      %v465 = vld [vmem:[%s3 + $0x194] sm:$0xf]
      %v466 = vld [vmem:[%s3 + $0x198] sm:$0xf]
      %v467 = vld [vmem:[%s3 + $0x19c] sm:$0xf]
      %v468 = vld [vmem:[%s3 + $0x1a0] sm:$0xf]
      %v469 = vld [vmem:[%s3 + $0x1a4] sm:$0xf]
      %v470 = vld [vmem:[%s3 + $0x1a8] sm:$0xf]
      %v471 = vld [vmem:[%s3 + $0x1ac] sm:$0xf]
      %v472 = vld [vmem:[%s3 + $0x1b0] sm:$0xf]
      %v473 = vld [vmem:[%s3 + $0x1b4] sm:$0xf]
      %v474 = vld [vmem:[%s3 + $0x1b8] sm:$0xf]
      %v475 = vld [vmem:[%s3 + $0x1bc] sm:$0xf]
      %v476 = vld [vmem:[%s3 + $0x1c0] sm:$0xf]
      %v477 = vld [vmem:[%s3 + $0x1c4] sm:$0xf]
      %v478 = vld [vmem:[%s3 + $0x1c8] sm:$0xf]
      %v479 = vld [vmem:[%s3 + $0x1cc] sm:$0xf]
      %v480 = vld [vmem:[%s3 + $0x1d0] sm:$0xf]
      %v481 = vld [vmem:[%s3 + $0x1d4] sm:$0xf]
      %v482 = vld [vmem:[%s3 + $0x1d8] sm:$0xf]
      %v483 = vld [vmem:[%s3 + $0x1dc] sm:$0xf]
      %v484 = vld [vmem:[%s3 + $0x1e0] sm:$0xf]
      %v485 = vld [vmem:[%s3 + $0x1e4] sm:$0xf]
      %v486 = vld [vmem:[%s3 + $0x1e8] sm:$0xf]
      %v487 = vld [vmem:[%s3 + $0x1ec] sm:$0xf]
      %v488 = vld [vmem:[%s3 + $0x1f0] sm:$0xf]
      %v489 = vld [vmem:[%s3 + $0x1f4] sm:$0xf]
      %v490 = vld [vmem:[%s3 + $0x1f8] sm:$0xf]
      %v491 = vld [vmem:[%s3 + $0x1fc] sm:$0xf]
      %v492 = vld [vmem:[%s3 + $0x200] sm:$0xf]
      %v493 = vld [vmem:[%s3 + $0x204] sm:$0xf]
      %v494 = vld [vmem:[%s3 + $0x208] sm:$0xf]
      %v495 = vld [vmem:[%s3 + $0x20c] sm:$0xf]
      %v496 = vld [vmem:[%s3 + $0x210] sm:$0xf]
      %v497 = vld [vmem:[%s3 + $0x214] sm:$0xf]
      %v498 = vld [vmem:[%s3 + $0x218] sm:$0xf]
      %v499 = vld [vmem:[%s3 + $0x21c] sm:$0xf]
      %v500 = vld [vmem:[%s3 + $0x220] sm:$0xf]
      %v501 = vld [vmem:[%s3 + $0x224] sm:$0xf]
      %v502 = vld [vmem:[%s3 + $0x228] sm:$0xf]
      %v503 = vld [vmem:[%s3 + $0x22c] sm:$0xf]
      %v504 = vld [vmem:[%s3 + $0x230] sm:$0xf]
      %v505 = vld [vmem:[%s3 + $0x234] sm:$0xf]
      %v506 = vld [vmem:[%s3 + $0x238] sm:$0xf]
      %v507 = vld [vmem:[%s3 + $0x23c] sm:$0xf]
      %v508 = vld [vmem:[%s4] sm:$0x1]
      %v510 = vlaneseq
      %v511 = vshrl.u32 %v510, 7
      %v512 = vsub.s32 0, %v511
      %v513 = vrot.slane %v508, %v512
      %v659 = vunpack.c.l.b16 %v364
      %v660 = vunpack.c.l.b16 %v365
      %v661 = vunpack.c.l.b16 %v366
      %v662 = vunpack.c.l.b16 %v367
      %v663 = vunpack.c.l.b16 %v368
      %v664 = vunpack.c.l.b16 %v369
      %v665 = vunpack.c.l.b16 %v370
      %v666 = vunpack.c.l.b16 %v371
      %v667 = vunpack.c.l.b16 %v372
      %v668 = vunpack.c.l.b16 %v373
      %v669 = vunpack.c.l.b16 %v374
      %v670 = vunpack.c.l.b16 %v375
      %v671 = vunpack.c.l.b16 %v376
      %v672 = vunpack.c.l.b16 %v377
      %v673 = vunpack.c.l.b16 %v378
      %v674 = vunpack.c.l.b16 %v379
      %v675 = vunpack.c.l.b16 %v380
      %v676 = vunpack.c.l.b16 %v381
      %v677 = vunpack.c.l.b16 %v382
      %v678 = vunpack.c.l.b16 %v383
      %v679 = vunpack.c.l.b16 %v384
      %v680 = vunpack.c.l.b16 %v385
      %v681 = vunpack.c.l.b16 %v386
      %v682 = vunpack.c.l.b16 %v387
      %v683 = vunpack.c.l.b16 %v388
      %v684 = vunpack.c.l.b16 %v389
      %v685 = vunpack.c.l.b16 %v390
      %v686 = vunpack.c.l.b16 %v391
      %v687 = vunpack.c.l.b16 %v392
      %v688 = vunpack.c.l.b16 %v393
      %v689 = vunpack.c.l.b16 %v394
      %v690 = vunpack.c.l.b16 %v395
      %v691 = vunpack.c.l.b16 %v396
      %v692 = vunpack.c.l.b16 %v397
      %v693 = vunpack.c.l.b16 %v398
      %v694 = vunpack.c.l.b16 %v399
      %v695 = vunpack.c.l.b16 %v400
      %v696 = vunpack.c.l.b16 %v401
      %v697 = vunpack.c.l.b16 %v402
      %v698 = vunpack.c.l.b16 %v403
      %v699 = vunpack.c.l.b16 %v404
      %v700 = vunpack.c.l.b16 %v405
      %v701 = vunpack.c.l.b16 %v406
      %v702 = vunpack.c.l.b16 %v407
      %v703 = vunpack.c.l.b16 %v408
      %v704 = vunpack.c.l.b16 %v409
      %v705 = vunpack.c.l.b16 %v410
      %v706 = vunpack.c.l.b16 %v411
      %v707 = vunpack.c.l.b16 %v412
      %v708 = vunpack.c.l.b16 %v413
      %v709 = vunpack.c.l.b16 %v414
      %v710 = vunpack.c.l.b16 %v415
      %v711 = vunpack.c.l.b16 %v416
      %v712 = vunpack.c.l.b16 %v417
      %v713 = vunpack.c.l.b16 %v418
      %v714 = vunpack.c.l.b16 %v419
      %v715 = vunpack.c.l.b16 %v420
      %v716 = vunpack.c.l.b16 %v421
      %v717 = vunpack.c.l.b16 %v422
      %v718 = vunpack.c.l.b16 %v423
      %v719 = vunpack.c.l.b16 %v424
      %v720 = vunpack.c.l.b16 %v425
      %v721 = vunpack.c.l.b16 %v426
      %v722 = vunpack.c.l.b16 %v427
      %v723 = vunpack.c.l.b16 %v428
      %v724 = vunpack.c.l.b16 %v429
      %v725 = vunpack.c.l.b16 %v430
      %v726 = vunpack.c.l.b16 %v431
      %v727 = vunpack.c.l.b16 %v432
      %v728 = vunpack.c.l.b16 %v433
      %v729 = vunpack.c.l.b16 %v434
      %v730 = vunpack.c.l.b16 %v435
      %v731 = vunpack.c.l.b16 %v436
      %v732 = vunpack.c.l.b16 %v437
      %v733 = vunpack.c.l.b16 %v438
      %v734 = vunpack.c.l.b16 %v439
      %v735 = vunpack.c.l.b16 %v440
      %v736 = vunpack.c.l.b16 %v441
      %v737 = vunpack.c.l.b16 %v442
      %v738 = vunpack.c.l.b16 %v443
      %v739 = vunpack.c.l.b16 %v444
      %v740 = vunpack.c.l.b16 %v445
      %v741 = vunpack.c.l.b16 %v446
      %v742 = vunpack.c.l.b16 %v447
      %v743 = vunpack.c.l.b16 %v448
      %v744 = vunpack.c.l.b16 %v449
      %v745 = vunpack.c.l.b16 %v450
      %v746 = vunpack.c.l.b16 %v451
      %v747 = vunpack.c.l.b16 %v452
      %v748 = vunpack.c.l.b16 %v453
      %v749 = vunpack.c.l.b16 %v454
      %v750 = vunpack.c.l.b16 %v455
      %v751 = vunpack.c.l.b16 %v456
      %v752 = vunpack.c.l.b16 %v457
      %v753 = vunpack.c.l.b16 %v458
      %v754 = vunpack.c.l.b16 %v459
      %v755 = vunpack.c.l.b16 %v460
      %v756 = vunpack.c.l.b16 %v461
      %v757 = vunpack.c.l.b16 %v462
      %v758 = vunpack.c.l.b16 %v463
      %v759 = vunpack.c.l.b16 %v464
      %v760 = vunpack.c.l.b16 %v465
      %v761 = vunpack.c.l.b16 %v466
      %v762 = vunpack.c.l.b16 %v467
      %v763 = vunpack.c.l.b16 %v468
      %v764 = vunpack.c.l.b16 %v469
      %v765 = vunpack.c.l.b16 %v470
      %v766 = vunpack.c.l.b16 %v471
      %v767 = vunpack.c.l.b16 %v472
      %v768 = vunpack.c.l.b16 %v473
      %v769 = vunpack.c.l.b16 %v474
      %v770 = vunpack.c.l.b16 %v475
      %v771 = vunpack.c.l.b16 %v476
      %v772 = vunpack.c.l.b16 %v477
      %v773 = vunpack.c.l.b16 %v478
      %v774 = vunpack.c.l.b16 %v479
      %v775 = vunpack.c.l.b16 %v480
      %v776 = vunpack.c.l.b16 %v481
      %v777 = vunpack.c.l.b16 %v482
      %v778 = vunpack.c.l.b16 %v483
      %v779 = vunpack.c.l.b16 %v484
      %v780 = vunpack.c.l.b16 %v485
      %v781 = vunpack.c.l.b16 %v486
      %v782 = vunpack.c.l.b16 %v487
      %v783 = vunpack.c.l.b16 %v488
      %v784 = vunpack.c.l.b16 %v489
      %v785 = vunpack.c.l.b16 %v490
      %v786 = vunpack.c.l.b16 %v491
      %v787 = vunpack.c.l.b16 %v492
      %v788 = vunpack.c.l.b16 %v493
      %v789 = vunpack.c.l.b16 %v494
      %v790 = vunpack.c.l.b16 %v495
      %v791 = vunpack.c.l.b16 %v496
      %v792 = vunpack.c.l.b16 %v497
      %v793 = vunpack.c.l.b16 %v498
      %v794 = vunpack.c.l.b16 %v499
      %v795 = vunpack.c.l.b16 %v500
      %v796 = vunpack.c.l.b16 %v501
      %v797 = vunpack.c.l.b16 %v502
      %v798 = vunpack.c.l.b16 %v503
      %v799 = vunpack.c.l.b16 %v504
      %v800 = vunpack.c.l.b16 %v505
      %v801 = vunpack.c.l.b16 %v506
      %v802 = vunpack.c.l.b16 %v507
      %v803 = vpack.c.b16 %v660, %v659
      %v804 = vpack.c.b16 %v662, %v661
      %v805 = vpack.c.b16 %v664, %v663
      %v806 = vpack.c.b16 %v666, %v665
      %v807 = vpack.c.b16 %v668, %v667
      %v808 = vpack.c.b16 %v670, %v669
      %v809 = vpack.c.b16 %v672, %v671
      %v810 = vpack.c.b16 %v674, %v673
      %v811 = vpack.c.b16 %v676, %v675
      %v812 = vpack.c.b16 %v678, %v677
      %v813 = vpack.c.b16 %v680, %v679
      %v814 = vpack.c.b16 %v682, %v681
      %v815 = vpack.c.b16 %v684, %v683
      %v816 = vpack.c.b16 %v686, %v685
      %v817 = vpack.c.b16 %v688, %v687
      %v818 = vpack.c.b16 %v690, %v689
      %v819 = vpack.c.b16 %v692, %v691
      %v820 = vpack.c.b16 %v694, %v693
      %v821 = vpack.c.b16 %v696, %v695
      %v822 = vpack.c.b16 %v698, %v697
      %v823 = vpack.c.b16 %v700, %v699
      %v824 = vpack.c.b16 %v702, %v701
      %v825 = vpack.c.b16 %v704, %v703
      %v826 = vpack.c.b16 %v706, %v705
      %v827 = vpack.c.b16 %v708, %v707
      %v828 = vpack.c.b16 %v710, %v709
      %v829 = vpack.c.b16 %v712, %v711
      %v830 = vpack.c.b16 %v714, %v713
      %v831 = vpack.c.b16 %v716, %v715
      %v832 = vpack.c.b16 %v718, %v717
      %v833 = vpack.c.b16 %v720, %v719
      %v834 = vpack.c.b16 %v722, %v721
      %v835 = vpack.c.b16 %v724, %v723
      %v836 = vpack.c.b16 %v726, %v725
      %v837 = vpack.c.b16 %v728, %v727
      %v838 = vpack.c.b16 %v730, %v729
      %v839 = vpack.c.b16 %v732, %v731
      %v840 = vpack.c.b16 %v734, %v733
      %v841 = vpack.c.b16 %v736, %v735
      %v842 = vpack.c.b16 %v738, %v737
      %v843 = vpack.c.b16 %v740, %v739
      %v844 = vpack.c.b16 %v742, %v741
      %v845 = vpack.c.b16 %v744, %v743
      %v846 = vpack.c.b16 %v746, %v745
      %v847 = vpack.c.b16 %v748, %v747
      %v848 = vpack.c.b16 %v750, %v749
      %v849 = vpack.c.b16 %v752, %v751
      %v850 = vpack.c.b16 %v754, %v753
      %v851 = vpack.c.b16 %v756, %v755
      %v852 = vpack.c.b16 %v758, %v757
      %v853 = vpack.c.b16 %v760, %v759
      %v854 = vpack.c.b16 %v762, %v761
      %v855 = vpack.c.b16 %v764, %v763
      %v856 = vpack.c.b16 %v766, %v765
      %v857 = vpack.c.b16 %v768, %v767
      %v858 = vpack.c.b16 %v770, %v769
      %v859 = vpack.c.b16 %v772, %v771
      %v860 = vpack.c.b16 %v774, %v773
      %v861 = vpack.c.b16 %v776, %v775
      %v862 = vpack.c.b16 %v778, %v777
      %v863 = vpack.c.b16 %v780, %v779
      %v864 = vpack.c.b16 %v782, %v781
      %v865 = vpack.c.b16 %v784, %v783
      %v866 = vpack.c.b16 %v786, %v785
      %v867 = vpack.c.b16 %v788, %v787
      %v868 = vpack.c.b16 %v790, %v789
      %v869 = vpack.c.b16 %v792, %v791
      %v870 = vpack.c.b16 %v794, %v793
      %v871 = vpack.c.b16 %v796, %v795
      %v872 = vpack.c.b16 %v798, %v797
      %v873 = vpack.c.b16 %v800, %v799
      %v874 = vpack.c.b16 %v802, %v801
      %947 = vmatprep.subr.bf16.mxu0 0
      %948 = vmatpush1.bf16.msra.mxu0 %v803
      %949 = vmatprep.subr.bf16.mxu0 0
      %950 = vmatpush1.bf16.msra.mxu0 %v804
      %951 = vmatprep.subr.bf16.mxu0 0
      %952 = vmatpush1.bf16.msra.mxu0 %v805
      %953 = vmatprep.subr.bf16.mxu0 0
      %954 = vmatpush1.bf16.msra.mxu0 %v806
      %955 = vmatprep.subr.bf16.mxu0 0
      %956 = vmatpush1.bf16.msra.mxu0 %v807
      %957 = vmatprep.subr.bf16.mxu0 0
      %958 = vmatpush1.bf16.msra.mxu0 %v808
      %959 = vmatprep.subr.bf16.mxu0 0
      %960 = vmatpush1.bf16.msra.mxu0 %v809
      %961 = vmatprep.subr.bf16.mxu0 0
      %962 = vmatpush1.bf16.msra.mxu0 %v810
      %963 = vmatprep.subr.bf16.mxu0 0
      %964 = vmatpush1.bf16.msra.mxu0 %v811
      %965 = vmatprep.subr.bf16.mxu0 0
      %966 = vmatpush1.bf16.msra.mxu0 %v812
      %967 = vmatprep.subr.bf16.mxu0 0
      %968 = vmatpush1.bf16.msra.mxu0 %v813
      %969 = vmatprep.subr.bf16.mxu0 0
      %970 = vmatpush1.bf16.msra.mxu0 %v814
      %971 = vmatprep.subr.bf16.mxu0 0
      %972 = vmatpush1.bf16.msra.mxu0 %v815
      %973 = vmatprep.subr.bf16.mxu0 0
      %974 = vmatpush1.bf16.msra.mxu0 %v816
      %975 = vmatprep.subr.bf16.mxu0 0
      %976 = vmatpush1.bf16.msra.mxu0 %v817
      %977 = vmatprep.subr.bf16.mxu0 0
      %978 = vmatpush1.bf16.msra.mxu0 %v818
      %979 = vmatprep.mubr.bf16.mxu0 %v297
      %980 = vmatmul.mubr.bf16.gmra.mrb[0].mxu0 %v279
      %v981 = vpop.f32.mrb[0].mxu0
      %v982 = vadd.f32 %v513, %v981
      %v983 = vpop.f32.mrb[0].mxu0
      %v984 = vpop.f32.mrb[0].mxu0
      %v985 = vadd.f32 %v513, %v984
      %v986 = vpop.f32.mrb[0].mxu0
      %987 = vdwg.mxu0
      %988 = vmatprep.subr.bf16.mxu0 0
      %989 = vmatpush1.bf16.msra.mxu0 %v819
      %990 = vmatprep.subr.bf16.mxu0 0
      %991 = vmatpush1.bf16.msra.mxu0 %v820
      %992 = vmatprep.subr.bf16.mxu0 0
      %993 = vmatpush1.bf16.msra.mxu0 %v821
      %994 = vmatprep.subr.bf16.mxu0 0
      %995 = vmatpush1.bf16.msra.mxu0 %v822
      %996 = vmatprep.subr.bf16.mxu0 0
      %997 = vmatpush1.bf16.msra.mxu0 %v823
      %998 = vmatprep.subr.bf16.mxu0 0
      %999 = vmatpush1.bf16.msra.mxu0 %v824
      %1000 = vmatprep.subr.bf16.mxu0 0
      %1001 = vmatpush1.bf16.msra.mxu0 %v825
      %1002 = vmatprep.subr.bf16.mxu0 0
      %1003 = vmatpush1.bf16.msra.mxu0 %v826
      %1004 = vmatprep.subr.bf16.mxu0 0
      %1005 = vmatpush1.bf16.msra.mxu0 %v827
      %1006 = vmatprep.subr.bf16.mxu0 0
      %1007 = vmatpush1.bf16.msra.mxu0 %v828
      %1008 = vmatprep.subr.bf16.mxu0 0
      %1009 = vmatpush1.bf16.msra.mxu0 %v829
      %1010 = vmatprep.subr.bf16.mxu0 0
      %1011 = vmatpush1.bf16.msra.mxu0 %v830
      %1012 = vmatprep.subr.bf16.mxu0 0
      %1013 = vmatpush1.bf16.msra.mxu0 %v831
      %1014 = vmatprep.subr.bf16.mxu0 0
      %1015 = vmatpush1.bf16.msra.mxu0 %v832
      %1016 = vmatprep.subr.bf16.mxu0 0
      %1017 = vmatpush1.bf16.msra.mxu0 %v833
      %1018 = vmatprep.subr.bf16.mxu0 0
      %1019 = vmatpush1.bf16.msra.mxu0 %v834
      %1020 = vmatprep.mubr.bf16.mxu0 %v311
      %1021 = vmatmul.mubr.bf16.gmra.mrb[0].mxu0 %v303
      %v1022 = vpop.f32.mrb[0].mxu0
      %v1023 = vadd.f32 %v982, %v1022
      %v1024 = vpop.f32.mrb[0].mxu0
      %v1025 = vpop.f32.mrb[0].mxu0
      %v1026 = vadd.f32 %v985, %v1025
      %v1027 = vpop.f32.mrb[0].mxu0
      %1028 = vdwg.mxu0
      %1029 = vmatprep.subr.bf16.mxu0 0
      %1030 = vmatpush1.bf16.msra.mxu0 %v835
      %1031 = vmatprep.subr.bf16.mxu0 0
      %1032 = vmatpush1.bf16.msra.mxu0 %v836
      %1033 = vmatprep.subr.bf16.mxu0 0
      %1034 = vmatpush1.bf16.msra.mxu0 %v837
      %1035 = vmatprep.subr.bf16.mxu0 0
      %1036 = vmatpush1.bf16.msra.mxu0 %v838
      %1037 = vmatprep.subr.bf16.mxu0 0
      %1038 = vmatpush1.bf16.msra.mxu0 %v839
      %1039 = vmatprep.subr.bf16.mxu0 0
      %1040 = vmatpush1.bf16.msra.mxu0 %v840
      %1041 = vmatprep.subr.bf16.mxu0 0
      %1042 = vmatpush1.bf16.msra.mxu0 %v841
      %1043 = vmatprep.subr.bf16.mxu0 0
      %1044 = vmatpush1.bf16.msra.mxu0 %v842
      %1045 = vmatprep.subr.bf16.mxu0 0
      %1046 = vmatpush1.bf16.msra.mxu0 %v843
      %1047 = vmatprep.subr.bf16.mxu0 0
      %1048 = vmatpush1.bf16.msra.mxu0 %v844
      %1049 = vmatprep.subr.bf16.mxu0 0
      %1050 = vmatpush1.bf16.msra.mxu0 %v845
      %1051 = vmatprep.subr.bf16.mxu0 0
      %1052 = vmatpush1.bf16.msra.mxu0 %v846
      %1053 = vmatprep.subr.bf16.mxu0 0
      %1054 = vmatpush1.bf16.msra.mxu0 %v847
      %1055 = vmatprep.subr.bf16.mxu0 0
      %1056 = vmatpush1.bf16.msra.mxu0 %v848
      %1057 = vmatprep.subr.bf16.mxu0 0
      %1058 = vmatpush1.bf16.msra.mxu0 %v849
      %1059 = vmatprep.subr.bf16.mxu0 0
      %1060 = vmatpush1.bf16.msra.mxu0 %v850
      %1061 = vmatprep.mubr.bf16.mxu0 %v331
      %1062 = vmatmul.mubr.bf16.gmra.mrb[0].mxu0 %v326
      %v1063 = vpop.f32.mrb[0].mxu0
      %v1064 = vadd.f32 %v1023, %v1063
      %v1065 = vpop.f32.mrb[0].mxu0
      %v1066 = vpop.f32.mrb[0].mxu0
      %v1067 = vadd.f32 %v1026, %v1066
      %v1068 = vpop.f32.mrb[0].mxu0
      %1069 = vdwg.mxu0
      %1070 = vmatprep.subr.bf16.mxu0 0
      %1071 = vmatpush1.bf16.msra.mxu0 %v851
      %1072 = vmatprep.subr.bf16.mxu0 0
      %1073 = vmatpush1.bf16.msra.mxu0 %v852
      %1074 = vmatprep.subr.bf16.mxu0 0
      %1075 = vmatpush1.bf16.msra.mxu0 %v853
      %1076 = vmatprep.subr.bf16.mxu0 0
      %1077 = vmatpush1.bf16.msra.mxu0 %v854
      %1078 = vmatprep.subr.bf16.mxu0 0
      %1079 = vmatpush1.bf16.msra.mxu0 %v855
      %1080 = vmatprep.subr.bf16.mxu0 0
      %1081 = vmatpush1.bf16.msra.mxu0 %v856
      %1082 = vmatprep.subr.bf16.mxu0 0
      %1083 = vmatpush1.bf16.msra.mxu0 %v857
      %1084 = vmatprep.subr.bf16.mxu0 0
      %1085 = vmatpush1.bf16.msra.mxu0 %v858
      %1086 = vmatprep.subr.bf16.mxu0 0
      %1087 = vmatpush1.bf16.msra.mxu0 %v859
      %1088 = vmatprep.subr.bf16.mxu0 0
      %1089 = vmatpush1.bf16.msra.mxu0 %v860
      %1090 = vmatprep.subr.bf16.mxu0 0
      %1091 = vmatpush1.bf16.msra.mxu0 %v861
      %1092 = vmatprep.subr.bf16.mxu0 0
      %1093 = vmatpush1.bf16.msra.mxu0 %v862
      %1094 = vmatprep.subr.bf16.mxu0 0
      %1095 = vmatpush1.bf16.msra.mxu0 %v863
      %1096 = vmatprep.subr.bf16.mxu0 0
      %1097 = vmatpush1.bf16.msra.mxu0 %v864
      %1098 = vmatprep.subr.bf16.mxu0 0
      %1099 = vmatpush1.bf16.msra.mxu0 %v865
      %1100 = vmatprep.subr.bf16.mxu0 0
      %1101 = vmatpush1.bf16.msra.mxu0 %v866
      %1102 = vmatprep.mubr.bf16.mxu0 %v354
      %1103 = vmatmul.mubr.bf16.gmra.mrb[0].mxu0 %v339
      %v1104 = vpop.f32.mrb[0].mxu0
      %v1105 = vadd.f32 %v1064, %v1104
      %v1106 = vpop.f32.mrb[0].mxu0
      %v1107 = vpop.f32.mrb[0].mxu0
      %v1108 = vadd.f32 %v1067, %v1107
      %v1109 = vpop.f32.mrb[0].mxu0
      %1110 = vdwg.mxu0
      %1111 = vmatprep.subr.bf16.mxu0 0
      %1112 = vmatpush1.bf16.msra.mxu0 %v867
      %1113 = vmatprep.subr.bf16.mxu0 0
      %1114 = vmatpush1.bf16.msra.mxu0 %v868
      %1115 = vmatprep.subr.bf16.mxu0 0
      %1116 = vmatpush1.bf16.msra.mxu0 %v869
      %1117 = vmatprep.subr.bf16.mxu0 0
      %1118 = vmatpush1.bf16.msra.mxu0 %v870
      %1119 = vmatprep.subr.bf16.mxu0 0
      %1120 = vmatpush1.bf16.msra.mxu0 %v871
      %1121 = vmatprep.subr.bf16.mxu0 0
      %1122 = vmatpush1.bf16.msra.mxu0 %v872
      %1123 = vmatprep.subr.bf16.mxu0 0
      %1124 = vmatpush1.bf16.msra.mxu0 %v873
      %1125 = vmatprep.subr.bf16.mxu0 0
      %1126 = vmatpush1.bf16.msra.mxu0 %v874
      %1127 = vmatprep.subr.bf16.mxu0 0
      %1128 = vmatpush1.bf16.msra.mxu0 0
      %1129 = vmatprep.subr.bf16.mxu0 0
      %1130 = vmatpush1.bf16.msra.mxu0 0
      %1131 = vmatprep.subr.bf16.mxu0 0
      %1132 = vmatpush1.bf16.msra.mxu0 0
      %1133 = vmatprep.subr.bf16.mxu0 0
      %1134 = vmatpush1.bf16.msra.mxu0 0
      %1135 = vmatprep.subr.bf16.mxu0 0
      %1136 = vmatpush1.bf16.msra.mxu0 0
      %1137 = vmatprep.subr.bf16.mxu0 0
      %1138 = vmatpush1.bf16.msra.mxu0 0
      %1139 = vmatprep.subr.bf16.mxu0 0
      %1140 = vmatpush1.bf16.msra.mxu0 0
      %1141 = vmatprep.subr.bf16.mxu0 0
      %1142 = vmatpush1.bf16.msra.mxu0 0
      %1143 = vmatprep.mubr.bf16.mxu0 0
      %1144 = vmatmul.mubr.bf16.gmra.mrb[0].mxu0 %v359
      %v1145 = vpop.f32.mrb[0].mxu0
      %v1146 = vadd.f32 %v1105, %v1145
      %v1147 = vpop.f32.mrb[0].mxu0
      %v1148 = vpop.f32.mrb[0].mxu0
      %v1149 = vadd.f32 %v1108, %v1148
      %v1150 = vpop.f32.mrb[0].mxu0
      %1151 = vdwg.mxu0
      %v1152 = vmax.f32 %v1146, 0.0
      %v1153 = vmax.f32 %v1149, 0.0
      %v1154 = vpack.c.bf16 %v1153, %v1152
      %v1156 = vunpack.c.l.b16 %v1154
      %v1157 = vunpack.c.h.b16 %v1154
      %v1158 = vpack.c.b16 %v1156, %v1156
      %v1159 = vpack.c.b16 %v1157, %v1157
      %1162 = vst [vmem:[%s270] sm:$0xf] %v1158
      %1163 = vst [vmem:[%s270 + $0x4] sm:$0xf] %v1159
      %s1164 = smul.u32 2, %s16
      %p1165 = scmp.lt.s32.totalorder %s1164, 3
      %s1166 = scalar_select %p1165, %s1164, 3
      %s1167 = smul.addr %s1166, 4
      %s1168 = scalar_lea.vmem %s5, %s1167
      // Predicated region
      $region41: #{_detect_jit.16} parent=39 // pred_check
        %p1169 = pneg %p154
      $region42: #{_detect_jit.16} parent=39 // pred_check_branch
        %1171 = sbr.rel (%p1169) target = $region44
      $region43: #{_detect_jit.16} parent=39 // pred_region
        %s1172 = smul.u32 2, %s16
      $region44: #{_detect_jit.16} parent=39 // pred_fallthru
        _
    $region40: #{_detect_jit.16} parent=5 // pred_fallthru
      _
    %p1173 = scmp.le.s32.totalorder 2, %s11
    // Predicated region
    $region45: #{_detect_jit.16} parent=5 // pred_check
      %p1174 = pneg %p1173
    $region46: #{_detect_jit.16} parent=5 // pred_check_branch
      %1176 = sbr.rel (%p1174) target = $region48
    $region47: #{_detect_jit.16} parent=5 // pred_region
      %s1177 = ssub.s32 %s11, 2
      // Predicated region
      $region49: #{_detect_jit.16} parent=47 // pred_check
        %p1178 = pneg %p160
      $region50: #{_detect_jit.16} parent=47 // pred_check_branch
        %1180 = sbr.rel (%p1178) target = $region52
      $region51: #{_detect_jit.16} parent=47 // pred_region
        %s1181 = smul.u32 2, %s17
        %p1182 = scmp.lt.s32.totalorder %s1181, 3
        %s1183 = scalar_select %p1182, %s1181, 3
        %s1184 = smul.addr %s1183, 4
        %s1185 = scalar_lea.vmem %s5, %s1184
      $region52: #{_detect_jit.16} parent=47 // pred_fallthru
        _
    $region48: #{_detect_jit.16} parent=5 // pred_fallthru
      _
  $region6: #{_detect_jit.16} parent=0 // loop_footer
    %s15 = sadd.s32 1, %s11
  $region7: #{_detect_jit.16} parent=0 // loop_footer_branch
    %10 = sbr.rel target = $region3
  $region8: #{_detect_jit.16} parent=0 // loop_exit
    _

// kernel: _detect_jit.19
$region0: #{_detect_jit.19}
  #allocation0 [shape = 'u32[]', space=smem, size = 0x4, offset = 0x4, fixed_abs, tag = 'smem constant byte address 0x4 - core index']
  #allocation1 [shape = 'u32[144,128]{1,0:T(1,128)}', space=vmem, size = 0x12000, scoped, tag = 'internal scratch']
  %s0 = inlined_call_operand.vmem [shape: bf16[8,128], index: 0, kind: input, shape index: {}, may-alias: {0,2}]
  %s1 = inlined_call_operand.vmem [shape: bf16[8,128], index: 1, kind: input, shape index: {}]
  %s2 = inlined_call_operand.vmem [shape: bf16[8,128], index: 2, kind: input, shape index: {}, may-alias: {0,2}]
  %s3 = inlined_call_operand.vmem [shape: bf16[1152,128], index: 3, kind: input, shape index: {}]
  %s4 = inlined_call_operand.vmem [shape: f32[1,128], index: 4, kind: input, shape index: {}]
  %s5 = inlined_call_operand.vmem [shape: bf16[8,128], index: 5, kind: output, shape index: {}]
  %s6 = sld [smem:[#allocation0]]
  $region30: #{_detect_jit.19} parent=0
    _
  %s8 = ssub.s32 1, %s6
  %s9 = scalar_select 0, %s8, %s6
  // Predicated region
  $region2: #{_detect_jit.19} parent=0 // pred_check
    _
  $region3: #{_detect_jit.19} parent=0 // pred_check_branch
    %11 = sbr.rel (0) target = $region5
  $region4: #{_detect_jit.19} parent=0 // pred_region
    _
  $region5: #{_detect_jit.19} parent=0 // pred_fallthru
    _
  // Predicated region
  $region6: #{_detect_jit.19} parent=0 // pred_check
    _
  $region7: #{_detect_jit.19} parent=0 // pred_check_branch
    %13 = sbr.rel (0) target = $region9
  $region8: #{_detect_jit.19} parent=0 // pred_region
    _
  $region9: #{_detect_jit.19} parent=0 // pred_fallthru
    _
  // Predicated region
  $region10: #{_detect_jit.19} parent=0 // pred_check
    _
  $region11: #{_detect_jit.19} parent=0 // pred_check_branch
    %15 = sbr.rel (0) target = $region13
  $region12: #{_detect_jit.19} parent=0 // pred_region
    _
  $region13: #{_detect_jit.19} parent=0 // pred_fallthru
    _
  // Predicated region
  $region14: #{_detect_jit.19} parent=0 // pred_check
    _
  $region15: #{_detect_jit.19} parent=0 // pred_check_branch
    %17 = sbr.rel (0) target = $region17
  $region16: #{_detect_jit.19} parent=0 // pred_region
    _
  $region17: #{_detect_jit.19} parent=0 // pred_fallthru
    _
  // Predicated region
  $region18: #{_detect_jit.19} parent=0 // pred_check
    _
  $region19: #{_detect_jit.19} parent=0 // pred_check_branch
    %19 = sbr.rel (0) target = $region21
  $region20: #{_detect_jit.19} parent=0 // pred_region
    _
  $region21: #{_detect_jit.19} parent=0 // pred_fallthru
    _
  %v21 = vld [vmem:[%s0] sm:$0xf]
  %v23 = vunpack.c.l.b16 %v21
  %v24 = vpack.c.b16 %v23, %v23
  %v26 = vshrl.u32 %v24, 16
  %v28 = vshll.u32 %v24, 16
  %v30 = vrot.slane %v28, 1
  %v31 = vor.u32 %v26, %v30
  %v33 = vrot.slane %v28, 5
  %vm35 = vcmask 1043456
  %vm36 = vsmask.f32 3328
  %vm37 = vmand %vm35, %vm36
  %v38 = vsel %vm37, %v31, %v33
  %v39 = vrot.slane %v24, 1
  %v40 = vrot.slane %v24, 5
  %vm41 = vcmask 1042432
  %v44 = vsel %vm41, %v39, %v40
  %v46 = vld [vmem:[%s1] sm:$0xf]
  %v48 = vunpack.c.l.b16 %v46
  %v49 = vpack.c.b16 %v48, %v48
  %v51 = vshrl.u32 %v49, 16
  %v53 = vshll.u32 %v49, 16
  %v55 = vrot.slane %v53, 1
  %v56 = vor.u32 %v51, %v55
  %v58 = vrot.slane %v53, 5
  %v60 = vsel %vm37, %v56, %v58
  %v61 = vrot.slane %v49, 1
  %v62 = vrot.slane %v49, 5
  %v65 = vsel %vm41, %v61, %v62
  %v67 = vld [vmem:[%s2] sm:$0xf]
  %v69 = vunpack.c.l.b16 %v67
  %v70 = vpack.c.b16 %v69, %v69
  %v72 = vshrl.u32 %v70, 16
  %v74 = vshll.u32 %v70, 16
  %v76 = vrot.slane %v74, 1
  %v77 = vor.u32 %v72, %v76
  %v79 = vrot.slane %v74, 5
  %v81 = vsel %vm37, %v77, %v79
  %v82 = vrot.slane %v70, 1
  %v83 = vrot.slane %v70, 5
  %v86 = vsel %vm41, %v82, %v83
  %v88 = vld [vmem:[%s3] sm:$0xf]
  %v89 = vld [vmem:[%s3 + $0x4] sm:$0xf]
  %v90 = vld [vmem:[%s3 + $0x8] sm:$0xf]
  %v91 = vld [vmem:[%s3 + $0xc] sm:$0xf]
  %v92 = vld [vmem:[%s3 + $0x10] sm:$0xf]
  %v93 = vld [vmem:[%s3 + $0x14] sm:$0xf]
  %v94 = vld [vmem:[%s3 + $0x18] sm:$0xf]
  %v95 = vld [vmem:[%s3 + $0x1c] sm:$0xf]
  %v96 = vld [vmem:[%s3 + $0x20] sm:$0xf]
  %v97 = vld [vmem:[%s3 + $0x24] sm:$0xf]
  %v98 = vld [vmem:[%s3 + $0x28] sm:$0xf]
  %v99 = vld [vmem:[%s3 + $0x2c] sm:$0xf]
  %v100 = vld [vmem:[%s3 + $0x30] sm:$0xf]
  %v101 = vld [vmem:[%s3 + $0x34] sm:$0xf]
  %v102 = vld [vmem:[%s3 + $0x38] sm:$0xf]
  %v103 = vld [vmem:[%s3 + $0x3c] sm:$0xf]
  %v104 = vld [vmem:[%s3 + $0x40] sm:$0xf]
  %v105 = vld [vmem:[%s3 + $0x44] sm:$0xf]
  %v106 = vld [vmem:[%s3 + $0x48] sm:$0xf]
  %v107 = vld [vmem:[%s3 + $0x4c] sm:$0xf]
  %v108 = vld [vmem:[%s3 + $0x50] sm:$0xf]
  %v109 = vld [vmem:[%s3 + $0x54] sm:$0xf]
  %v110 = vld [vmem:[%s3 + $0x58] sm:$0xf]
  %v111 = vld [vmem:[%s3 + $0x5c] sm:$0xf]
  %v112 = vld [vmem:[%s3 + $0x60] sm:$0xf]
  %v113 = vld [vmem:[%s3 + $0x64] sm:$0xf]
  %v114 = vld [vmem:[%s3 + $0x68] sm:$0xf]
  %v115 = vld [vmem:[%s3 + $0x6c] sm:$0xf]
  %v116 = vld [vmem:[%s3 + $0x70] sm:$0xf]
  %v117 = vld [vmem:[%s3 + $0x74] sm:$0xf]
  %v118 = vld [vmem:[%s3 + $0x78] sm:$0xf]
  %v119 = vld [vmem:[%s3 + $0x7c] sm:$0xf]
  %v120 = vld [vmem:[%s3 + $0x80] sm:$0xf]
  %v121 = vld [vmem:[%s3 + $0x84] sm:$0xf]
  %v122 = vld [vmem:[%s3 + $0x88] sm:$0xf]
  %v123 = vld [vmem:[%s3 + $0x8c] sm:$0xf]
  %v124 = vld [vmem:[%s3 + $0x90] sm:$0xf]
  %v125 = vld [vmem:[%s3 + $0x94] sm:$0xf]
  %v126 = vld [vmem:[%s3 + $0x98] sm:$0xf]
  %v127 = vld [vmem:[%s3 + $0x9c] sm:$0xf]
  %v128 = vld [vmem:[%s3 + $0xa0] sm:$0xf]
  %v129 = vld [vmem:[%s3 + $0xa4] sm:$0xf]
  %v130 = vld [vmem:[%s3 + $0xa8] sm:$0xf]
  %v131 = vld [vmem:[%s3 + $0xac] sm:$0xf]
  %v132 = vld [vmem:[%s3 + $0xb0] sm:$0xf]
  %v133 = vld [vmem:[%s3 + $0xb4] sm:$0xf]
  %v134 = vld [vmem:[%s3 + $0xb8] sm:$0xf]
  %v135 = vld [vmem:[%s3 + $0xbc] sm:$0xf]
  %v136 = vld [vmem:[%s3 + $0xc0] sm:$0xf]
  %v137 = vld [vmem:[%s3 + $0xc4] sm:$0xf]
  %v138 = vld [vmem:[%s3 + $0xc8] sm:$0xf]
  %v139 = vld [vmem:[%s3 + $0xcc] sm:$0xf]
  %v140 = vld [vmem:[%s3 + $0xd0] sm:$0xf]
  %v141 = vld [vmem:[%s3 + $0xd4] sm:$0xf]
  %v142 = vld [vmem:[%s3 + $0xd8] sm:$0xf]
  %v143 = vld [vmem:[%s3 + $0xdc] sm:$0xf]
  %v144 = vld [vmem:[%s3 + $0xe0] sm:$0xf]
  %v145 = vld [vmem:[%s3 + $0xe4] sm:$0xf]
  %v146 = vld [vmem:[%s3 + $0xe8] sm:$0xf]
  %v147 = vld [vmem:[%s3 + $0xec] sm:$0xf]
  %v148 = vld [vmem:[%s3 + $0xf0] sm:$0xf]
  %v149 = vld [vmem:[%s3 + $0xf4] sm:$0xf]
  %v150 = vld [vmem:[%s3 + $0xf8] sm:$0xf]
  %v151 = vld [vmem:[%s3 + $0xfc] sm:$0xf]
  %v152 = vld [vmem:[%s3 + $0x100] sm:$0xf]
  %v153 = vld [vmem:[%s3 + $0x104] sm:$0xf]
  %v154 = vld [vmem:[%s3 + $0x108] sm:$0xf]
  %v155 = vld [vmem:[%s3 + $0x10c] sm:$0xf]
  %v156 = vld [vmem:[%s3 + $0x110] sm:$0xf]
  %v157 = vld [vmem:[%s3 + $0x114] sm:$0xf]
  %v158 = vld [vmem:[%s3 + $0x118] sm:$0xf]
  %v159 = vld [vmem:[%s3 + $0x11c] sm:$0xf]
  %v160 = vld [vmem:[%s3 + $0x120] sm:$0xf]
  %v161 = vld [vmem:[%s3 + $0x124] sm:$0xf]
  %v162 = vld [vmem:[%s3 + $0x128] sm:$0xf]
  %v163 = vld [vmem:[%s3 + $0x12c] sm:$0xf]
  %v164 = vld [vmem:[%s3 + $0x130] sm:$0xf]
  %v165 = vld [vmem:[%s3 + $0x134] sm:$0xf]
  %v166 = vld [vmem:[%s3 + $0x138] sm:$0xf]
  %v167 = vld [vmem:[%s3 + $0x13c] sm:$0xf]
  %v168 = vld [vmem:[%s3 + $0x140] sm:$0xf]
  %v169 = vld [vmem:[%s3 + $0x144] sm:$0xf]
  %v170 = vld [vmem:[%s3 + $0x148] sm:$0xf]
  %v171 = vld [vmem:[%s3 + $0x14c] sm:$0xf]
  %v172 = vld [vmem:[%s3 + $0x150] sm:$0xf]
  %v173 = vld [vmem:[%s3 + $0x154] sm:$0xf]
  %v174 = vld [vmem:[%s3 + $0x158] sm:$0xf]
  %v175 = vld [vmem:[%s3 + $0x15c] sm:$0xf]
  %v176 = vld [vmem:[%s3 + $0x160] sm:$0xf]
  %v177 = vld [vmem:[%s3 + $0x164] sm:$0xf]
  %v178 = vld [vmem:[%s3 + $0x168] sm:$0xf]
  %v179 = vld [vmem:[%s3 + $0x16c] sm:$0xf]
  %v180 = vld [vmem:[%s3 + $0x170] sm:$0xf]
  %v181 = vld [vmem:[%s3 + $0x174] sm:$0xf]
  %v182 = vld [vmem:[%s3 + $0x178] sm:$0xf]
  %v183 = vld [vmem:[%s3 + $0x17c] sm:$0xf]
  %v184 = vld [vmem:[%s3 + $0x180] sm:$0xf]
  %v185 = vld [vmem:[%s3 + $0x184] sm:$0xf]
  %v186 = vld [vmem:[%s3 + $0x188] sm:$0xf]
  %v187 = vld [vmem:[%s3 + $0x18c] sm:$0xf]
  %v188 = vld [vmem:[%s3 + $0x190] sm:$0xf]
  %v189 = vld [vmem:[%s3 + $0x194] sm:$0xf]
  %v190 = vld [vmem:[%s3 + $0x198] sm:$0xf]
  %v191 = vld [vmem:[%s3 + $0x19c] sm:$0xf]
  %v192 = vld [vmem:[%s3 + $0x1a0] sm:$0xf]
  %v193 = vld [vmem:[%s3 + $0x1a4] sm:$0xf]
  %v194 = vld [vmem:[%s3 + $0x1a8] sm:$0xf]
  %v195 = vld [vmem:[%s3 + $0x1ac] sm:$0xf]
  %v196 = vld [vmem:[%s3 + $0x1b0] sm:$0xf]
  %v197 = vld [vmem:[%s3 + $0x1b4] sm:$0xf]
  %v198 = vld [vmem:[%s3 + $0x1b8] sm:$0xf]
  %v199 = vld [vmem:[%s3 + $0x1bc] sm:$0xf]
  %v200 = vld [vmem:[%s3 + $0x1c0] sm:$0xf]
  %v201 = vld [vmem:[%s3 + $0x1c4] sm:$0xf]
  %v202 = vld [vmem:[%s3 + $0x1c8] sm:$0xf]
  %v203 = vld [vmem:[%s3 + $0x1cc] sm:$0xf]
  %v204 = vld [vmem:[%s3 + $0x1d0] sm:$0xf]
  %v205 = vld [vmem:[%s3 + $0x1d4] sm:$0xf]
  %v206 = vld [vmem:[%s3 + $0x1d8] sm:$0xf]
  %v207 = vld [vmem:[%s3 + $0x1dc] sm:$0xf]
  %v208 = vld [vmem:[%s3 + $0x1e0] sm:$0xf]
  %v209 = vld [vmem:[%s3 + $0x1e4] sm:$0xf]
  %v210 = vld [vmem:[%s3 + $0x1e8] sm:$0xf]
  %v211 = vld [vmem:[%s3 + $0x1ec] sm:$0xf]
  %v212 = vld [vmem:[%s3 + $0x1f0] sm:$0xf]
  %v213 = vld [vmem:[%s3 + $0x1f4] sm:$0xf]
  %v214 = vld [vmem:[%s3 + $0x1f8] sm:$0xf]
  %v215 = vld [vmem:[%s3 + $0x1fc] sm:$0xf]
  %v216 = vld [vmem:[%s3 + $0x200] sm:$0xf]
  %v217 = vld [vmem:[%s3 + $0x204] sm:$0xf]
  %v218 = vld [vmem:[%s3 + $0x208] sm:$0xf]
  %v219 = vld [vmem:[%s3 + $0x20c] sm:$0xf]
  %v220 = vld [vmem:[%s3 + $0x210] sm:$0xf]
  %v221 = vld [vmem:[%s3 + $0x214] sm:$0xf]
  %v222 = vld [vmem:[%s3 + $0x218] sm:$0xf]
  %v223 = vld [vmem:[%s3 + $0x21c] sm:$0xf]
  %v224 = vld [vmem:[%s3 + $0x220] sm:$0xf]
  %v225 = vld [vmem:[%s3 + $0x224] sm:$0xf]
  %v226 = vld [vmem:[%s3 + $0x228] sm:$0xf]
  %v227 = vld [vmem:[%s3 + $0x22c] sm:$0xf]
  %v228 = vld [vmem:[%s3 + $0x230] sm:$0xf]
  %v229 = vld [vmem:[%s3 + $0x234] sm:$0xf]
  %v230 = vld [vmem:[%s3 + $0x238] sm:$0xf]
  %v231 = vld [vmem:[%s3 + $0x23c] sm:$0xf]
  %v232 = vld [vmem:[%s4] sm:$0x1]
  %v234 = vlaneseq
  %v235 = vshrl.u32 %v234, 7
  %v236 = vsub.s32 0, %v235
  %v237 = vrot.slane %v232, %v236
  %v383 = vunpack.c.l.b16 %v88
  %v384 = vunpack.c.l.b16 %v89
  %v385 = vunpack.c.l.b16 %v90
  %v386 = vunpack.c.l.b16 %v91
  %v387 = vunpack.c.l.b16 %v92
  %v388 = vunpack.c.l.b16 %v93
  %v389 = vunpack.c.l.b16 %v94
  %v390 = vunpack.c.l.b16 %v95
  %v391 = vunpack.c.l.b16 %v96
  %v392 = vunpack.c.l.b16 %v97
  %v393 = vunpack.c.l.b16 %v98
  %v394 = vunpack.c.l.b16 %v99
  %v395 = vunpack.c.l.b16 %v100
  %v396 = vunpack.c.l.b16 %v101
  %v397 = vunpack.c.l.b16 %v102
  %v398 = vunpack.c.l.b16 %v103
  %v399 = vunpack.c.l.b16 %v104
  %v400 = vunpack.c.l.b16 %v105
  %v401 = vunpack.c.l.b16 %v106
  %v402 = vunpack.c.l.b16 %v107
  %v403 = vunpack.c.l.b16 %v108
  %v404 = vunpack.c.l.b16 %v109
  %v405 = vunpack.c.l.b16 %v110
  %v406 = vunpack.c.l.b16 %v111
  %v407 = vunpack.c.l.b16 %v112
  %v408 = vunpack.c.l.b16 %v113
  %v409 = vunpack.c.l.b16 %v114
  %v410 = vunpack.c.l.b16 %v115
  %v411 = vunpack.c.l.b16 %v116
  %v412 = vunpack.c.l.b16 %v117
  %v413 = vunpack.c.l.b16 %v118
  %v414 = vunpack.c.l.b16 %v119
  %v415 = vunpack.c.l.b16 %v120
  %v416 = vunpack.c.l.b16 %v121
  %v417 = vunpack.c.l.b16 %v122
  %v418 = vunpack.c.l.b16 %v123
  %v419 = vunpack.c.l.b16 %v124
  %v420 = vunpack.c.l.b16 %v125
  %v421 = vunpack.c.l.b16 %v126
  %v422 = vunpack.c.l.b16 %v127
  %v423 = vunpack.c.l.b16 %v128
  %v424 = vunpack.c.l.b16 %v129
  %v425 = vunpack.c.l.b16 %v130
  %v426 = vunpack.c.l.b16 %v131
  %v427 = vunpack.c.l.b16 %v132
  %v428 = vunpack.c.l.b16 %v133
  %v429 = vunpack.c.l.b16 %v134
  %v430 = vunpack.c.l.b16 %v135
  %v431 = vunpack.c.l.b16 %v136
  %v432 = vunpack.c.l.b16 %v137
  %v433 = vunpack.c.l.b16 %v138
  %v434 = vunpack.c.l.b16 %v139
  %v435 = vunpack.c.l.b16 %v140
  %v436 = vunpack.c.l.b16 %v141
  %v437 = vunpack.c.l.b16 %v142
  %v438 = vunpack.c.l.b16 %v143
  %v439 = vunpack.c.l.b16 %v144
  %v440 = vunpack.c.l.b16 %v145
  %v441 = vunpack.c.l.b16 %v146
  %v442 = vunpack.c.l.b16 %v147
  %v443 = vunpack.c.l.b16 %v148
  %v444 = vunpack.c.l.b16 %v149
  %v445 = vunpack.c.l.b16 %v150
  %v446 = vunpack.c.l.b16 %v151
  %v447 = vunpack.c.l.b16 %v152
  %v448 = vunpack.c.l.b16 %v153
  %v449 = vunpack.c.l.b16 %v154
  %v450 = vunpack.c.l.b16 %v155
  %v451 = vunpack.c.l.b16 %v156
  %v452 = vunpack.c.l.b16 %v157
  %v453 = vunpack.c.l.b16 %v158
  %v454 = vunpack.c.l.b16 %v159
  %v455 = vunpack.c.l.b16 %v160
  %v456 = vunpack.c.l.b16 %v161
  %v457 = vunpack.c.l.b16 %v162
  %v458 = vunpack.c.l.b16 %v163
  %v459 = vunpack.c.l.b16 %v164
  %v460 = vunpack.c.l.b16 %v165
  %v461 = vunpack.c.l.b16 %v166
  %v462 = vunpack.c.l.b16 %v167
  %v463 = vunpack.c.l.b16 %v168
  %v464 = vunpack.c.l.b16 %v169
  %v465 = vunpack.c.l.b16 %v170
  %v466 = vunpack.c.l.b16 %v171
  %v467 = vunpack.c.l.b16 %v172
  %v468 = vunpack.c.l.b16 %v173
  %v469 = vunpack.c.l.b16 %v174
  %v470 = vunpack.c.l.b16 %v175
  %v471 = vunpack.c.l.b16 %v176
  %v472 = vunpack.c.l.b16 %v177
  %v473 = vunpack.c.l.b16 %v178
  %v474 = vunpack.c.l.b16 %v179
  %v475 = vunpack.c.l.b16 %v180
  %v476 = vunpack.c.l.b16 %v181
  %v477 = vunpack.c.l.b16 %v182
  %v478 = vunpack.c.l.b16 %v183
  %v479 = vunpack.c.l.b16 %v184
  %v480 = vunpack.c.l.b16 %v185
  %v481 = vunpack.c.l.b16 %v186
  %v482 = vunpack.c.l.b16 %v187
  %v483 = vunpack.c.l.b16 %v188
  %v484 = vunpack.c.l.b16 %v189
  %v485 = vunpack.c.l.b16 %v190
  %v486 = vunpack.c.l.b16 %v191
  %v487 = vunpack.c.l.b16 %v192
  %v488 = vunpack.c.l.b16 %v193
  %v489 = vunpack.c.l.b16 %v194
  %v490 = vunpack.c.l.b16 %v195
  %v491 = vunpack.c.l.b16 %v196
  %v492 = vunpack.c.l.b16 %v197
  %v493 = vunpack.c.l.b16 %v198
  %v494 = vunpack.c.l.b16 %v199
  %v495 = vunpack.c.l.b16 %v200
  %v496 = vunpack.c.l.b16 %v201
  %v497 = vunpack.c.l.b16 %v202
  %v498 = vunpack.c.l.b16 %v203
  %v499 = vunpack.c.l.b16 %v204
  %v500 = vunpack.c.l.b16 %v205
  %v501 = vunpack.c.l.b16 %v206
  %v502 = vunpack.c.l.b16 %v207
  %v503 = vunpack.c.l.b16 %v208
  %v504 = vunpack.c.l.b16 %v209
  %v505 = vunpack.c.l.b16 %v210
  %v506 = vunpack.c.l.b16 %v211
  %v507 = vunpack.c.l.b16 %v212
  %v508 = vunpack.c.l.b16 %v213
  %v509 = vunpack.c.l.b16 %v214
  %v510 = vunpack.c.l.b16 %v215
  %v511 = vunpack.c.l.b16 %v216
  %v512 = vunpack.c.l.b16 %v217
  %v513 = vunpack.c.l.b16 %v218
  %v514 = vunpack.c.l.b16 %v219
  %v515 = vunpack.c.l.b16 %v220
  %v516 = vunpack.c.l.b16 %v221
  %v517 = vunpack.c.l.b16 %v222
  %v518 = vunpack.c.l.b16 %v223
  %v519 = vunpack.c.l.b16 %v224
  %v520 = vunpack.c.l.b16 %v225
  %v521 = vunpack.c.l.b16 %v226
  %v522 = vunpack.c.l.b16 %v227
  %v523 = vunpack.c.l.b16 %v228
  %v524 = vunpack.c.l.b16 %v229
  %v525 = vunpack.c.l.b16 %v230
  %v526 = vunpack.c.l.b16 %v231
  %v527 = vpack.c.b16 %v384, %v383
  %v528 = vpack.c.b16 %v386, %v385
  %v529 = vpack.c.b16 %v388, %v387
  %v530 = vpack.c.b16 %v390, %v389
  %v531 = vpack.c.b16 %v392, %v391
  %v532 = vpack.c.b16 %v394, %v393
  %v533 = vpack.c.b16 %v396, %v395
  %v534 = vpack.c.b16 %v398, %v397
  %v535 = vpack.c.b16 %v400, %v399
  %v536 = vpack.c.b16 %v402, %v401
  %v537 = vpack.c.b16 %v404, %v403
  %v538 = vpack.c.b16 %v406, %v405
  %v539 = vpack.c.b16 %v408, %v407
  %v540 = vpack.c.b16 %v410, %v409
  %v541 = vpack.c.b16 %v412, %v411
  %v542 = vpack.c.b16 %v414, %v413
  %v543 = vpack.c.b16 %v416, %v415
  %v544 = vpack.c.b16 %v418, %v417
  %v545 = vpack.c.b16 %v420, %v419
  %v546 = vpack.c.b16 %v422, %v421
  %v547 = vpack.c.b16 %v424, %v423
  %v548 = vpack.c.b16 %v426, %v425
  %v549 = vpack.c.b16 %v428, %v427
  %v550 = vpack.c.b16 %v430, %v429
  %v551 = vpack.c.b16 %v432, %v431
  %v552 = vpack.c.b16 %v434, %v433
  %v553 = vpack.c.b16 %v436, %v435
  %v554 = vpack.c.b16 %v438, %v437
  %v555 = vpack.c.b16 %v440, %v439
  %v556 = vpack.c.b16 %v442, %v441
  %v557 = vpack.c.b16 %v444, %v443
  %v558 = vpack.c.b16 %v446, %v445
  %v559 = vpack.c.b16 %v448, %v447
  %v560 = vpack.c.b16 %v450, %v449
  %v561 = vpack.c.b16 %v452, %v451
  %v562 = vpack.c.b16 %v454, %v453
  %v563 = vpack.c.b16 %v456, %v455
  %v564 = vpack.c.b16 %v458, %v457
  %v565 = vpack.c.b16 %v460, %v459
  %v566 = vpack.c.b16 %v462, %v461
  %v567 = vpack.c.b16 %v464, %v463
  %v568 = vpack.c.b16 %v466, %v465
  %v569 = vpack.c.b16 %v468, %v467
  %v570 = vpack.c.b16 %v470, %v469
  %v571 = vpack.c.b16 %v472, %v471
  %v572 = vpack.c.b16 %v474, %v473
  %v573 = vpack.c.b16 %v476, %v475
  %v574 = vpack.c.b16 %v478, %v477
  %v575 = vpack.c.b16 %v480, %v479
  %v576 = vpack.c.b16 %v482, %v481
  %v577 = vpack.c.b16 %v484, %v483
  %v578 = vpack.c.b16 %v486, %v485
  %v579 = vpack.c.b16 %v488, %v487
  %v580 = vpack.c.b16 %v490, %v489
  %v581 = vpack.c.b16 %v492, %v491
  %v582 = vpack.c.b16 %v494, %v493
  %v583 = vpack.c.b16 %v496, %v495
  %v584 = vpack.c.b16 %v498, %v497
  %v585 = vpack.c.b16 %v500, %v499
  %v586 = vpack.c.b16 %v502, %v501
  %v587 = vpack.c.b16 %v504, %v503
  %v588 = vpack.c.b16 %v506, %v505
  %v589 = vpack.c.b16 %v508, %v507
  %v590 = vpack.c.b16 %v510, %v509
  %v591 = vpack.c.b16 %v512, %v511
  %v592 = vpack.c.b16 %v514, %v513
  %v593 = vpack.c.b16 %v516, %v515
  %v594 = vpack.c.b16 %v518, %v517
  %v595 = vpack.c.b16 %v520, %v519
  %v596 = vpack.c.b16 %v522, %v521
  %v597 = vpack.c.b16 %v524, %v523
  %v598 = vpack.c.b16 %v526, %v525
  %671 = vmatprep.subr.bf16.mxu0 0
  %672 = vmatpush1.bf16.msra.mxu0 %v527
  %673 = vmatprep.subr.bf16.mxu0 0
  %674 = vmatpush1.bf16.msra.mxu0 %v528
  %675 = vmatprep.subr.bf16.mxu0 0
  %676 = vmatpush1.bf16.msra.mxu0 %v529
  %677 = vmatprep.subr.bf16.mxu0 0
  %678 = vmatpush1.bf16.msra.mxu0 %v530
  %679 = vmatprep.subr.bf16.mxu0 0
  %680 = vmatpush1.bf16.msra.mxu0 %v531
  %681 = vmatprep.subr.bf16.mxu0 0
  %682 = vmatpush1.bf16.msra.mxu0 %v532
  %683 = vmatprep.subr.bf16.mxu0 0
  %684 = vmatpush1.bf16.msra.mxu0 %v533
  %685 = vmatprep.subr.bf16.mxu0 0
  %686 = vmatpush1.bf16.msra.mxu0 %v534
  %687 = vmatprep.subr.bf16.mxu0 0
  %688 = vmatpush1.bf16.msra.mxu0 %v535
  %689 = vmatprep.subr.bf16.mxu0 0
  %690 = vmatpush1.bf16.msra.mxu0 %v536
  %691 = vmatprep.subr.bf16.mxu0 0
  %692 = vmatpush1.bf16.msra.mxu0 %v537
  %693 = vmatprep.subr.bf16.mxu0 0
  %694 = vmatpush1.bf16.msra.mxu0 %v538
  %695 = vmatprep.subr.bf16.mxu0 0
  %696 = vmatpush1.bf16.msra.mxu0 %v539
  %697 = vmatprep.subr.bf16.mxu0 0
  %698 = vmatpush1.bf16.msra.mxu0 %v540
  %699 = vmatprep.subr.bf16.mxu0 0
  %700 = vmatpush1.bf16.msra.mxu0 %v541
  %701 = vmatprep.subr.bf16.mxu0 0
  %702 = vmatpush1.bf16.msra.mxu0 %v542
  %703 = vmatprep.mubr.bf16.mxu0 %v38
  %704 = vmatmul.mubr.bf16.gmra.mrb[0].mxu0 %v21
  %v705 = vpop.f32.mrb[0].mxu0
  %v706 = vadd.f32 %v237, %v705
  %v707 = vpop.f32.mrb[0].mxu0
  %v708 = vpop.f32.mrb[0].mxu0
  %v709 = vpop.f32.mrb[0].mxu0
  %710 = vdwg.mxu0
  %711 = vmatprep.subr.bf16.mxu0 0
  %712 = vmatpush1.bf16.msra.mxu0 %v543
  %713 = vmatprep.subr.bf16.mxu0 0
  %714 = vmatpush1.bf16.msra.mxu0 %v544
  %715 = vmatprep.subr.bf16.mxu0 0
  %716 = vmatpush1.bf16.msra.mxu0 %v545
  %717 = vmatprep.subr.bf16.mxu0 0
  %718 = vmatpush1.bf16.msra.mxu0 %v546
  %719 = vmatprep.subr.bf16.mxu0 0
  %720 = vmatpush1.bf16.msra.mxu0 %v547
  %721 = vmatprep.subr.bf16.mxu0 0
  %722 = vmatpush1.bf16.msra.mxu0 %v548
  %723 = vmatprep.subr.bf16.mxu0 0
  %724 = vmatpush1.bf16.msra.mxu0 %v549
  %725 = vmatprep.subr.bf16.mxu0 0
  %726 = vmatpush1.bf16.msra.mxu0 %v550
  %727 = vmatprep.subr.bf16.mxu0 0
  %728 = vmatpush1.bf16.msra.mxu0 %v551
  %729 = vmatprep.subr.bf16.mxu0 0
  %730 = vmatpush1.bf16.msra.mxu0 %v552
  %731 = vmatprep.subr.bf16.mxu0 0
  %732 = vmatpush1.bf16.msra.mxu0 %v553
  %733 = vmatprep.subr.bf16.mxu0 0
  %734 = vmatpush1.bf16.msra.mxu0 %v554
  %735 = vmatprep.subr.bf16.mxu0 0
  %736 = vmatpush1.bf16.msra.mxu0 %v555
  %737 = vmatprep.subr.bf16.mxu0 0
  %738 = vmatpush1.bf16.msra.mxu0 %v556
  %739 = vmatprep.subr.bf16.mxu0 0
  %740 = vmatpush1.bf16.msra.mxu0 %v557
  %741 = vmatprep.subr.bf16.mxu0 0
  %742 = vmatpush1.bf16.msra.mxu0 %v558
  %743 = vmatprep.mubr.bf16.mxu0 %v46
  %744 = vmatmul.mubr.bf16.gmra.mrb[0].mxu0 %v44
  %v745 = vpop.f32.mrb[0].mxu0
  %v746 = vadd.f32 %v706, %v745
  %v747 = vpop.f32.mrb[0].mxu0
  %v748 = vpop.f32.mrb[0].mxu0
  %v749 = vpop.f32.mrb[0].mxu0
  %750 = vdwg.mxu0
  %751 = vmatprep.subr.bf16.mxu0 0
  %752 = vmatpush1.bf16.msra.mxu0 %v559
  %753 = vmatprep.subr.bf16.mxu0 0
  %754 = vmatpush1.bf16.msra.mxu0 %v560
  %755 = vmatprep.subr.bf16.mxu0 0
  %756 = vmatpush1.bf16.msra.mxu0 %v561
  %757 = vmatprep.subr.bf16.mxu0 0
  %758 = vmatpush1.bf16.msra.mxu0 %v562
  %759 = vmatprep.subr.bf16.mxu0 0
  %760 = vmatpush1.bf16.msra.mxu0 %v563
  %761 = vmatprep.subr.bf16.mxu0 0
  %762 = vmatpush1.bf16.msra.mxu0 %v564
  %763 = vmatprep.subr.bf16.mxu0 0
  %764 = vmatpush1.bf16.msra.mxu0 %v565
  %765 = vmatprep.subr.bf16.mxu0 0
  %766 = vmatpush1.bf16.msra.mxu0 %v566
  %767 = vmatprep.subr.bf16.mxu0 0
  %768 = vmatpush1.bf16.msra.mxu0 %v567
  %769 = vmatprep.subr.bf16.mxu0 0
  %770 = vmatpush1.bf16.msra.mxu0 %v568
  %771 = vmatprep.subr.bf16.mxu0 0
  %772 = vmatpush1.bf16.msra.mxu0 %v569
  %773 = vmatprep.subr.bf16.mxu0 0
  %774 = vmatpush1.bf16.msra.mxu0 %v570
  %775 = vmatprep.subr.bf16.mxu0 0
  %776 = vmatpush1.bf16.msra.mxu0 %v571
  %777 = vmatprep.subr.bf16.mxu0 0
  %778 = vmatpush1.bf16.msra.mxu0 %v572
  %779 = vmatprep.subr.bf16.mxu0 0
  %780 = vmatpush1.bf16.msra.mxu0 %v573
  %781 = vmatprep.subr.bf16.mxu0 0
  %782 = vmatpush1.bf16.msra.mxu0 %v574
  %783 = vmatprep.mubr.bf16.mxu0 %v65
  %784 = vmatmul.mubr.bf16.gmra.mrb[0].mxu0 %v60
  %v785 = vpop.f32.mrb[0].mxu0
  %v786 = vadd.f32 %v746, %v785
  %v787 = vpop.f32.mrb[0].mxu0
  %v788 = vpop.f32.mrb[0].mxu0
  %v789 = vpop.f32.mrb[0].mxu0
  %790 = vdwg.mxu0
  %791 = vmatprep.subr.bf16.mxu0 0
  %792 = vmatpush1.bf16.msra.mxu0 %v575
  %793 = vmatprep.subr.bf16.mxu0 0
  %794 = vmatpush1.bf16.msra.mxu0 %v576
  %795 = vmatprep.subr.bf16.mxu0 0
  %796 = vmatpush1.bf16.msra.mxu0 %v577
  %797 = vmatprep.subr.bf16.mxu0 0
  %798 = vmatpush1.bf16.msra.mxu0 %v578
  %799 = vmatprep.subr.bf16.mxu0 0
  %800 = vmatpush1.bf16.msra.mxu0 %v579
  %801 = vmatprep.subr.bf16.mxu0 0
  %802 = vmatpush1.bf16.msra.mxu0 %v580
  %803 = vmatprep.subr.bf16.mxu0 0
  %804 = vmatpush1.bf16.msra.mxu0 %v581
  %805 = vmatprep.subr.bf16.mxu0 0
  %806 = vmatpush1.bf16.msra.mxu0 %v582
  %807 = vmatprep.subr.bf16.mxu0 0
  %808 = vmatpush1.bf16.msra.mxu0 %v583
  %809 = vmatprep.subr.bf16.mxu0 0
  %810 = vmatpush1.bf16.msra.mxu0 %v584
  %811 = vmatprep.subr.bf16.mxu0 0
  %812 = vmatpush1.bf16.msra.mxu0 %v585
  %813 = vmatprep.subr.bf16.mxu0 0
  %814 = vmatpush1.bf16.msra.mxu0 %v586
  %815 = vmatprep.subr.bf16.mxu0 0
  %816 = vmatpush1.bf16.msra.mxu0 %v587
  %817 = vmatprep.subr.bf16.mxu0 0
  %818 = vmatpush1.bf16.msra.mxu0 %v588
  %819 = vmatprep.subr.bf16.mxu0 0
  %820 = vmatpush1.bf16.msra.mxu0 %v589
  %821 = vmatprep.subr.bf16.mxu0 0
  %822 = vmatpush1.bf16.msra.mxu0 %v590
  %823 = vmatprep.mubr.bf16.mxu0 %v81
  %824 = vmatmul.mubr.bf16.gmra.mrb[0].mxu0 %v67
  %v825 = vpop.f32.mrb[0].mxu0
  %v826 = vadd.f32 %v786, %v825
  %v827 = vpop.f32.mrb[0].mxu0
  %v828 = vpop.f32.mrb[0].mxu0
  %v829 = vpop.f32.mrb[0].mxu0
  %830 = vdwg.mxu0
  %831 = vmatprep.subr.bf16.mxu0 0
  %832 = vmatpush1.bf16.msra.mxu0 %v591
  %833 = vmatprep.subr.bf16.mxu0 0
  %834 = vmatpush1.bf16.msra.mxu0 %v592
  %835 = vmatprep.subr.bf16.mxu0 0
  %836 = vmatpush1.bf16.msra.mxu0 %v593
  %837 = vmatprep.subr.bf16.mxu0 0
  %838 = vmatpush1.bf16.msra.mxu0 %v594
  %839 = vmatprep.subr.bf16.mxu0 0
  %840 = vmatpush1.bf16.msra.mxu0 %v595
  %841 = vmatprep.subr.bf16.mxu0 0
  %842 = vmatpush1.bf16.msra.mxu0 %v596
  %843 = vmatprep.subr.bf16.mxu0 0
  %844 = vmatpush1.bf16.msra.mxu0 %v597
  %845 = vmatprep.subr.bf16.mxu0 0
  %846 = vmatpush1.bf16.msra.mxu0 %v598
  %847 = vmatprep.subr.bf16.mxu0 0
  %848 = vmatpush1.bf16.msra.mxu0 0
  %849 = vmatprep.subr.bf16.mxu0 0
  %850 = vmatpush1.bf16.msra.mxu0 0
  %851 = vmatprep.subr.bf16.mxu0 0
  %852 = vmatpush1.bf16.msra.mxu0 0
  %853 = vmatprep.subr.bf16.mxu0 0
  %854 = vmatpush1.bf16.msra.mxu0 0
  %855 = vmatprep.subr.bf16.mxu0 0
  %856 = vmatpush1.bf16.msra.mxu0 0
  %857 = vmatprep.subr.bf16.mxu0 0
  %858 = vmatpush1.bf16.msra.mxu0 0
  %859 = vmatprep.subr.bf16.mxu0 0
  %860 = vmatpush1.bf16.msra.mxu0 0
  %861 = vmatprep.subr.bf16.mxu0 0
  %862 = vmatpush1.bf16.msra.mxu0 0
  %863 = vmatprep.mubr.bf16.mxu0 0
  %864 = vmatmul.mubr.bf16.gmra.mrb[0].mxu0 %v86
  %v865 = vpop.f32.mrb[0].mxu0
  %v866 = vadd.f32 %v826, %v865
  %v867 = vpop.f32.mrb[0].mxu0
  %v868 = vpop.f32.mrb[0].mxu0
  %v869 = vpop.f32.mrb[0].mxu0
  %870 = vdwg.mxu0
  %v871 = vmax.f32 %v866, 0.0
  %v872 = vpack.c.bf16 %v871, %v871
  %873 = vst [vmem:[%s5] sm:$0xf] %v872
  // Predicated region
  $region22: #{_detect_jit.19} parent=0 // pred_check
    _
  $region23: #{_detect_jit.19} parent=0 // pred_check_branch
    %875 = sbr.rel (0) target = $region25
  $region24: #{_detect_jit.19} parent=0 // pred_region
    _
  $region25: #{_detect_jit.19} parent=0 // pred_fallthru
    _
  // Predicated region
  $region26: #{_detect_jit.19} parent=0 // pred_check
    _
  $region27: #{_detect_jit.19} parent=0 // pred_check_branch
    %877 = sbr.rel (0) target = $region29
  $region28: #{_detect_jit.19} parent=0 // pred_region
    _
  $region29: #{_detect_jit.19} parent=0 // pred_fallthru
    _

// kernel: _detect_jit.23
$region0: #{_detect_jit.23}
  #allocation0 [shape = 'u32[]', space=smem, size = 0x4, offset = 0x4, fixed_abs, tag = 'smem constant byte address 0x4 - core index']
  #allocation1 [shape = 'u32[144,128]{1,0:T(1,128)}', space=vmem, size = 0x12000, scoped, tag = 'internal scratch']
  %s0 = inlined_call_operand.vmem [shape: f32[32,128], index: 0, kind: input, shape index: {}]
  %s1 = inlined_call_operand.vmem [shape: f32[8,128], index: 1, kind: input, shape index: {}]
  %s2 = inlined_call_operand.hbm [shape: f32[8,128], index: 2, kind: output, shape index: {0}]
  %s3 = inlined_call_operand.hbm [shape: f32[2,128], index: 3, kind: output, shape index: {1}]
  %s4 = inlined_call_operand.hbm [shape: f32[20,128], index: 4, kind: output, shape index: {2}]
  %5 = xla_tuple %s2, %s3, %s4
  %s6 = sld [smem:[#allocation0]]
  $region34: #{_detect_jit.23} parent=0
    _
  %s8 = ssub.s32 1, %s6
  %s9 = scalar_select 0, %s8, %s6
  $region1: #{_detect_jit.23} parent=0
    #allocation2 [shape = 'u8[4096]{0}', space=vmem, size = 0x1000, scoped, tag = 'output window, operand 0, single buffered']
    #allocation3 [shape = 's32[1]{0}', space=sflag, size = 0x4, scoped, tag = 'scoped memory for _detect_jit.23']
    #allocation4 [shape = 'u8[1024]{0}', space=vmem, size = 0x400, scoped, tag = 'output window, operand 1, single buffered']
    #allocation5 [shape = 's32[1]{0}', space=sflag, size = 0x4, scoped, tag = 'scoped memory for _detect_jit.23']
    #allocation6 [shape = 'u8[12288]{0}', space=vmem, size = 0x3000, scoped, tag = 'output window, operand 2, single buffered']
    %10 = vsyncpa [#allocation3], 0
    %11 = vsyncpa [#allocation5], 0
    // Predicated region
    $region2: #{_detect_jit.23} parent=1 // pred_check
      _
    $region3: #{_detect_jit.23} parent=1 // pred_check_branch
      %13 = sbr.rel (0) target = $region5
    $region4: #{_detect_jit.23} parent=1 // pred_region
      _
    $region5: #{_detect_jit.23} parent=1 // pred_fallthru
      _
    // Predicated region
    $region6: #{_detect_jit.23} parent=1 // pred_check
      _
    $region7: #{_detect_jit.23} parent=1 // pred_check_branch
      %15 = sbr.rel (0) target = $region9
    $region8: #{_detect_jit.23} parent=1 // pred_region
      _
    $region9: #{_detect_jit.23} parent=1 // pred_fallthru
      _
    %v16 = vld [vmem:[%s1] sm:$0x1]
    %v17 = vld [vmem:[%s1 + $0x1] sm:$0x1]
    %v18 = vld [vmem:[%s1 + $0x2] sm:$0x1]
    %v19 = vld [vmem:[%s1 + $0x3] sm:$0x1]
    %v20 = vmul.f32 %v18, 0.1
    %v21 = vmul.f32 %v19, 0.1
    %v22 = vld [vmem:[%s0] sm:$0x1]
    %v23 = vmul.f32 %v22, %v20
    %v24 = vadd.f32 %v16, %v23
    %v25 = vld [vmem:[%s0 + $0x1] sm:$0x1]
    %v26 = vmul.f32 %v25, %v21
    %v27 = vadd.f32 %v17, %v26
    %v28 = vld [vmem:[%s0 + $0x2] sm:$0x1]
    %v29 = vmul.f32 %v28, 0.2
    %v30 = vmul.f32 %v29, 1.442695
    %v31 = vpow.pop %v30
    %v32 = vmul.f32 %v18, %v31
    %v33 = vld [vmem:[%s0 + $0x3] sm:$0x1]
    %v34 = vmul.f32 %v33, 0.2
    %v35 = vmul.f32 %v34, 1.442695
    %v36 = vpow.pop %v35
    %v37 = vmul.f32 %v19, %v36
    %v38 = vmul.f32 %v32, 0.5
    %v39 = vsub.f32 %v24, %v38
    %v40 = vmul.f32 %v37, 0.5
    %v41 = vsub.f32 %v27, %v40
    %v42 = vmul.f32 %v39, 32.0
    %43 = vst [vmem:[#allocation2] sm:$0x1] %v42
    %v44 = vmul.f32 %v41, 32.0
    %45 = vst [vmem:[#allocation2 + $0x1] sm:$0x1] %v44
    %v46 = vadd.f32 %v39, %v32
    %v47 = vmul.f32 %v46, 32.0
    %48 = vst [vmem:[#allocation2 + $0x2] sm:$0x1] %v47
    %v49 = vadd.f32 %v41, %v37
    %v50 = vmul.f32 %v49, 32.0
    %51 = vst [vmem:[#allocation2 + $0x3] sm:$0x1] %v50
    %v52 = vld [vmem:[%s0 + $0xc] sm:$0x1]
    %v53 = vld [vmem:[%s0 + $0xd] sm:$0x1]
    %v54 = vmul.f32 %v52, %v20
    %v55 = vadd.f32 %v16, %v54
    %v56 = vmul.f32 %v55, 32.0
    %57 = vst [vmem:[#allocation6] sm:$0x1] %v56
    %v58 = vmul.f32 %v53, %v21
    %v59 = vadd.f32 %v17, %v58
    %v60 = vmul.f32 %v59, 32.0
    %61 = vst [vmem:[#allocation6 + $0x1] sm:$0x1] %v60
    %v62 = vld [vmem:[%s0 + $0xe] sm:$0x1]
    %v63 = vld [vmem:[%s0 + $0xf] sm:$0x1]
    %v64 = vmul.f32 %v62, %v20
    %v65 = vadd.f32 %v16, %v64
    %v66 = vmul.f32 %v65, 32.0
    %67 = vst [vmem:[#allocation6 + $0x2] sm:$0x1] %v66
    %v68 = vmul.f32 %v63, %v21
    %v69 = vadd.f32 %v17, %v68
    %v70 = vmul.f32 %v69, 32.0
    %71 = vst [vmem:[#allocation6 + $0x3] sm:$0x1] %v70
    %v72 = vld [vmem:[%s0 + $0x10] sm:$0x1]
    %v73 = vld [vmem:[%s0 + $0x11] sm:$0x1]
    %v74 = vmul.f32 %v72, %v20
    %v75 = vadd.f32 %v16, %v74
    %v76 = vmul.f32 %v75, 32.0
    %77 = vst [vmem:[#allocation6 + $0x4] sm:$0x1] %v76
    %v78 = vmul.f32 %v73, %v21
    %v79 = vadd.f32 %v17, %v78
    %v80 = vmul.f32 %v79, 32.0
    %81 = vst [vmem:[#allocation6 + $0x5] sm:$0x1] %v80
    %v82 = vld [vmem:[%s0 + $0x12] sm:$0x1]
    %v83 = vld [vmem:[%s0 + $0x13] sm:$0x1]
    %v84 = vmul.f32 %v82, %v20
    %v85 = vadd.f32 %v16, %v84
    %v86 = vmul.f32 %v85, 32.0
    %87 = vst [vmem:[#allocation6 + $0x6] sm:$0x1] %v86
    %v88 = vmul.f32 %v83, %v21
    %v89 = vadd.f32 %v17, %v88
    %v90 = vmul.f32 %v89, 32.0
    %91 = vst [vmem:[#allocation6 + $0x7] sm:$0x1] %v90
    %v92 = vld [vmem:[%s0 + $0x14] sm:$0x1]
    %v93 = vld [vmem:[%s0 + $0x15] sm:$0x1]
    %v94 = vmul.f32 %v92, %v20
    %v95 = vadd.f32 %v16, %v94
    %v96 = vmul.f32 %v95, 32.0
    %97 = vst [vmem:[#allocation6 + $0x8] sm:$0x1] %v96
    %v98 = vmul.f32 %v93, %v21
    %v99 = vadd.f32 %v17, %v98
    %v100 = vmul.f32 %v99, 32.0
    %101 = vst [vmem:[#allocation6 + $0x9] sm:$0x1] %v100
    %v102 = vld [vmem:[%s0 + $0x8] sm:$0x1]
    %v103 = vld [vmem:[%s0 + $0x9] sm:$0x1]
    %v104 = vmax.f32 %v102, %v103
    %v105 = vsub.f32 %v102, %v104
    %v106 = vmul.f32 %v105, 1.442695
    %v107 = vpow.pop %v106
    %v108 = vsub.f32 %v103, %v104
    %v109 = vmul.f32 %v108, 1.442695
    %v110 = vpow.pop %v109
    %v111 = vadd.f32 %v107, %v110
    %v112 = vrcp.pop %v111
    %v113 = vmul.f32 %v110, %v112
    %114 = vst [vmem:[#allocation4] sm:$0x1] %v113
    %v115 = vld [vmem:[%s1 + $0x4] sm:$0x1]
    %v116 = vld [vmem:[%s1 + $0x5] sm:$0x1]
    %v117 = vld [vmem:[%s1 + $0x6] sm:$0x1]
    %v118 = vld [vmem:[%s1 + $0x7] sm:$0x1]
    %v119 = vmul.f32 %v117, 0.1
    %v120 = vmul.f32 %v118, 0.1
    %v121 = vld [vmem:[%s0 + $0x4] sm:$0x1]
    %v122 = vmul.f32 %v121, %v119
    %v123 = vadd.f32 %v115, %v122
    %v124 = vld [vmem:[%s0 + $0x5] sm:$0x1]
    %v125 = vmul.f32 %v124, %v120
    %v126 = vadd.f32 %v116, %v125
    %v127 = vld [vmem:[%s0 + $0x6] sm:$0x1]
    %v128 = vmul.f32 %v127, 0.2
    %v129 = vmul.f32 %v128, 1.442695
    %v130 = vpow.pop %v129
    %v131 = vmul.f32 %v117, %v130
    %v132 = vld [vmem:[%s0 + $0x7] sm:$0x1]
    %v133 = vmul.f32 %v132, 0.2
    %v134 = vmul.f32 %v133, 1.442695
    %v135 = vpow.pop %v134
    %v136 = vmul.f32 %v118, %v135
    %v137 = vmul.f32 %v131, 0.5
    %v138 = vsub.f32 %v123, %v137
    %v139 = vmul.f32 %v136, 0.5
    %v140 = vsub.f32 %v126, %v139
    %v141 = vmul.f32 %v138, 32.0
    %142 = vst [vmem:[#allocation2 + $0x4] sm:$0x1] %v141
    %v143 = vmul.f32 %v140, 32.0
    %144 = vst [vmem:[#allocation2 + $0x5] sm:$0x1] %v143
    %v145 = vadd.f32 %v138, %v131
    %v146 = vmul.f32 %v145, 32.0
    %147 = vst [vmem:[#allocation2 + $0x6] sm:$0x1] %v146
    %v148 = vadd.f32 %v140, %v136
    %v149 = vmul.f32 %v148, 32.0
    %150 = vst [vmem:[#allocation2 + $0x7] sm:$0x1] %v149
    %v151 = vld [vmem:[%s0 + $0x16] sm:$0x1]
    %v152 = vld [vmem:[%s0 + $0x17] sm:$0x1]
    %v153 = vmul.f32 %v151, %v119
    %v154 = vadd.f32 %v115, %v153
    %v155 = vmul.f32 %v154, 32.0
    %156 = vst [vmem:[#allocation6 + $0xa] sm:$0x1] %v155
    %v157 = vmul.f32 %v152, %v120
    %v158 = vadd.f32 %v116, %v157
    %v159 = vmul.f32 %v158, 32.0
    %160 = vst [vmem:[#allocation6 + $0xb] sm:$0x1] %v159
    %v161 = vld [vmem:[%s0 + $0x18] sm:$0x1]
    %v162 = vld [vmem:[%s0 + $0x19] sm:$0x1]
    %v163 = vmul.f32 %v161, %v119
    %v164 = vadd.f32 %v115, %v163
    %v165 = vmul.f32 %v164, 32.0
    %166 = vst [vmem:[#allocation6 + $0xc] sm:$0x1] %v165
    %v167 = vmul.f32 %v162, %v120
    %v168 = vadd.f32 %v116, %v167
    %v169 = vmul.f32 %v168, 32.0
    %170 = vst [vmem:[#allocation6 + $0xd] sm:$0x1] %v169
    %v171 = vld [vmem:[%s0 + $0x1a] sm:$0x1]
    %v172 = vld [vmem:[%s0 + $0x1b] sm:$0x1]
    %v173 = vmul.f32 %v171, %v119
    %v174 = vadd.f32 %v115, %v173
    %v175 = vmul.f32 %v174, 32.0
    %176 = vst [vmem:[#allocation6 + $0xe] sm:$0x1] %v175
    %v177 = vmul.f32 %v172, %v120
    %v178 = vadd.f32 %v116, %v177
    %v179 = vmul.f32 %v178, 32.0
    %180 = vst [vmem:[#allocation6 + $0xf] sm:$0x1] %v179
    %v181 = vld [vmem:[%s0 + $0x1c] sm:$0x1]
    %v182 = vld [vmem:[%s0 + $0x1d] sm:$0x1]
    %v183 = vmul.f32 %v181, %v119
    %v184 = vadd.f32 %v115, %v183
    %v185 = vmul.f32 %v184, 32.0
    %186 = vst [vmem:[#allocation6 + $0x10] sm:$0x1] %v185
    %v187 = vmul.f32 %v182, %v120
    %v188 = vadd.f32 %v116, %v187
    %v189 = vmul.f32 %v188, 32.0
    %190 = vst [vmem:[#allocation6 + $0x11] sm:$0x1] %v189
    %v191 = vld [vmem:[%s0 + $0x1e] sm:$0x1]
    %v192 = vld [vmem:[%s0 + $0x1f] sm:$0x1]
    %v193 = vmul.f32 %v191, %v119
    %v194 = vadd.f32 %v115, %v193
    %v195 = vmul.f32 %v194, 32.0
    %196 = vst [vmem:[#allocation6 + $0x12] sm:$0x1] %v195
    %v197 = vmul.f32 %v192, %v120
    %v198 = vadd.f32 %v116, %v197
    %v199 = vmul.f32 %v198, 32.0
    %200 = vst [vmem:[#allocation6 + $0x13] sm:$0x1] %v199
    %v201 = vld [vmem:[%s0 + $0xa] sm:$0x1]
    %v202 = vld [vmem:[%s0 + $0xb] sm:$0x1]
    %v203 = vmax.f32 %v201, %v202
    %v204 = vsub.f32 %v201, %v203
    %v205 = vmul.f32 %v204, 1.442695
    %v206 = vpow.pop %v205
    %v207 = vsub.f32 %v202, %v203
    %v208 = vmul.f32 %v207, 1.442695
    %v209 = vpow.pop %v208
    %v210 = vadd.f32 %v206, %v209
    %v211 = vrcp.pop %v210
    %v212 = vmul.f32 %v209, %v211
    %213 = vst [vmem:[#allocation4 + $0x1] sm:$0x1] %v212
    // Predicated region
    $region10: #{_detect_jit.23} parent=1 // pred_check
      _
    $region11: #{_detect_jit.23} parent=1 // pred_check_branch
      %215 = sbr.rel (0) target = $region13
    $region12: #{_detect_jit.23} parent=1 // pred_region
      %s217 = ssub.s32 128, 128
      %218 = vsyncadd [#allocation3], %s217
      %s220 = sshll.u32 [#allocation2], 4
      %s221 = int_to_ptr.vmem [resolvable:$true] %s220
      %223 = dma.vmem_to_hbm [thread:$0]  %s221, 128, %s2, [#allocation3]
    $region13: #{_detect_jit.23} parent=1 // pred_fallthru
      _
    // Predicated region
    $region14: #{_detect_jit.23} parent=1 // pred_check
      _
    $region15: #{_detect_jit.23} parent=1 // pred_check_branch
      %225 = sbr.rel (0) target = $region17
    $region16: #{_detect_jit.23} parent=1 // pred_region
      %s227 = ssub.s32 32, 32
      %228 = vsyncadd [#allocation5], %s227
      %s230 = sshll.u32 [#allocation4], 4
      %s231 = int_to_ptr.vmem [resolvable:$true] %s230
      %233 = dma.vmem_to_hbm [thread:$0]  %s231, 32, %s3, [#allocation5]
    $region17: #{_detect_jit.23} parent=1 // pred_fallthru
      _
    // Predicated region
    $region18: #{_detect_jit.23} parent=1 // pred_check
      _
    $region19: #{_detect_jit.23} parent=1 // pred_check_branch
      %235 = sbr.rel (0) target = $region21
    $region20: #{_detect_jit.23} parent=1 // pred_region
      %s237 = ssub.s32 384, 384
      %238 = vsyncadd [#allocation5], %s237
      %s239 = sshll.u32 [#allocation6], 4
      %s240 = int_to_ptr.vmem [resolvable:$true] %s239
      %245 = dma.vmem_to_hbm [thread:$0]  %s240, 384, %s4, [#allocation5], 128, 128, 8
    $region21: #{_detect_jit.23} parent=1 // pred_fallthru
      _
    // Predicated region
    $region22: #{_detect_jit.23} parent=1 // pred_check
      _
    $region23: #{_detect_jit.23} parent=1 // pred_check_branch
      %247 = sbr.rel (0) target = $region25
    $region24: #{_detect_jit.23} parent=1 // pred_region
      %248 = dma.done [#allocation3], 128
    $region25: #{_detect_jit.23} parent=1 // pred_fallthru
      _
    // Predicated region
    $region26: #{_detect_jit.23} parent=1 // pred_check
      _
    $region27: #{_detect_jit.23} parent=1 // pred_check_branch
      %250 = sbr.rel (0) target = $region29
    $region28: #{_detect_jit.23} parent=1 // pred_region
      %251 = dma.done [#allocation5], 32
    $region29: #{_detect_jit.23} parent=1 // pred_fallthru
      _
    // Predicated region
    $region30: #{_detect_jit.23} parent=1 // pred_check
      _
    $region31: #{_detect_jit.23} parent=1 // pred_check_branch
      %253 = sbr.rel (0) target = $region33
    $region32: #{_detect_jit.23} parent=1 // pred_region
      %254 = dma.done [#allocation5], 384
    $region33: #{_detect_jit.23} parent=1 // pred_fallthru
      _
    %255 = vsyncpa [#allocation3], 1
    %256 = vsyncpa [#allocation5], 1

</llo_original>
